<compile_context>
chip_gen: v7x
topology: tpu7x:2x2x1
jax: 0.10.0
libtpu: 0.0.40
codegen_flags: <defaults>
</compile_context>

<pallas_src>
import functools

import jax
import jax.numpy as jnp
from jax.experimental import pallas as pl
from jax.experimental.pallas import tpu as pltpu


def _conv3d_kernel(*refs, K, Ho, Wo, Cin, Cout):
    # refs = (x_0, ..., x_{K-1}, w, b, o)
    #   x_refs[kd]: (Hp, Wp, Cin)       padded depth slice at depth (do + kd), compute dtype
    #   w_ref     : (K*K*K, Cin, Cout)  all taps, compute dtype (VMEM-resident, constant block)
    #   b_ref     : (1, Cout)           bias, f32
    #   o_ref     : (Cout, Ho*Wo)       lane-dense output block
    x_refs = refs[:K]
    w_ref, b_ref, o_ref = refs[K], refs[K + 1], refs[K + 2]

    acc = jnp.zeros((Ho * Wo, Cout), jnp.float32)
    # Statically unrolled taps: each is a shifted window of a VMEM-resident slab,
    # contracted over Cin on the MXU with f32 accumulation.
    for kd in range(K):
        x_kd = x_refs[kd]
        for kh in range(K):
            for kw in range(K):
                x_s = x_kd[kh:kh + Ho, kw:kw + Wo, :].reshape(Ho * Wo, Cin)
                w_s = w_ref[kd * K * K + kh * K + kw]            # (Cin, Cout)
                acc = acc + jnp.dot(x_s, w_s, preferred_element_type=jnp.float32)

    out = acc + b_ref[...]                                       # (Ho*Wo, Cout), f32
    o_ref[...] = out.T.astype(o_ref.dtype)                       # (Cout, Ho*Wo): lane-dense store


def basic_conv3d(x_ncdhw, weight, bias, kernel_size, *, compute_dtype=jnp.bfloat16):
    """Forward of BasicConv3D (bias='auto'->True, bn=False, act=False).

    x_ncdhw: (N, Cin, D, H, W)
    weight : (Cout, Cin, K, K, K)   (PyTorch Conv3d layout)
    bias   : (Cout,)
    compute_dtype: dtype of the MXU operands (bf16 recommended on v6e/v7x);
                   accumulation is always f32, output keeps the input dtype.
    """
    N, Cin, D, H, W = x_ncdhw.shape
    Cout = weight.shape[0]
    K = kernel_size
    p = K // 2 if K >= 2 else 0

    # Cast first (halves transpose/pad HBM traffic in bf16), then NCDHW -> NDHWC,
    # then ConstantPad3d(p, 0.0) on the three spatial dims (cheap halo, not im2col).
    x = jnp.transpose(x_ncdhw.astype(compute_dtype), (0, 2, 3, 4, 1))
    x_pad = jnp.pad(x, ((0, 0), (p, p), (p, p), (p, p), (0, 0)))

    Dp, Hp, Wp = D + 2 * p, H + 2 * p, W + 2 * p
    Do, Ho, Wo = Dp - K + 1, Hp - K + 1, Wp - K + 1
    HWo = Ho * Wo

    # weight (Cout, Cin, kd, kh, kw) -> (kd*kh*kw, Cin, Cout): rank-3 tap table.
    w3 = jnp.transpose(weight, (2, 3, 4, 1, 0)).reshape(K * K * K, Cin, Cout)
    w3 = w3.astype(compute_dtype)
    b2 = bias.reshape(1, Cout).astype(jnp.float32)

    kernel = functools.partial(_conv3d_kernel, K=K, Ho=Ho, Wo=Wo, Cin=Cin, Cout=Cout)

    # The padded input is passed K times; input kd selects depth slice (d + kd) via a
    # squeezed (block-size-1) D dimension, so block index == element offset.
    x_specs = [
        pl.BlockSpec((None, None, Hp, Wp, Cin),
                     lambda n, d, _k=k: (n, d + _k, 0, 0, 0))
        for k in range(K)
    ]

    out_dtype = x_ncdhw.dtype
    flops = 2 * N * Do * HWo * (K ** 3) * Cin * Cout
    bytes_accessed = (K * x_pad.size * x_pad.dtype.itemsize      # K-tap re-read of the halo-padded input
                      + w3.size * w3.dtype.itemsize
                      + b2.size * 4
                      + N * Do * Cout * HWo * jnp.dtype(out_dtype).itemsize)

    out4 = pl.pallas_call(
        kernel,
        out_shape=jax.ShapeDtypeStruct((N, Do, Cout, HWo), out_dtype),
        grid_spec=pltpu.PrefetchScalarGridSpec(
            num_scalar_prefetch=0,
            grid=(N, Do),
            in_specs=x_specs + [
                # Full weight tensor, constant block index -> DMA'd once, stays resident.
                pl.BlockSpec((K * K * K, Cin, Cout), lambda n, d: (0, 0, 0)),
                # Bias, constant across the grid.
                pl.BlockSpec((1, Cout), lambda n, d: (0, 0)),
            ],
            out_specs=pl.BlockSpec((None, None, Cout, HWo),
                                   lambda n, d: (n, d, 0, 0)),
        ),
        compiler_params=pltpu.CompilerParams(
            dimension_semantics=("parallel", "parallel")),
        cost_estimate=pl.CostEstimate(flops=flops, transcendentals=0,
                                      bytes_accessed=bytes_accessed),
    )(*([x_pad] * K), w3, b2)

    # (N, Do, Cout, Ho*Wo) -> (N, Cout, Do, Ho, Wo)  (NCDHW, matching the module).
    out = out4.reshape(N, Do, Cout, Ho, Wo)
    return jnp.transpose(out, (0, 2, 1, 3, 4))


if __name__ == "__main__":
    key = jax.random.PRNGKey(0)
    k_x, k_w, k_b = jax.random.split(key, 3)

    # Small shapes consistent with the module's forward: NCDHW input.
    N, Cin, Cout, D, H, W, K = 2, 4, 8, 8, 8, 8, 3

    x = jax.random.normal(k_x, (N, Cin, D, H, W), dtype=jnp.float32)
    weight = jax.random.normal(k_w, (Cout, Cin, K, K, K), dtype=jnp.float32) * 0.1
    bias = jax.random.normal(k_b, (Cout,), dtype=jnp.float32) * 0.1

    # Reference: same semantics as ConstantPad3d(K//2) + Conv3d(pad=0, bias=True).
    p = K // 2
    ref = jax.lax.conv_general_dilated(
        x, weight, window_strides=(1, 1, 1),
        padding=[(p, p)] * 3,
        dimension_numbers=("NCDHW", "OIDHW", "NCDHW"),
    ) + bias[None, :, None, None, None]

    # 1) f32 MXU operands: exact algorithmic check.
    y32 = jax.block_until_ready(
        basic_conv3d(x, weight, bias, K, compute_dtype=jnp.float32))
    assert y32.shape == (N, Cout, D, H, W), y32.shape
    assert jnp.allclose(y32, ref, atol=1e-3, rtol=1e-3), \
        float(jnp.max(jnp.abs(y32 - ref)))

    # 2) Default bf16 MXU operands (v6e/v7x-friendly), f32 accumulation.
    y = jax.block_until_ready(basic_conv3d(x, weight, bias, K))
    assert y.shape == (N, Cout, D, H, W), y.shape
    assert jnp.allclose(y, ref, atol=5e-2, rtol=5e-2), \
        float(jnp.max(jnp.abs(y - ref)))

    print("KERNEL_OK")
</pallas_src>

<mosaic_0001>
module attributes {stable_mosaic.version = 11 : i64} {
  func.func @_conv3d_kernel(%arg0: i32, %arg1: i32, %arg2: memref<1x1x10x10x4xf32, #tpu.memory_space<vmem>>, %arg3: memref<1x1x10x10x4xf32, #tpu.memory_space<vmem>>, %arg4: memref<1x1x10x10x4xf32, #tpu.memory_space<vmem>>, %arg5: memref<27x4x8xf32, #tpu.memory_space<vmem>>, %arg6: memref<1x8xf32, #tpu.memory_space<vmem>>, %arg7: memref<1x1x8x64xf32, #tpu.memory_space<vmem>>) attributes {dimension_semantics = [#tpu.dimension_semantics<parallel>, #tpu.dimension_semantics<parallel>], iteration_bounds = array<i64: 2, 8>, scalar_prefetch = 0 : i64, scratch_operands = 0 : i64, tpu.core_type = #tpu.core_type<tc>, window_params = [{transform_indices = @transform_0, window_bounds = array<i64: 1, 1, 10, 10, 4>}, {transform_indices = @transform_1, window_bounds = array<i64: 1, 1, 10, 10, 4>}, {transform_indices = @transform_2, window_bounds = array<i64: 1, 1, 10, 10, 4>}, {pipeline_mode = #tpu.pipeline_mode<synchronous>, transform_indices = @transform_3, window_bounds = array<i64: 27, 4, 8>}, {pipeline_mode = #tpu.pipeline_mode<synchronous>, transform_indices = @transform_4, window_bounds = array<i64: 1, 8>}, {transform_indices = @transform_5, window_bounds = array<i64: 1, 1, 8, 64>}]} {
    %cst = arith.constant 0.000000e+00 : f32
    %0 = vector.broadcast %cst : f32 to vector<64x8xf32>
    %c0 = arith.constant 0 : index
    %c0_0 = arith.constant 0 : index
    %c0_1 = arith.constant 0 : index
    %c0_2 = arith.constant 0 : index
    %c0_3 = arith.constant 0 : index
    %1 = vector.load %arg2[%c0, %c0_0, %c0_1, %c0_2, %c0_3] : memref<1x1x10x10x4xf32, #tpu.memory_space<vmem>>, vector<1x1x8x8x4xf32>
    %2 = vector.shape_cast %1 : vector<1x1x8x8x4xf32> to vector<8x8x4xf32>
    %3 = vector.shape_cast %2 : vector<8x8x4xf32> to vector<64x4xf32>
    %c0_4 = arith.constant 0 : index
    %c0_5 = arith.constant 0 : index
    %c0_6 = arith.constant 0 : index
    %4 = vector.load %arg5[%c0_4, %c0_5, %c0_6] : memref<27x4x8xf32, #tpu.memory_space<vmem>>, vector<1x4x8xf32>
    %5 = vector.shape_cast %4 : vector<1x4x8xf32> to vector<4x8xf32>
    %cst_7 = arith.constant dense<0.000000e+00> : vector<64x8xf32>
    %6 = tpu.matmul %3, %5, %cst_7 {dimension_numbers = #tpu.dot_dimension_numbers<[1], [0], [0], [1], [0, 0, 1, 1], [], []>} : vector<64x4xf32>, vector<4x8xf32>, vector<64x8xf32> -> vector<64x8xf32>
    %7 = arith.addf %0, %6 : vector<64x8xf32>
    %c0_8 = arith.constant 0 : index
    %c0_9 = arith.constant 0 : index
    %c0_10 = arith.constant 0 : index
    %c1 = arith.constant 1 : index
    %c0_11 = arith.constant 0 : index
    %8 = vector.load %arg2[%c0_8, %c0_9, %c0_10, %c1, %c0_11] : memref<1x1x10x10x4xf32, #tpu.memory_space<vmem>>, vector<1x1x8x8x4xf32>
    %9 = vector.shape_cast %8 : vector<1x1x8x8x4xf32> to vector<8x8x4xf32>
    %10 = vector.shape_cast %9 : vector<8x8x4xf32> to vector<64x4xf32>
    %c1_12 = arith.constant 1 : index
    %c0_13 = arith.constant 0 : index
    %c0_14 = arith.constant 0 : index
    %11 = vector.load %arg5[%c1_12, %c0_13, %c0_14] : memref<27x4x8xf32, #tpu.memory_space<vmem>>, vector<1x4x8xf32>
    %12 = vector.shape_cast %11 : vector<1x4x8xf32> to vector<4x8xf32>
    %cst_15 = arith.constant dense<0.000000e+00> : vector<64x8xf32>
    %13 = tpu.matmul %10, %12, %cst_15 {dimension_numbers = #tpu.dot_dimension_numbers<[1], [0], [0], [1], [0, 0, 1, 1], [], []>} : vector<64x4xf32>, vector<4x8xf32>, vector<64x8xf32> -> vector<64x8xf32>
    %14 = arith.addf %7, %13 : vector<64x8xf32>
    %c0_16 = arith.constant 0 : index
    %c0_17 = arith.constant 0 : index
    %c0_18 = arith.constant 0 : index
    %c2 = arith.constant 2 : index
    %c0_19 = arith.constant 0 : index
    %15 = vector.load %arg2[%c0_16, %c0_17, %c0_18, %c2, %c0_19] : memref<1x1x10x10x4xf32, #tpu.memory_space<vmem>>, vector<1x1x8x8x4xf32>
    %16 = vector.shape_cast %15 : vector<1x1x8x8x4xf32> to vector<8x8x4xf32>
    %17 = vector.shape_cast %16 : vector<8x8x4xf32> to vector<64x4xf32>
    %c2_20 = arith.constant 2 : index
    %c0_21 = arith.constant 0 : index
    %c0_22 = arith.constant 0 : index
    %18 = vector.load %arg5[%c2_20, %c0_21, %c0_22] : memref<27x4x8xf32, #tpu.memory_space<vmem>>, vector<1x4x8xf32>
    %19 = vector.shape_cast %18 : vector<1x4x8xf32> to vector<4x8xf32>
    %cst_23 = arith.constant dense<0.000000e+00> : vector<64x8xf32>
    %20 = tpu.matmul %17, %19, %cst_23 {dimension_numbers = #tpu.dot_dimension_numbers<[1], [0], [0], [1], [0, 0, 1, 1], [], []>} : vector<64x4xf32>, vector<4x8xf32>, vector<64x8xf32> -> vector<64x8xf32>
    %21 = arith.addf %14, %20 : vector<64x8xf32>
    %c0_24 = arith.constant 0 : index
    %c0_25 = arith.constant 0 : index
    %c1_26 = arith.constant 1 : index
    %c0_27 = arith.constant 0 : index
    %c0_28 = arith.constant 0 : index
    %22 = vector.load %arg2[%c0_24, %c0_25, %c1_26, %c0_27, %c0_28] : memref<1x1x10x10x4xf32, #tpu.memory_space<vmem>>, vector<1x1x8x8x4xf32>
    %23 = vector.shape_cast %22 : vector<1x1x8x8x4xf32> to vector<8x8x4xf32>
    %24 = vector.shape_cast %23 : vector<8x8x4xf32> to vector<64x4xf32>
    %c3 = arith.constant 3 : index
    %c0_29 = arith.constant 0 : index
    %c0_30 = arith.constant 0 : index
    %25 = vector.load %arg5[%c3, %c0_29, %c0_30] : memref<27x4x8xf32, #tpu.memory_space<vmem>>, vector<1x4x8xf32>
    %26 = vector.shape_cast %25 : vector<1x4x8xf32> to vector<4x8xf32>
    %cst_31 = arith.constant dense<0.000000e+00> : vector<64x8xf32>
    %27 = tpu.matmul %24, %26, %cst_31 {dimension_numbers = #tpu.dot_dimension_numbers<[1], [0], [0], [1], [0, 0, 1, 1], [], []>} : vector<64x4xf32>, vector<4x8xf32>, vector<64x8xf32> -> vector<64x8xf32>
    %28 = arith.addf %21, %27 : vector<64x8xf32>
    %c0_32 = arith.constant 0 : index
    %c0_33 = arith.constant 0 : index
    %c1_34 = arith.constant 1 : index
    %c1_35 = arith.constant 1 : index
    %c0_36 = arith.constant 0 : index
    %29 = vector.load %arg2[%c0_32, %c0_33, %c1_34, %c1_35, %c0_36] : memref<1x1x10x10x4xf32, #tpu.memory_space<vmem>>, vector<1x1x8x8x4xf32>
    %30 = vector.shape_cast %29 : vector<1x1x8x8x4xf32> to vector<8x8x4xf32>
    %31 = vector.shape_cast %30 : vector<8x8x4xf32> to vector<64x4xf32>
    %c4 = arith.constant 4 : index
    %c0_37 = arith.constant 0 : index
    %c0_38 = arith.constant 0 : index
    %32 = vector.load %arg5[%c4, %c0_37, %c0_38] : memref<27x4x8xf32, #tpu.memory_space<vmem>>, vector<1x4x8xf32>
    %33 = vector.shape_cast %32 : vector<1x4x8xf32> to vector<4x8xf32>
    %cst_39 = arith.constant dense<0.000000e+00> : vector<64x8xf32>
    %34 = tpu.matmul %31, %33, %cst_39 {dimension_numbers = #tpu.dot_dimension_numbers<[1], [0], [0], [1], [0, 0, 1, 1], [], []>} : vector<64x4xf32>, vector<4x8xf32>, vector<64x8xf32> -> vector<64x8xf32>
    %35 = arith.addf %28, %34 : vector<64x8xf32>
    %c0_40 = arith.constant 0 : index
    %c0_41 = arith.constant 0 : index
    %c1_42 = arith.constant 1 : index
    %c2_43 = arith.constant 2 : index
    %c0_44 = arith.constant 0 : index
    %36 = vector.load %arg2[%c0_40, %c0_41, %c1_42, %c2_43, %c0_44] : memref<1x1x10x10x4xf32, #tpu.memory_space<vmem>>, vector<1x1x8x8x4xf32>
    %37 = vector.shape_cast %36 : vector<1x1x8x8x4xf32> to vector<8x8x4xf32>
    %38 = vector.shape_cast %37 : vector<8x8x4xf32> to vector<64x4xf32>
    %c5 = arith.constant 5 : index
    %c0_45 = arith.constant 0 : index
    %c0_46 = arith.constant 0 : index
    %39 = vector.load %arg5[%c5, %c0_45, %c0_46] : memref<27x4x8xf32, #tpu.memory_space<vmem>>, vector<1x4x8xf32>
    %40 = vector.shape_cast %39 : vector<1x4x8xf32> to vector<4x8xf32>
    %cst_47 = arith.constant dense<0.000000e+00> : vector<64x8xf32>
    %41 = tpu.matmul %38, %40, %cst_47 {dimension_numbers = #tpu.dot_dimension_numbers<[1], [0], [0], [1], [0, 0, 1, 1], [], []>} : vector<64x4xf32>, vector<4x8xf32>, vector<64x8xf32> -> vector<64x8xf32>
    %42 = arith.addf %35, %41 : vector<64x8xf32>
    %c0_48 = arith.constant 0 : index
    %c0_49 = arith.constant 0 : index
    %c2_50 = arith.constant 2 : index
    %c0_51 = arith.constant 0 : index
    %c0_52 = arith.constant 0 : index
    %43 = vector.load %arg2[%c0_48, %c0_49, %c2_50, %c0_51, %c0_52] : memref<1x1x10x10x4xf32, #tpu.memory_space<vmem>>, vector<1x1x8x8x4xf32>
    %44 = vector.shape_cast %43 : vector<1x1x8x8x4xf32> to vector<8x8x4xf32>
    %45 = vector.shape_cast %44 : vector<8x8x4xf32> to vector<64x4xf32>
    %c6 = arith.constant 6 : index
    %c0_53 = arith.constant 0 : index
    %c0_54 = arith.constant 0 : index
    %46 = vector.load %arg5[%c6, %c0_53, %c0_54] : memref<27x4x8xf32, #tpu.memory_space<vmem>>, vector<1x4x8xf32>
    %47 = vector.shape_cast %46 : vector<1x4x8xf32> to vector<4x8xf32>
    %cst_55 = arith.constant dense<0.000000e+00> : vector<64x8xf32>
    %48 = tpu.matmul %45, %47, %cst_55 {dimension_numbers = #tpu.dot_dimension_numbers<[1], [0], [0], [1], [0, 0, 1, 1], [], []>} : vector<64x4xf32>, vector<4x8xf32>, vector<64x8xf32> -> vector<64x8xf32>
    %49 = arith.addf %42, %48 : vector<64x8xf32>
    %c0_56 = arith.constant 0 : index
    %c0_57 = arith.constant 0 : index
    %c2_58 = arith.constant 2 : index
    %c1_59 = arith.constant 1 : index
    %c0_60 = arith.constant 0 : index
    %50 = vector.load %arg2[%c0_56, %c0_57, %c2_58, %c1_59, %c0_60] : memref<1x1x10x10x4xf32, #tpu.memory_space<vmem>>, vector<1x1x8x8x4xf32>
    %51 = vector.shape_cast %50 : vector<1x1x8x8x4xf32> to vector<8x8x4xf32>
    %52 = vector.shape_cast %51 : vector<8x8x4xf32> to vector<64x4xf32>
    %c7 = arith.constant 7 : index
    %c0_61 = arith.constant 0 : index
    %c0_62 = arith.constant 0 : index
    %53 = vector.load %arg5[%c7, %c0_61, %c0_62] : memref<27x4x8xf32, #tpu.memory_space<vmem>>, vector<1x4x8xf32>
    %54 = vector.shape_cast %53 : vector<1x4x8xf32> to vector<4x8xf32>
    %cst_63 = arith.constant dense<0.000000e+00> : vector<64x8xf32>
    %55 = tpu.matmul %52, %54, %cst_63 {dimension_numbers = #tpu.dot_dimension_numbers<[1], [0], [0], [1], [0, 0, 1, 1], [], []>} : vector<64x4xf32>, vector<4x8xf32>, vector<64x8xf32> -> vector<64x8xf32>
    %56 = arith.addf %49, %55 : vector<64x8xf32>
    %c0_64 = arith.constant 0 : index
    %c0_65 = arith.constant 0 : index
    %c2_66 = arith.constant 2 : index
    %c2_67 = arith.constant 2 : index
    %c0_68 = arith.constant 0 : index
    %57 = vector.load %arg2[%c0_64, %c0_65, %c2_66, %c2_67, %c0_68] : memref<1x1x10x10x4xf32, #tpu.memory_space<vmem>>, vector<1x1x8x8x4xf32>
    %58 = vector.shape_cast %57 : vector<1x1x8x8x4xf32> to vector<8x8x4xf32>
    %59 = vector.shape_cast %58 : vector<8x8x4xf32> to vector<64x4xf32>
    %c8 = arith.constant 8 : index
    %c0_69 = arith.constant 0 : index
    %c0_70 = arith.constant 0 : index
    %60 = vector.load %arg5[%c8, %c0_69, %c0_70] : memref<27x4x8xf32, #tpu.memory_space<vmem>>, vector<1x4x8xf32>
    %61 = vector.shape_cast %60 : vector<1x4x8xf32> to vector<4x8xf32>
    %cst_71 = arith.constant dense<0.000000e+00> : vector<64x8xf32>
    %62 = tpu.matmul %59, %61, %cst_71 {dimension_numbers = #tpu.dot_dimension_numbers<[1], [0], [0], [1], [0, 0, 1, 1], [], []>} : vector<64x4xf32>, vector<4x8xf32>, vector<64x8xf32> -> vector<64x8xf32>
    %63 = arith.addf %56, %62 : vector<64x8xf32>
    %c0_72 = arith.constant 0 : index
    %c0_73 = arith.constant 0 : index
    %c0_74 = arith.constant 0 : index
    %c0_75 = arith.constant 0 : index
    %c0_76 = arith.constant 0 : index
    %64 = vector.load %arg3[%c0_72, %c0_73, %c0_74, %c0_75, %c0_76] : memref<1x1x10x10x4xf32, #tpu.memory_space<vmem>>, vector<1x1x8x8x4xf32>
    %65 = vector.shape_cast %64 : vector<1x1x8x8x4xf32> to vector<8x8x4xf32>
    %66 = vector.shape_cast %65 : vector<8x8x4xf32> to vector<64x4xf32>
    %c9 = arith.constant 9 : index
    %c0_77 = arith.constant 0 : index
    %c0_78 = arith.constant 0 : index
    %67 = vector.load %arg5[%c9, %c0_77, %c0_78] : memref<27x4x8xf32, #tpu.memory_space<vmem>>, vector<1x4x8xf32>
    %68 = vector.shape_cast %67 : vector<1x4x8xf32> to vector<4x8xf32>
    %cst_79 = arith.constant dense<0.000000e+00> : vector<64x8xf32>
    %69 = tpu.matmul %66, %68, %cst_79 {dimension_numbers = #tpu.dot_dimension_numbers<[1], [0], [0], [1], [0, 0, 1, 1], [], []>} : vector<64x4xf32>, vector<4x8xf32>, vector<64x8xf32> -> vector<64x8xf32>
    %70 = arith.addf %63, %69 : vector<64x8xf32>
    %c0_80 = arith.constant 0 : index
    %c0_81 = arith.constant 0 : index
    %c0_82 = arith.constant 0 : index
    %c1_83 = arith.constant 1 : index
    %c0_84 = arith.constant 0 : index
    %71 = vector.load %arg3[%c0_80, %c0_81, %c0_82, %c1_83, %c0_84] : memref<1x1x10x10x4xf32, #tpu.memory_space<vmem>>, vector<1x1x8x8x4xf32>
    %72 = vector.shape_cast %71 : vector<1x1x8x8x4xf32> to vector<8x8x4xf32>
    %73 = vector.shape_cast %72 : vector<8x8x4xf32> to vector<64x4xf32>
    %c10 = arith.constant 10 : index
    %c0_85 = arith.constant 0 : index
    %c0_86 = arith.constant 0 : index
    %74 = vector.load %arg5[%c10, %c0_85, %c0_86] : memref<27x4x8xf32, #tpu.memory_space<vmem>>, vector<1x4x8xf32>
    %75 = vector.shape_cast %74 : vector<1x4x8xf32> to vector<4x8xf32>
    %cst_87 = arith.constant dense<0.000000e+00> : vector<64x8xf32>
    %76 = tpu.matmul %73, %75, %cst_87 {dimension_numbers = #tpu.dot_dimension_numbers<[1], [0], [0], [1], [0, 0, 1, 1], [], []>} : vector<64x4xf32>, vector<4x8xf32>, vector<64x8xf32> -> vector<64x8xf32>
    %77 = arith.addf %70, %76 : vector<64x8xf32>
    %c0_88 = arith.constant 0 : index
    %c0_89 = arith.constant 0 : index
    %c0_90 = arith.constant 0 : index
    %c2_91 = arith.constant 2 : index
    %c0_92 = arith.constant 0 : index
    %78 = vector.load %arg3[%c0_88, %c0_89, %c0_90, %c2_91, %c0_92] : memref<1x1x10x10x4xf32, #tpu.memory_space<vmem>>, vector<1x1x8x8x4xf32>
    %79 = vector.shape_cast %78 : vector<1x1x8x8x4xf32> to vector<8x8x4xf32>
    %80 = vector.shape_cast %79 : vector<8x8x4xf32> to vector<64x4xf32>
    %c11 = arith.constant 11 : index
    %c0_93 = arith.constant 0 : index
    %c0_94 = arith.constant 0 : index
    %81 = vector.load %arg5[%c11, %c0_93, %c0_94] : memref<27x4x8xf32, #tpu.memory_space<vmem>>, vector<1x4x8xf32>
    %82 = vector.shape_cast %81 : vector<1x4x8xf32> to vector<4x8xf32>
    %cst_95 = arith.constant dense<0.000000e+00> : vector<64x8xf32>
    %83 = tpu.matmul %80, %82, %cst_95 {dimension_numbers = #tpu.dot_dimension_numbers<[1], [0], [0], [1], [0, 0, 1, 1], [], []>} : vector<64x4xf32>, vector<4x8xf32>, vector<64x8xf32> -> vector<64x8xf32>
    %84 = arith.addf %77, %83 : vector<64x8xf32>
    %c0_96 = arith.constant 0 : index
    %c0_97 = arith.constant 0 : index
    %c1_98 = arith.constant 1 : index
    %c0_99 = arith.constant 0 : index
    %c0_100 = arith.constant 0 : index
    %85 = vector.load %arg3[%c0_96, %c0_97, %c1_98, %c0_99, %c0_100] : memref<1x1x10x10x4xf32, #tpu.memory_space<vmem>>, vector<1x1x8x8x4xf32>
    %86 = vector.shape_cast %85 : vector<1x1x8x8x4xf32> to vector<8x8x4xf32>
    %87 = vector.shape_cast %86 : vector<8x8x4xf32> to vector<64x4xf32>
    %c12 = arith.constant 12 : index
    %c0_101 = arith.constant 0 : index
    %c0_102 = arith.constant 0 : index
    %88 = vector.load %arg5[%c12, %c0_101, %c0_102] : memref<27x4x8xf32, #tpu.memory_space<vmem>>, vector<1x4x8xf32>
    %89 = vector.shape_cast %88 : vector<1x4x8xf32> to vector<4x8xf32>
    %cst_103 = arith.constant dense<0.000000e+00> : vector<64x8xf32>
    %90 = tpu.matmul %87, %89, %cst_103 {dimension_numbers = #tpu.dot_dimension_numbers<[1], [0], [0], [1], [0, 0, 1, 1], [], []>} : vector<64x4xf32>, vector<4x8xf32>, vector<64x8xf32> -> vector<64x8xf32>
    %91 = arith.addf %84, %90 : vector<64x8xf32>
    %c0_104 = arith.constant 0 : index
    %c0_105 = arith.constant 0 : index
    %c1_106 = arith.constant 1 : index
    %c1_107 = arith.constant 1 : index
    %c0_108 = arith.constant 0 : index
    %92 = vector.load %arg3[%c0_104, %c0_105, %c1_106, %c1_107, %c0_108] : memref<1x1x10x10x4xf32, #tpu.memory_space<vmem>>, vector<1x1x8x8x4xf32>
    %93 = vector.shape_cast %92 : vector<1x1x8x8x4xf32> to vector<8x8x4xf32>
    %94 = vector.shape_cast %93 : vector<8x8x4xf32> to vector<64x4xf32>
    %c13 = arith.constant 13 : index
    %c0_109 = arith.constant 0 : index
    %c0_110 = arith.constant 0 : index
    %95 = vector.load %arg5[%c13, %c0_109, %c0_110] : memref<27x4x8xf32, #tpu.memory_space<vmem>>, vector<1x4x8xf32>
    %96 = vector.shape_cast %95 : vector<1x4x8xf32> to vector<4x8xf32>
    %cst_111 = arith.constant dense<0.000000e+00> : vector<64x8xf32>
    %97 = tpu.matmul %94, %96, %cst_111 {dimension_numbers = #tpu.dot_dimension_numbers<[1], [0], [0], [1], [0, 0, 1, 1], [], []>} : vector<64x4xf32>, vector<4x8xf32>, vector<64x8xf32> -> vector<64x8xf32>
    %98 = arith.addf %91, %97 : vector<64x8xf32>
    %c0_112 = arith.constant 0 : index
    %c0_113 = arith.constant 0 : index
    %c1_114 = arith.constant 1 : index
    %c2_115 = arith.constant 2 : index
    %c0_116 = arith.constant 0 : index
    %99 = vector.load %arg3[%c0_112, %c0_113, %c1_114, %c2_115, %c0_116] : memref<1x1x10x10x4xf32, #tpu.memory_space<vmem>>, vector<1x1x8x8x4xf32>
    %100 = vector.shape_cast %99 : vector<1x1x8x8x4xf32> to vector<8x8x4xf32>
    %101 = vector.shape_cast %100 : vector<8x8x4xf32> to vector<64x4xf32>
    %c14 = arith.constant 14 : index
    %c0_117 = arith.constant 0 : index
    %c0_118 = arith.constant 0 : index
    %102 = vector.load %arg5[%c14, %c0_117, %c0_118] : memref<27x4x8xf32, #tpu.memory_space<vmem>>, vector<1x4x8xf32>
    %103 = vector.shape_cast %102 : vector<1x4x8xf32> to vector<4x8xf32>
    %cst_119 = arith.constant dense<0.000000e+00> : vector<64x8xf32>
    %104 = tpu.matmul %101, %103, %cst_119 {dimension_numbers = #tpu.dot_dimension_numbers<[1], [0], [0], [1], [0, 0, 1, 1], [], []>} : vector<64x4xf32>, vector<4x8xf32>, vector<64x8xf32> -> vector<64x8xf32>
    %105 = arith.addf %98, %104 : vector<64x8xf32>
    %c0_120 = arith.constant 0 : index
    %c0_121 = arith.constant 0 : index
    %c2_122 = arith.constant 2 : index
    %c0_123 = arith.constant 0 : index
    %c0_124 = arith.constant 0 : index
    %106 = vector.load %arg3[%c0_120, %c0_121, %c2_122, %c0_123, %c0_124] : memref<1x1x10x10x4xf32, #tpu.memory_space<vmem>>, vector<1x1x8x8x4xf32>
    %107 = vector.shape_cast %106 : vector<1x1x8x8x4xf32> to vector<8x8x4xf32>
    %108 = vector.shape_cast %107 : vector<8x8x4xf32> to vector<64x4xf32>
    %c15 = arith.constant 15 : index
    %c0_125 = arith.constant 0 : index
    %c0_126 = arith.constant 0 : index
    %109 = vector.load %arg5[%c15, %c0_125, %c0_126] : memref<27x4x8xf32, #tpu.memory_space<vmem>>, vector<1x4x8xf32>
    %110 = vector.shape_cast %109 : vector<1x4x8xf32> to vector<4x8xf32>
    %cst_127 = arith.constant dense<0.000000e+00> : vector<64x8xf32>
    %111 = tpu.matmul %108, %110, %cst_127 {dimension_numbers = #tpu.dot_dimension_numbers<[1], [0], [0], [1], [0, 0, 1, 1], [], []>} : vector<64x4xf32>, vector<4x8xf32>, vector<64x8xf32> -> vector<64x8xf32>
    %112 = arith.addf %105, %111 : vector<64x8xf32>
    %c0_128 = arith.constant 0 : index
    %c0_129 = arith.constant 0 : index
    %c2_130 = arith.constant 2 : index
    %c1_131 = arith.constant 1 : index
    %c0_132 = arith.constant 0 : index
    %113 = vector.load %arg3[%c0_128, %c0_129, %c2_130, %c1_131, %c0_132] : memref<1x1x10x10x4xf32, #tpu.memory_space<vmem>>, vector<1x1x8x8x4xf32>
    %114 = vector.shape_cast %113 : vector<1x1x8x8x4xf32> to vector<8x8x4xf32>
    %115 = vector.shape_cast %114 : vector<8x8x4xf32> to vector<64x4xf32>
    %c16 = arith.constant 16 : index
    %c0_133 = arith.constant 0 : index
    %c0_134 = arith.constant 0 : index
    %116 = vector.load %arg5[%c16, %c0_133, %c0_134] : memref<27x4x8xf32, #tpu.memory_space<vmem>>, vector<1x4x8xf32>
    %117 = vector.shape_cast %116 : vector<1x4x8xf32> to vector<4x8xf32>
    %cst_135 = arith.constant dense<0.000000e+00> : vector<64x8xf32>
    %118 = tpu.matmul %115, %117, %cst_135 {dimension_numbers = #tpu.dot_dimension_numbers<[1], [0], [0], [1], [0, 0, 1, 1], [], []>} : vector<64x4xf32>, vector<4x8xf32>, vector<64x8xf32> -> vector<64x8xf32>
    %119 = arith.addf %112, %118 : vector<64x8xf32>
    %c0_136 = arith.constant 0 : index
    %c0_137 = arith.constant 0 : index
    %c2_138 = arith.constant 2 : index
    %c2_139 = arith.constant 2 : index
    %c0_140 = arith.constant 0 : index
    %120 = vector.load %arg3[%c0_136, %c0_137, %c2_138, %c2_139, %c0_140] : memref<1x1x10x10x4xf32, #tpu.memory_space<vmem>>, vector<1x1x8x8x4xf32>
    %121 = vector.shape_cast %120 : vector<1x1x8x8x4xf32> to vector<8x8x4xf32>
    %122 = vector.shape_cast %121 : vector<8x8x4xf32> to vector<64x4xf32>
    %c17 = arith.constant 17 : index
    %c0_141 = arith.constant 0 : index
    %c0_142 = arith.constant 0 : index
    %123 = vector.load %arg5[%c17, %c0_141, %c0_142] : memref<27x4x8xf32, #tpu.memory_space<vmem>>, vector<1x4x8xf32>
    %124 = vector.shape_cast %123 : vector<1x4x8xf32> to vector<4x8xf32>
    %cst_143 = arith.constant dense<0.000000e+00> : vector<64x8xf32>
    %125 = tpu.matmul %122, %124, %cst_143 {dimension_numbers = #tpu.dot_dimension_numbers<[1], [0], [0], [1], [0, 0, 1, 1], [], []>} : vector<64x4xf32>, vector<4x8xf32>, vector<64x8xf32> -> vector<64x8xf32>
    %126 = arith.addf %119, %125 : vector<64x8xf32>
    %c0_144 = arith.constant 0 : index
    %c0_145 = arith.constant 0 : index
    %c0_146 = arith.constant 0 : index
    %c0_147 = arith.constant 0 : index
    %c0_148 = arith.constant 0 : index
    %127 = vector.load %arg4[%c0_144, %c0_145, %c0_146, %c0_147, %c0_148] : memref<1x1x10x10x4xf32, #tpu.memory_space<vmem>>, vector<1x1x8x8x4xf32>
    %128 = vector.shape_cast %127 : vector<1x1x8x8x4xf32> to vector<8x8x4xf32>
    %129 = vector.shape_cast %128 : vector<8x8x4xf32> to vector<64x4xf32>
    %c18 = arith.constant 18 : index
    %c0_149 = arith.constant 0 : index
    %c0_150 = arith.constant 0 : index
    %130 = vector.load %arg5[%c18, %c0_149, %c0_150] : memref<27x4x8xf32, #tpu.memory_space<vmem>>, vector<1x4x8xf32>
    %131 = vector.shape_cast %130 : vector<1x4x8xf32> to vector<4x8xf32>
    %cst_151 = arith.constant dense<0.000000e+00> : vector<64x8xf32>
    %132 = tpu.matmul %129, %131, %cst_151 {dimension_numbers = #tpu.dot_dimension_numbers<[1], [0], [0], [1], [0, 0, 1, 1], [], []>} : vector<64x4xf32>, vector<4x8xf32>, vector<64x8xf32> -> vector<64x8xf32>
    %133 = arith.addf %126, %132 : vector<64x8xf32>
    %c0_152 = arith.constant 0 : index
    %c0_153 = arith.constant 0 : index
    %c0_154 = arith.constant 0 : index
    %c1_155 = arith.constant 1 : index
    %c0_156 = arith.constant 0 : index
    %134 = vector.load %arg4[%c0_152, %c0_153, %c0_154, %c1_155, %c0_156] : memref<1x1x10x10x4xf32, #tpu.memory_space<vmem>>, vector<1x1x8x8x4xf32>
    %135 = vector.shape_cast %134 : vector<1x1x8x8x4xf32> to vector<8x8x4xf32>
    %136 = vector.shape_cast %135 : vector<8x8x4xf32> to vector<64x4xf32>
    %c19 = arith.constant 19 : index
    %c0_157 = arith.constant 0 : index
    %c0_158 = arith.constant 0 : index
    %137 = vector.load %arg5[%c19, %c0_157, %c0_158] : memref<27x4x8xf32, #tpu.memory_space<vmem>>, vector<1x4x8xf32>
    %138 = vector.shape_cast %137 : vector<1x4x8xf32> to vector<4x8xf32>
    %cst_159 = arith.constant dense<0.000000e+00> : vector<64x8xf32>
    %139 = tpu.matmul %136, %138, %cst_159 {dimension_numbers = #tpu.dot_dimension_numbers<[1], [0], [0], [1], [0, 0, 1, 1], [], []>} : vector<64x4xf32>, vector<4x8xf32>, vector<64x8xf32> -> vector<64x8xf32>
    %140 = arith.addf %133, %139 : vector<64x8xf32>
    %c0_160 = arith.constant 0 : index
    %c0_161 = arith.constant 0 : index
    %c0_162 = arith.constant 0 : index
    %c2_163 = arith.constant 2 : index
    %c0_164 = arith.constant 0 : index
    %141 = vector.load %arg4[%c0_160, %c0_161, %c0_162, %c2_163, %c0_164] : memref<1x1x10x10x4xf32, #tpu.memory_space<vmem>>, vector<1x1x8x8x4xf32>
    %142 = vector.shape_cast %141 : vector<1x1x8x8x4xf32> to vector<8x8x4xf32>
    %143 = vector.shape_cast %142 : vector<8x8x4xf32> to vector<64x4xf32>
    %c20 = arith.constant 20 : index
    %c0_165 = arith.constant 0 : index
    %c0_166 = arith.constant 0 : index
    %144 = vector.load %arg5[%c20, %c0_165, %c0_166] : memref<27x4x8xf32, #tpu.memory_space<vmem>>, vector<1x4x8xf32>
    %145 = vector.shape_cast %144 : vector<1x4x8xf32> to vector<4x8xf32>
    %cst_167 = arith.constant dense<0.000000e+00> : vector<64x8xf32>
    %146 = tpu.matmul %143, %145, %cst_167 {dimension_numbers = #tpu.dot_dimension_numbers<[1], [0], [0], [1], [0, 0, 1, 1], [], []>} : vector<64x4xf32>, vector<4x8xf32>, vector<64x8xf32> -> vector<64x8xf32>
    %147 = arith.addf %140, %146 : vector<64x8xf32>
    %c0_168 = arith.constant 0 : index
    %c0_169 = arith.constant 0 : index
    %c1_170 = arith.constant 1 : index
    %c0_171 = arith.constant 0 : index
    %c0_172 = arith.constant 0 : index
    %148 = vector.load %arg4[%c0_168, %c0_169, %c1_170, %c0_171, %c0_172] : memref<1x1x10x10x4xf32, #tpu.memory_space<vmem>>, vector<1x1x8x8x4xf32>
    %149 = vector.shape_cast %148 : vector<1x1x8x8x4xf32> to vector<8x8x4xf32>
    %150 = vector.shape_cast %149 : vector<8x8x4xf32> to vector<64x4xf32>
    %c21 = arith.constant 21 : index
    %c0_173 = arith.constant 0 : index
    %c0_174 = arith.constant 0 : index
    %151 = vector.load %arg5[%c21, %c0_173, %c0_174] : memref<27x4x8xf32, #tpu.memory_space<vmem>>, vector<1x4x8xf32>
    %152 = vector.shape_cast %151 : vector<1x4x8xf32> to vector<4x8xf32>
    %cst_175 = arith.constant dense<0.000000e+00> : vector<64x8xf32>
    %153 = tpu.matmul %150, %152, %cst_175 {dimension_numbers = #tpu.dot_dimension_numbers<[1], [0], [0], [1], [0, 0, 1, 1], [], []>} : vector<64x4xf32>, vector<4x8xf32>, vector<64x8xf32> -> vector<64x8xf32>
    %154 = arith.addf %147, %153 : vector<64x8xf32>
    %c0_176 = arith.constant 0 : index
    %c0_177 = arith.constant 0 : index
    %c1_178 = arith.constant 1 : index
    %c1_179 = arith.constant 1 : index
    %c0_180 = arith.constant 0 : index
    %155 = vector.load %arg4[%c0_176, %c0_177, %c1_178, %c1_179, %c0_180] : memref<1x1x10x10x4xf32, #tpu.memory_space<vmem>>, vector<1x1x8x8x4xf32>
    %156 = vector.shape_cast %155 : vector<1x1x8x8x4xf32> to vector<8x8x4xf32>
    %157 = vector.shape_cast %156 : vector<8x8x4xf32> to vector<64x4xf32>
    %c22 = arith.constant 22 : index
    %c0_181 = arith.constant 0 : index
    %c0_182 = arith.constant 0 : index
    %158 = vector.load %arg5[%c22, %c0_181, %c0_182] : memref<27x4x8xf32, #tpu.memory_space<vmem>>, vector<1x4x8xf32>
    %159 = vector.shape_cast %158 : vector<1x4x8xf32> to vector<4x8xf32>
    %cst_183 = arith.constant dense<0.000000e+00> : vector<64x8xf32>
    %160 = tpu.matmul %157, %159, %cst_183 {dimension_numbers = #tpu.dot_dimension_numbers<[1], [0], [0], [1], [0, 0, 1, 1], [], []>} : vector<64x4xf32>, vector<4x8xf32>, vector<64x8xf32> -> vector<64x8xf32>
    %161 = arith.addf %154, %160 : vector<64x8xf32>
    %c0_184 = arith.constant 0 : index
    %c0_185 = arith.constant 0 : index
    %c1_186 = arith.constant 1 : index
    %c2_187 = arith.constant 2 : index
    %c0_188 = arith.constant 0 : index
    %162 = vector.load %arg4[%c0_184, %c0_185, %c1_186, %c2_187, %c0_188] : memref<1x1x10x10x4xf32, #tpu.memory_space<vmem>>, vector<1x1x8x8x4xf32>
    %163 = vector.shape_cast %162 : vector<1x1x8x8x4xf32> to vector<8x8x4xf32>
    %164 = vector.shape_cast %163 : vector<8x8x4xf32> to vector<64x4xf32>
    %c23 = arith.constant 23 : index
    %c0_189 = arith.constant 0 : index
    %c0_190 = arith.constant 0 : index
    %165 = vector.load %arg5[%c23, %c0_189, %c0_190] : memref<27x4x8xf32, #tpu.memory_space<vmem>>, vector<1x4x8xf32>
    %166 = vector.shape_cast %165 : vector<1x4x8xf32> to vector<4x8xf32>
    %cst_191 = arith.constant dense<0.000000e+00> : vector<64x8xf32>
    %167 = tpu.matmul %164, %166, %cst_191 {dimension_numbers = #tpu.dot_dimension_numbers<[1], [0], [0], [1], [0, 0, 1, 1], [], []>} : vector<64x4xf32>, vector<4x8xf32>, vector<64x8xf32> -> vector<64x8xf32>
    %168 = arith.addf %161, %167 : vector<64x8xf32>
    %c0_192 = arith.constant 0 : index
    %c0_193 = arith.constant 0 : index
    %c2_194 = arith.constant 2 : index
    %c0_195 = arith.constant 0 : index
    %c0_196 = arith.constant 0 : index
    %169 = vector.load %arg4[%c0_192, %c0_193, %c2_194, %c0_195, %c0_196] : memref<1x1x10x10x4xf32, #tpu.memory_space<vmem>>, vector<1x1x8x8x4xf32>
    %170 = vector.shape_cast %169 : vector<1x1x8x8x4xf32> to vector<8x8x4xf32>
    %171 = vector.shape_cast %170 : vector<8x8x4xf32> to vector<64x4xf32>
    %c24 = arith.constant 24 : index
    %c0_197 = arith.constant 0 : index
    %c0_198 = arith.constant 0 : index
    %172 = vector.load %arg5[%c24, %c0_197, %c0_198] : memref<27x4x8xf32, #tpu.memory_space<vmem>>, vector<1x4x8xf32>
    %173 = vector.shape_cast %172 : vector<1x4x8xf32> to vector<4x8xf32>
    %cst_199 = arith.constant dense<0.000000e+00> : vector<64x8xf32>
    %174 = tpu.matmul %171, %173, %cst_199 {dimension_numbers = #tpu.dot_dimension_numbers<[1], [0], [0], [1], [0, 0, 1, 1], [], []>} : vector<64x4xf32>, vector<4x8xf32>, vector<64x8xf32> -> vector<64x8xf32>
    %175 = arith.addf %168, %174 : vector<64x8xf32>
    %c0_200 = arith.constant 0 : index
    %c0_201 = arith.constant 0 : index
    %c2_202 = arith.constant 2 : index
    %c1_203 = arith.constant 1 : index
    %c0_204 = arith.constant 0 : index
    %176 = vector.load %arg4[%c0_200, %c0_201, %c2_202, %c1_203, %c0_204] : memref<1x1x10x10x4xf32, #tpu.memory_space<vmem>>, vector<1x1x8x8x4xf32>
    %177 = vector.shape_cast %176 : vector<1x1x8x8x4xf32> to vector<8x8x4xf32>
    %178 = vector.shape_cast %177 : vector<8x8x4xf32> to vector<64x4xf32>
    %c25 = arith.constant 25 : index
    %c0_205 = arith.constant 0 : index
    %c0_206 = arith.constant 0 : index
    %179 = vector.load %arg5[%c25, %c0_205, %c0_206] : memref<27x4x8xf32, #tpu.memory_space<vmem>>, vector<1x4x8xf32>
    %180 = vector.shape_cast %179 : vector<1x4x8xf32> to vector<4x8xf32>
    %cst_207 = arith.constant dense<0.000000e+00> : vector<64x8xf32>
    %181 = tpu.matmul %178, %180, %cst_207 {dimension_numbers = #tpu.dot_dimension_numbers<[1], [0], [0], [1], [0, 0, 1, 1], [], []>} : vector<64x4xf32>, vector<4x8xf32>, vector<64x8xf32> -> vector<64x8xf32>
    %182 = arith.addf %175, %181 : vector<64x8xf32>
    %c0_208 = arith.constant 0 : index
    %c0_209 = arith.constant 0 : index
    %c2_210 = arith.constant 2 : index
    %c2_211 = arith.constant 2 : index
    %c0_212 = arith.constant 0 : index
    %183 = vector.load %arg4[%c0_208, %c0_209, %c2_210, %c2_211, %c0_212] : memref<1x1x10x10x4xf32, #tpu.memory_space<vmem>>, vector<1x1x8x8x4xf32>
    %184 = vector.shape_cast %183 : vector<1x1x8x8x4xf32> to vector<8x8x4xf32>
    %185 = vector.shape_cast %184 : vector<8x8x4xf32> to vector<64x4xf32>
    %c26 = arith.constant 26 : index
    %c0_213 = arith.constant 0 : index
    %c0_214 = arith.constant 0 : index
    %186 = vector.load %arg5[%c26, %c0_213, %c0_214] : memref<27x4x8xf32, #tpu.memory_space<vmem>>, vector<1x4x8xf32>
    %187 = vector.shape_cast %186 : vector<1x4x8xf32> to vector<4x8xf32>
    %cst_215 = arith.constant dense<0.000000e+00> : vector<64x8xf32>
    %188 = tpu.matmul %185, %187, %cst_215 {dimension_numbers = #tpu.dot_dimension_numbers<[1], [0], [0], [1], [0, 0, 1, 1], [], []>} : vector<64x4xf32>, vector<4x8xf32>, vector<64x8xf32> -> vector<64x8xf32>
    %189 = arith.addf %182, %188 : vector<64x8xf32>
    %c0_216 = arith.constant 0 : index
    %c0_217 = arith.constant 0 : index
    %190 = vector.load %arg6[%c0_216, %c0_217] : memref<1x8xf32, #tpu.memory_space<vmem>>, vector<1x8xf32>
    %191 = vector.broadcast %190 : vector<1x8xf32> to vector<64x8xf32>
    %192 = arith.addf %189, %191 : vector<64x8xf32>
    %193 = tpu.transpose %192, [1, 0] : vector<64x8xf32> -> vector<8x64xf32>
    %c0_218 = arith.constant 0 : index
    %c0_219 = arith.constant 0 : index
    %c0_220 = arith.constant 0 : index
    %c0_221 = arith.constant 0 : index
    %194 = vector.load %arg7[%c0_218, %c0_219, %c0_220, %c0_221] : memref<1x1x8x64xf32, #tpu.memory_space<vmem>>, vector<1x1x8x64xf32>
    %195 = vector.shape_cast %194 : vector<1x1x8x64xf32> to vector<8x64xf32>
    %196 = vector.shape_cast %193 : vector<8x64xf32> to vector<1x1x8x64xf32>
    tpu.vector_store %arg7[%c0_218, %c0_219, %c0_220, %c0_221], %196 {strides = array<i32>} : memref<1x1x8x64xf32, #tpu.memory_space<vmem>>, vector<1x1x8x64xf32>,
    return
  }
  func.func @transform_0(%arg0: i32, %arg1: i32) -> (i32, i32, i32, i32, i32) {
    %c0_i32 = arith.constant 0 : i32
    %0 = arith.addi %arg1, %c0_i32 : i32
    %c0_i32_0 = arith.constant 0 : i32
    %c0_i32_1 = arith.constant 0 : i32
    %c0_i32_2 = arith.constant 0 : i32
    %c0_i32_3 = arith.constant 0 : i32
    return %arg0, %0, %c0_i32_0, %c0_i32_1, %c0_i32_2 : i32, i32, i32, i32, i32
  }
  func.func @transform_1(%arg0: i32, %arg1: i32) -> (i32, i32, i32, i32, i32) {
    %c1_i32 = arith.constant 1 : i32
    %0 = arith.addi %arg1, %c1_i32 : i32
    %c0_i32 = arith.constant 0 : i32
    %c0_i32_0 = arith.constant 0 : i32
    %c0_i32_1 = arith.constant 0 : i32
    %c0_i32_2 = arith.constant 0 : i32
    return %arg0, %0, %c0_i32, %c0_i32_0, %c0_i32_1 : i32, i32, i32, i32, i32
  }
  func.func @transform_2(%arg0: i32, %arg1: i32) -> (i32, i32, i32, i32, i32) {
    %c2_i32 = arith.constant 2 : i32
    %0 = arith.addi %arg1, %c2_i32 : i32
    %c0_i32 = arith.constant 0 : i32
    %c0_i32_0 = arith.constant 0 : i32
    %c0_i32_1 = arith.constant 0 : i32
    %c0_i32_2 = arith.constant 0 : i32
    return %arg0, %0, %c0_i32, %c0_i32_0, %c0_i32_1 : i32, i32, i32, i32, i32
  }
  func.func @transform_3(%arg0: i32, %arg1: i32) -> (i32, i32, i32) {
    %c0_i32 = arith.constant 0 : i32
    %c0_i32_0 = arith.constant 0 : i32
    %c0_i32_1 = arith.constant 0 : i32
    %c0_i32_2 = arith.constant 0 : i32
    return %c0_i32, %c0_i32_0, %c0_i32_1 : i32, i32, i32
  }
  func.func @transform_4(%arg0: i32, %arg1: i32) -> (i32, i32) {
    %c0_i32 = arith.constant 0 : i32
    %c0_i32_0 = arith.constant 0 : i32
    %c0_i32_1 = arith.constant 0 : i32
    return %c0_i32, %c0_i32_0 : i32, i32
  }
  func.func @transform_5(%arg0: i32, %arg1: i32) -> (i32, i32, i32, i32) {
    %c0_i32 = arith.constant 0 : i32
    %c0_i32_0 = arith.constant 0 : i32
    %c0_i32_1 = arith.constant 0 : i32
    return %arg0, %arg1, %c0_i32, %c0_i32_0 : i32, i32, i32, i32
  }
}

</mosaic_0001>

<llo_original>
// kernel: tpu_custom_call.1
$region0: #{tpu_custom_call.1}
  #allocation0 [shape = 'u32[]', space=smem, size = 0x4, offset = 0x4, fixed_abs, tag = 'smem constant byte address 0x4 - core index']
  #allocation1 [shape = 'u32[144,128]{1,0:T(1,128)}', space=vmem, size = 0x12000, scoped, tag = 'internal scratch']
  %s0 = inlined_call_operand.vmem [shape: f32[2,10,10,10,4], index: 0, kind: input, shape index: {}]
  %s1 = inlined_call_operand.vmem [shape: f32[2,10,10,10,4], index: 1, kind: input, shape index: {}]
  %s2 = inlined_call_operand.vmem [shape: f32[2,10,10,10,4], index: 2, kind: input, shape index: {}]
  %s3 = inlined_call_operand.vmem [shape: f32[27,4,8], index: 3, kind: input, shape index: {}]
  %s4 = inlined_call_operand.vmem [shape: f32[1,8], index: 4, kind: input, shape index: {}]
  %s5 = inlined_call_operand.hbm [shape: f32[2,8,8,64], index: 5, kind: output, shape index: {}]
  %s6 = sld [smem:[#allocation0]]
  $region53: #{tpu_custom_call.1} parent=0
    _
  %s8 = ssub.s32 1, %s6
  %s9 = scalar_select 0, %s8, %s6
  $region1: #{tpu_custom_call.1} parent=0
    #allocation2 [shape = 'u8[8192]{0}', space=vmem, size = 0x2000, scoped, tag = 'output window, operand 0']
    #allocation3 [shape = 's32[2]{0}', space=sflag, size = 0x8, scoped, tag = 'scoped memory for tpu_custom_call.1']
    %10 = vsyncpa [#allocation3], 0
    %s11 = scalar_lea.sflag [#allocation3], 1
    %12 = vsyncpa %s11, 0
    loop: start=0, step=1, limit=18
    $region2: #{tpu_custom_call.1} parent=1 // loop_pre_header
      _
    $region3: #{tpu_custom_call.1} parent=1 // loop_header
      %s14 = sphi 0, %s18
      %p15 = scmp.ge.s32.totalorder %s14, 18
      %s21 = sphi 0, %s33
      %s22 = sphi 0, %s29
      %s23 = sphi 0, %s21
      %s24 = sphi 0, %s22
      %s25 = sphi 0, %s23
      %s26 = sphi 0, %s24
      %s38 = sphi 0, %s40
      %s41 = sphi 0, %s38
      %s42 = sphi 0, %s41
      %s58 = sphi 0, %s42
      %s68 = sphi 0, %s70
      %s71 = sphi 0, %s68
      %s72 = sphi 0, %s71
      %s88 = sphi 0, %s72
      %s98 = sphi 0, %s100
      %s101 = sphi 0, %s98
      %s102 = sphi 0, %s101
      %s118 = sphi 0, %s102
      %s122 = sphi 0, %s122
      %s124 = sphi 0, %s122
      %s125 = sphi 0, %s124
      %s139 = sphi 0, %s125
      %s143 = sphi 0, %s143
      %s145 = sphi 0, %s143
      %s146 = sphi 0, %s145
      %s160 = sphi 0, %s146
      %s168 = sphi 0, %s170
      %s171 = sphi 0, %s168
      %s172 = sphi 0, %s171
      %s188 = sphi 0, %s172
    $region4: #{tpu_custom_call.1} parent=1 // loop_header_branch
      %17 = sbr.rel (%p15) target = $region8
    $region5: #{tpu_custom_call.1} parent=1 // loop_body
      %s19 = ssub.s32 %s14, 1
      %s20 = ssub.s32 %s14, 2
      %s27 = sadd.s32 1, %s22
      %p28 = scmp.ge.s32.totalorder %s27, 8
      %s29 = scalar_select %p28, 0, %s27
      %s30 = sadd.s32 1, %s21
      %s31 = scalar_select %p28, %s30, %s21
      %p32 = scmp.ge.s32.totalorder %s31, 2
      %s33 = scalar_select %p32, 0, %s31
      %s34 = ssub.s32 %s21, %s33
      %s35 = ssub.s32 %s22, %s29
      %s36 = sor.u32 %s34, %s35
      %p37 = scmp.eq.s32.totalorder %s36, 0
      %s39 = sadd.s32 %s38, 1
      %s40 = scalar_select %p37, %s38, %s39
      %p43 = pneg %p37
      %p44 = scmp.eq.s32.totalorder %s14, 15
      %p45 = por %p43, %p44
      %p46 = scmp.ne.s32.totalorder %s38, %s41
      %p47 = scmp.eq.s32.totalorder %s14, 0
      %p48 = por %p46, %p47
      %p49 = scmp.ne.s32.totalorder %s38, %s41
      %p50 = scmp.eq.s32.totalorder %s19, 15
      %p51 = por %p49, %p50
      %p52 = scmp.ne.s32.totalorder %s41, %s42
      %p53 = scmp.eq.s32.totalorder %s19, 0
      %p54 = por %p52, %p53
      %p55 = scmp.ne.s32.totalorder %s41, %s42
      %p56 = scmp.eq.s32.totalorder %s20, 15
      %p57 = por %p55, %p56
      %p59 = scmp.ne.s32.totalorder %s42, %s58
      %p60 = scmp.eq.s32.totalorder %s20, 0
      %p61 = por %p59, %p60
      %s62 = sadd.s32 %s22, 1
      %s63 = sadd.s32 %s29, 1
      %s64 = ssub.s32 %s21, %s33
      %s65 = ssub.s32 %s62, %s63
      %s66 = sor.u32 %s64, %s65
      %p67 = scmp.eq.s32.totalorder %s66, 0
      %s69 = sadd.s32 %s68, 1
      %s70 = scalar_select %p67, %s68, %s69
      %p73 = pneg %p67
      %p74 = scmp.eq.s32.totalorder %s14, 15
      %p75 = por %p73, %p74
      %p76 = scmp.ne.s32.totalorder %s68, %s71
      %p77 = scmp.eq.s32.totalorder %s14, 0
      %p78 = por %p76, %p77
      %p79 = scmp.ne.s32.totalorder %s68, %s71
      %p80 = scmp.eq.s32.totalorder %s19, 15
      %p81 = por %p79, %p80
      %p82 = scmp.ne.s32.totalorder %s71, %s72
      %p83 = scmp.eq.s32.totalorder %s19, 0
      %p84 = por %p82, %p83
      %p85 = scmp.ne.s32.totalorder %s71, %s72
      %p86 = scmp.eq.s32.totalorder %s20, 15
      %p87 = por %p85, %p86
      %p89 = scmp.ne.s32.totalorder %s72, %s88
      %p90 = scmp.eq.s32.totalorder %s20, 0
      %p91 = por %p89, %p90
      %s92 = sadd.s32 %s22, 2
      %s93 = sadd.s32 %s29, 2
      %s94 = ssub.s32 %s21, %s33
      %s95 = ssub.s32 %s92, %s93
      %s96 = sor.u32 %s94, %s95
      %p97 = scmp.eq.s32.totalorder %s96, 0
      %s99 = sadd.s32 %s98, 1
      %s100 = scalar_select %p97, %s98, %s99
      %p103 = pneg %p97
      %p104 = scmp.eq.s32.totalorder %s14, 15
      %p105 = por %p103, %p104
      %p106 = scmp.ne.s32.totalorder %s98, %s101
      %p107 = scmp.eq.s32.totalorder %s14, 0
      %p108 = por %p106, %p107
      %p109 = scmp.ne.s32.totalorder %s98, %s101
      %p110 = scmp.eq.s32.totalorder %s19, 15
      %p111 = por %p109, %p110
      %p112 = scmp.ne.s32.totalorder %s101, %s102
      %p113 = scmp.eq.s32.totalorder %s19, 0
      %p114 = por %p112, %p113
      %p115 = scmp.ne.s32.totalorder %s101, %s102
      %p116 = scmp.eq.s32.totalorder %s20, 15
      %p117 = por %p115, %p116
      %p119 = scmp.ne.s32.totalorder %s102, %s118
      %p120 = scmp.eq.s32.totalorder %s20, 0
      %p121 = por %p119, %p120
      %s123 = sadd.s32 %s122, 1
      %p126 = scmp.eq.s32.totalorder %s14, 15
      %p127 = scmp.ne.s32.totalorder %s122, %s124
      %p128 = scmp.eq.s32.totalorder %s14, 0
      %p129 = por %p127, %p128
      %p130 = scmp.ne.s32.totalorder %s122, %s124
      %p131 = scmp.eq.s32.totalorder %s19, 15
      %p132 = por %p130, %p131
      %p133 = scmp.ne.s32.totalorder %s124, %s125
      %p134 = scmp.eq.s32.totalorder %s19, 0
      %p135 = por %p133, %p134
      %p136 = scmp.ne.s32.totalorder %s124, %s125
      %p137 = scmp.eq.s32.totalorder %s20, 15
      %p138 = por %p136, %p137
      %p140 = scmp.ne.s32.totalorder %s125, %s139
      %p141 = scmp.eq.s32.totalorder %s20, 0
      %p142 = por %p140, %p141
      %s144 = sadd.s32 %s143, 1
      %p147 = scmp.eq.s32.totalorder %s14, 15
      %p148 = scmp.ne.s32.totalorder %s143, %s145
      %p149 = scmp.eq.s32.totalorder %s14, 0
      %p150 = por %p148, %p149
      %p151 = scmp.ne.s32.totalorder %s143, %s145
      %p152 = scmp.eq.s32.totalorder %s19, 15
      %p153 = por %p151, %p152
      %p154 = scmp.ne.s32.totalorder %s145, %s146
      %p155 = scmp.eq.s32.totalorder %s19, 0
      %p156 = por %p154, %p155
      %p157 = scmp.ne.s32.totalorder %s145, %s146
      %p158 = scmp.eq.s32.totalorder %s20, 15
      %p159 = por %p157, %p158
      %p161 = scmp.ne.s32.totalorder %s146, %s160
      %p162 = scmp.eq.s32.totalorder %s20, 0
      %p163 = por %p161, %p162
      %s164 = ssub.s32 %s21, %s33
      %s165 = ssub.s32 %s22, %s29
      %s166 = sor.u32 %s164, %s165
      %p167 = scmp.eq.s32.totalorder %s166, 0
      %s169 = sadd.s32 %s168, 1
      %s170 = scalar_select %p167, %s168, %s169
      %p173 = pneg %p167
      %p174 = scmp.eq.s32.totalorder %s14, 15
      %p175 = por %p173, %p174
      %p176 = scmp.ne.s32.totalorder %s168, %s171
      %p177 = scmp.eq.s32.totalorder %s14, 0
      %p178 = por %p176, %p177
      %p179 = scmp.ne.s32.totalorder %s168, %s171
      %p180 = scmp.eq.s32.totalorder %s19, 15
      %p181 = por %p179, %p180
      %p182 = scmp.ne.s32.totalorder %s171, %s172
      %p183 = scmp.eq.s32.totalorder %s19, 0
      %p184 = por %p182, %p183
      %p185 = scmp.ne.s32.totalorder %s171, %s172
      %p186 = scmp.eq.s32.totalorder %s20, 15
      %p187 = por %p185, %p186
      %p189 = scmp.ne.s32.totalorder %s172, %s188
      %p190 = scmp.eq.s32.totalorder %s20, 0
      %p191 = por %p189, %p190
      %p192 = scmp.le.s32.totalorder 1, %s14
      %p193 = scmp.lt.s32.totalorder %s14, 17
      %p194 = pnand %p192, %p193
      %p195 = pneg %p194
      // Predicated region
      $region9: #{tpu_custom_call.1} parent=5 // pred_check
        _
      $region10: #{tpu_custom_call.1} parent=5 // pred_check_branch
        %197 = sbr.rel (%p194) target = $region12
      $region11: #{tpu_custom_call.1} parent=5 // pred_region
        %s198 = ssub.s32 %s14, 1
        // Predicated region
        $region13: #{tpu_custom_call.1} parent=11 // pred_check
          %p199 = pneg %p135
        $region14: #{tpu_custom_call.1} parent=11 // pred_check_branch
          %201 = sbr.rel (%p199) target = $region16
        $region15: #{tpu_custom_call.1} parent=11 // pred_region
          _
        $region16: #{tpu_custom_call.1} parent=11 // pred_fallthru
          _
        // Predicated region
        $region17: #{tpu_custom_call.1} parent=11 // pred_check
          %p202 = pneg %p156
        $region18: #{tpu_custom_call.1} parent=11 // pred_check_branch
          %204 = sbr.rel (%p202) target = $region20
        $region19: #{tpu_custom_call.1} parent=11 // pred_region
          _
        $region20: #{tpu_custom_call.1} parent=11 // pred_fallthru
          _
      $region12: #{tpu_custom_call.1} parent=5 // pred_fallthru
        _
      %p205 = scmp.lt.s32.totalorder %s14, 16
      // Predicated region
      $region21: #{tpu_custom_call.1} parent=5 // pred_check
        %p206 = pneg %p205
      $region22: #{tpu_custom_call.1} parent=5 // pred_check_branch
        %208 = sbr.rel (%p206) target = $region24
      $region23: #{tpu_custom_call.1} parent=5 // pred_region
        // Predicated region
        $region25: #{tpu_custom_call.1} parent=23 // pred_check
          %p209 = pneg %p48
        $region26: #{tpu_custom_call.1} parent=23 // pred_check_branch
          %211 = sbr.rel (%p209) target = $region28
        $region27: #{tpu_custom_call.1} parent=23 // pred_region
          %p212 = scmp.lt.s32.totalorder %s21, 1
          %s213 = scalar_select %p212, %s21, 1
          %p214 = scmp.lt.s32.totalorder %s22, 9
          %s215 = scalar_select %p214, %s22, 9
          %s216 = smul.addr %s215, 20
          %s217 = smul.addr %s213, 200
          %s218 = sadd.s32 %s216, %s217
          %s219 = smul.addr %s218, 8
          %s220 = scalar_lea.vmem %s0, %s219
        $region28: #{tpu_custom_call.1} parent=23 // pred_fallthru
          _
        // Predicated region
        $region29: #{tpu_custom_call.1} parent=23 // pred_check
          %p221 = pneg %p78
        $region30: #{tpu_custom_call.1} parent=23 // pred_check_branch
          %223 = sbr.rel (%p221) target = $region32
        $region31: #{tpu_custom_call.1} parent=23 // pred_region
          %s224 = sadd.s32 %s22, 1
          %p225 = scmp.lt.s32.totalorder %s21, 1
          %s226 = scalar_select %p225, %s21, 1
          %p227 = scmp.lt.s32.totalorder %s224, 9
          %s228 = scalar_select %p227, %s224, 9
          %s229 = smul.addr %s228, 20
          %s230 = smul.addr %s226, 200
          %s231 = sadd.s32 %s229, %s230
          %s232 = smul.addr %s231, 8
          %s233 = scalar_lea.vmem %s1, %s232
          %s234 = sadd.s32 %s22, 1
        $region32: #{tpu_custom_call.1} parent=23 // pred_fallthru
          _
        // Predicated region
        $region33: #{tpu_custom_call.1} parent=23 // pred_check
          %p235 = pneg %p108
        $region34: #{tpu_custom_call.1} parent=23 // pred_check_branch
          %237 = sbr.rel (%p235) target = $region36
        $region35: #{tpu_custom_call.1} parent=23 // pred_region
          %s238 = sadd.s32 %s22, 2
          %p239 = scmp.lt.s32.totalorder %s21, 1
          %s240 = scalar_select %p239, %s21, 1
          %p241 = scmp.lt.s32.totalorder %s238, 9
          %s242 = scalar_select %p241, %s238, 9
          %s243 = smul.addr %s242, 20
          %s244 = smul.addr %s240, 200
          %s245 = sadd.s32 %s243, %s244
          %s246 = smul.addr %s245, 8
          %s247 = scalar_lea.vmem %s2, %s246
          %s248 = sadd.s32 %s22, 2
        $region36: #{tpu_custom_call.1} parent=23 // pred_fallthru
          _
      $region24: #{tpu_custom_call.1} parent=5 // pred_fallthru
        _
      %p249 = scmp.le.s32.totalorder 1, %s14
      %p250 = scmp.lt.s32.totalorder %s14, 17
      %p251 = pnand %p249, %p250
      %p252 = pneg %p251
      // Predicated region
      $region37: #{tpu_custom_call.1} parent=5 // pred_check
        _
      $region38: #{tpu_custom_call.1} parent=5 // pred_check_branch
        %254 = sbr.rel (%p251) target = $region40
      $region39: #{tpu_custom_call.1} parent=5 // pred_region
        %s255 = ssub.s32 %s14, 1
        %p256 = scmp.lt.s32.totalorder %s23, 1
        %s257 = scalar_select %p256, %s23, 1
        %p258 = scmp.lt.s32.totalorder %s24, 9
        %s259 = scalar_select %p258, %s24, 9
        %s260 = smul.addr %s259, 20
        %s261 = smul.addr %s257, 200
        %s262 = sadd.s32 %s260, %s261
        %s263 = smul.addr %s262, 8
        %s264 = scalar_lea.vmem %s0, %s263
        %p265 = pneg %p54
        %p266 = pneg %p51
        %s267 = sadd.s32 %s24, 1
        %p268 = scmp.lt.s32.totalorder %s23, 1
        %s269 = scalar_select %p268, %s23, 1
        %p270 = scmp.lt.s32.totalorder %s267, 9
        %s271 = scalar_select %p270, %s267, 9
        %s272 = smul.addr %s271, 20
        %s273 = smul.addr %s269, 200
        %s274 = sadd.s32 %s272, %s273
        %s275 = smul.addr %s274, 8
        %s276 = scalar_lea.vmem %s1, %s275
        %p277 = pneg %p84
        %p278 = pneg %p81
        %s279 = sadd.s32 %s24, 2
        %p280 = scmp.lt.s32.totalorder %s23, 1
        %s281 = scalar_select %p280, %s23, 1
        %p282 = scmp.lt.s32.totalorder %s279, 9
        %s283 = scalar_select %p282, %s279, 9
        %s284 = smul.addr %s283, 20
        %s285 = smul.addr %s281, 200
        %s286 = sadd.s32 %s284, %s285
        %s287 = smul.addr %s286, 8
        %s288 = scalar_lea.vmem %s2, %s287
        %p289 = pneg %p114
        %p290 = pneg %p111
        %p291 = pneg %p135
        %p292 = pneg %p132
        %p293 = pneg %p156
        %p294 = pneg %p153
        %p295 = pneg %p184
        %p296 = pneg %p181
        %s297 = sand.u32 %s171, 1
        %s298 = scalar_lea.sflag [#allocation3], %s297
        %s299 = sand.u32 %s171, 1
        %s300 = smul.addr %s299, 8
        %s301 = scalar_lea.vmem [#allocation2], %s300
        %p302 = scmp.lt.s32.totalorder %s23, 1
        %s303 = scalar_select %p302, %s23, 1
        %p304 = scmp.lt.s32.totalorder %s24, 9
        %s305 = scalar_select %p304, %s24, 9
        %s306 = smul.addr %s305, 20
        %s307 = smul.addr %s303, 200
        %s308 = sadd.s32 %s306, %s307
        %s309 = smul.addr %s308, 8
        %s310 = scalar_lea.vmem %s0, %s309
        %s311 = sadd.s32 %s24, 1
        %p312 = scmp.lt.s32.totalorder %s23, 1
        %s313 = scalar_select %p312, %s23, 1
        %p314 = scmp.lt.s32.totalorder %s311, 9
        %s315 = scalar_select %p314, %s311, 9
        %s316 = smul.addr %s315, 20
        %s317 = smul.addr %s313, 200
        %s318 = sadd.s32 %s316, %s317
        %s319 = smul.addr %s318, 8
        %s320 = scalar_lea.vmem %s1, %s319
        %s321 = sadd.s32 %s24, 1
        %s322 = sadd.s32 %s24, 2
        %p323 = scmp.lt.s32.totalorder %s23, 1
        %s324 = scalar_select %p323, %s23, 1
        %p325 = scmp.lt.s32.totalorder %s322, 9
        %s326 = scalar_select %p325, %s322, 9
        %s327 = smul.addr %s326, 20
        %s328 = smul.addr %s324, 200
        %s329 = sadd.s32 %s327, %s328
        %s330 = smul.addr %s329, 8
        %s331 = scalar_lea.vmem %s2, %s330
        %s332 = sadd.s32 %s24, 2
        %v333 = vld [vmem:[%s310] sm:$0xff]
        %v334 = vld [vmem:[%s310 + $0x10] sm:$0xff]
        %v335 = vld [vmem:[%s310 + $0x20] sm:$0xff]
        %v336 = vld [vmem:[%s310 + $0x30] sm:$0xff]
        %v337 = vld [vmem:[%s310 + $0x40] sm:$0xff]
        %v338 = vld [vmem:[%s310 + $0x50] sm:$0xff]
        %v339 = vld [vmem:[%s310 + $0x60] sm:$0xff]
        %v340 = vld [vmem:[%s310 + $0x70] sm:$0xff]
        %v341 = vld [vmem:[%s3] sm:$0xf]
        %v342 = vld [vmem:[%s310 + $0x1] sm:$0xff]
        %v343 = vld [vmem:[%s310 + $0x11] sm:$0xff]
        %v344 = vld [vmem:[%s310 + $0x21] sm:$0xff]
        %v345 = vld [vmem:[%s310 + $0x31] sm:$0xff]
        %v346 = vld [vmem:[%s310 + $0x41] sm:$0xff]
        %v347 = vld [vmem:[%s310 + $0x51] sm:$0xff]
        %v348 = vld [vmem:[%s310 + $0x61] sm:$0xff]
        %v349 = vld [vmem:[%s310 + $0x71] sm:$0xff]
        %s350 = scalar_lea.vmem %s3, 4
        %v351 = vld [vmem:[%s350] sm:$0xf]
        %vm352 = vcmask 31744
        %v354 = vsel %vm352, %v342, 0
        %v357 = vsel %vm352, %v343, 0
        %v360 = vsel %vm352, %v344, 0
        %v363 = vsel %vm352, %v345, 0
        %v366 = vsel %vm352, %v346, 0
        %v369 = vsel %vm352, %v347, 0
        %v372 = vsel %vm352, %v348, 0
        %v375 = vsel %vm352, %v349, 0
        %vm377 = vcmask 1043456
        %v379 = vsel %vm377, %v351, 0
        %381 = vmatprep.subr.mxu0 0.0
        %382 = vmatpush1.msra.mxu0 %v379
        %383 = vmatprep.subr.mxu0 0.0
        %384 = vmatpush1.msra.mxu0 0.0
        %385 = vmatprep.subr.mxu0 0.0
        %386 = vmatpush1.msra.mxu0 0.0
        %387 = vmatprep.subr.mxu0 0.0
        %388 = vmatpush1.msra.mxu0 0.0
        %389 = vmatprep.subr.mxu0 0.0
        %390 = vmatpush1.msra.mxu0 0.0
        %391 = vmatprep.subr.mxu0 0.0
        %392 = vmatpush1.msra.mxu0 0.0
        %393 = vmatprep.subr.mxu0 0.0
        %394 = vmatpush1.msra.mxu0 0.0
        %395 = vmatprep.subr.mxu0 0.0
        %396 = vmatpush1.msra.mxu0 0.0
        %397 = vmatprep.subr.mxu0 0.0
        %398 = vmatpush1.msra.mxu0 0.0
        %399 = vmatprep.subr.mxu0 0.0
        %400 = vmatpush1.msra.mxu0 0.0
        %401 = vmatprep.subr.mxu0 0.0
        %402 = vmatpush1.msra.mxu0 0.0
        %403 = vmatprep.subr.mxu0 0.0
        %404 = vmatpush1.msra.mxu0 0.0
        %405 = vmatprep.subr.mxu0 0.0
        %406 = vmatpush1.msra.mxu0 0.0
        %407 = vmatprep.subr.mxu0 0.0
        %408 = vmatpush1.msra.mxu0 0.0
        %409 = vmatprep.subr.mxu0 0.0
        %410 = vmatpush1.msra.mxu0 0.0
        %411 = vmatprep.subr.mxu0 0.0
        %412 = vmatpush1.msra.mxu0 0.0
        %413 = vmatprep.subr.mxu0 0.0
        %414 = vmatpush1.msra.mxu0 0.0
        %415 = vmatprep.subr.mxu0 0.0
        %416 = vmatpush1.msra.mxu0 0.0
        %417 = vmatprep.subr.mxu0 0.0
        %418 = vmatpush1.msra.mxu0 0.0
        %419 = vmatprep.subr.mxu0 0.0
        %420 = vmatpush1.msra.mxu0 0.0
        %421 = vmatprep.subr.mxu0 0.0
        %422 = vmatpush1.msra.mxu0 0.0
        %423 = vmatprep.subr.mxu0 0.0
        %424 = vmatpush1.msra.mxu0 0.0
        %425 = vmatprep.subr.mxu0 0.0
        %426 = vmatpush1.msra.mxu0 0.0
        %427 = vmatprep.subr.mxu0 0.0
        %428 = vmatpush1.msra.mxu0 0.0
        %429 = vmatprep.subr.mxu0 0.0
        %430 = vmatpush1.msra.mxu0 0.0
        %431 = vmatprep.subr.mxu0 0.0
        %432 = vmatpush1.msra.mxu0 0.0
        %433 = vmatprep.subr.mxu0 0.0
        %434 = vmatpush1.msra.mxu0 0.0
        %435 = vmatprep.subr.mxu0 0.0
        %436 = vmatpush1.msra.mxu0 0.0
        %437 = vmatprep.subr.mxu0 0.0
        %438 = vmatpush1.msra.mxu0 0.0
        %439 = vmatprep.subr.mxu0 0.0
        %440 = vmatpush1.msra.mxu0 0.0
        %441 = vmatprep.subr.mxu0 0.0
        %442 = vmatpush1.msra.mxu0 0.0
        %443 = vmatprep.subr.mxu0 0.0
        %444 = vmatpush1.msra.mxu0 0.0
        %445 = vmatprep.mubr.f32.mxu0 0.0
        %446 = vmatmul.mubr.f32.gmra.mrb[0].mxu0 %v354
        %v447 = vpop.f32.mrb[0].mxu0
        %v448 = vadd.f32 0.0, %v447
        %v449 = vpop.f32.mrb[0].mxu0
        %450 = vmatprep.mubr.f32.mxu0 0.0
        %451 = vmatmul.mubr.f32.gmra.mrb[0].mxu0 %v357
        %v452 = vpop.f32.mrb[0].mxu0
        %v453 = vadd.f32 0.0, %v452
        %v454 = vpop.f32.mrb[0].mxu0
        %455 = vmatprep.mubr.f32.mxu0 0.0
        %456 = vmatmul.mubr.f32.gmra.mrb[0].mxu0 %v360
        %v457 = vpop.f32.mrb[0].mxu0
        %v458 = vadd.f32 0.0, %v457
        %v459 = vpop.f32.mrb[0].mxu0
        %460 = vmatprep.mubr.f32.mxu0 0.0
        %461 = vmatmul.mubr.f32.gmra.mrb[0].mxu0 %v363
        %v462 = vpop.f32.mrb[0].mxu0
        %v463 = vadd.f32 0.0, %v462
        %v464 = vpop.f32.mrb[0].mxu0
        %465 = vmatprep.mubr.f32.mxu0 0.0
        %466 = vmatmul.mubr.f32.gmra.mrb[0].mxu0 %v366
        %v467 = vpop.f32.mrb[0].mxu0
        %v468 = vadd.f32 0.0, %v467
        %v469 = vpop.f32.mrb[0].mxu0
        %470 = vmatprep.mubr.f32.mxu0 0.0
        %471 = vmatmul.mubr.f32.gmra.mrb[0].mxu0 %v369
        %v472 = vpop.f32.mrb[0].mxu0
        %v473 = vadd.f32 0.0, %v472
        %v474 = vpop.f32.mrb[0].mxu0
        %475 = vmatprep.mubr.f32.mxu0 0.0
        %476 = vmatmul.mubr.f32.gmra.mrb[0].mxu0 %v372
        %v477 = vpop.f32.mrb[0].mxu0
        %v478 = vadd.f32 0.0, %v477
        %v479 = vpop.f32.mrb[0].mxu0
        %480 = vmatprep.mubr.f32.mxu0 0.0
        %481 = vmatmul.mubr.f32.gmra.mrb[0].mxu0 %v375
        %v482 = vpop.f32.mrb[0].mxu0
        %v483 = vadd.f32 0.0, %v482
        %v484 = vpop.f32.mrb[0].mxu0
        %485 = vdwg.mxu0
        %v487 = vsel %vm352, %v333, 0
        %v490 = vsel %vm352, %v334, 0
        %v493 = vsel %vm352, %v335, 0
        %v496 = vsel %vm352, %v336, 0
        %v499 = vsel %vm352, %v337, 0
        %v502 = vsel %vm352, %v338, 0
        %v505 = vsel %vm352, %v339, 0
        %v508 = vsel %vm352, %v340, 0
        %v511 = vsel %vm377, %v341, 0
        %513 = vmatprep.subr.mxu0 0.0
        %514 = vmatpush1.msra.mxu0 %v511
        %515 = vmatprep.subr.mxu0 0.0
        %516 = vmatpush1.msra.mxu0 0.0
        %517 = vmatprep.subr.mxu0 0.0
        %518 = vmatpush1.msra.mxu0 0.0
        %519 = vmatprep.subr.mxu0 0.0
        %520 = vmatpush1.msra.mxu0 0.0
        %521 = vmatprep.subr.mxu0 0.0
        %522 = vmatpush1.msra.mxu0 0.0
        %523 = vmatprep.subr.mxu0 0.0
        %524 = vmatpush1.msra.mxu0 0.0
        %525 = vmatprep.subr.mxu0 0.0
        %526 = vmatpush1.msra.mxu0 0.0
        %527 = vmatprep.subr.mxu0 0.0
        %528 = vmatpush1.msra.mxu0 0.0
        %529 = vmatprep.subr.mxu0 0.0
        %530 = vmatpush1.msra.mxu0 0.0
        %531 = vmatprep.subr.mxu0 0.0
        %532 = vmatpush1.msra.mxu0 0.0
        %533 = vmatprep.subr.mxu0 0.0
        %534 = vmatpush1.msra.mxu0 0.0
        %535 = vmatprep.subr.mxu0 0.0
        %536 = vmatpush1.msra.mxu0 0.0
        %537 = vmatprep.subr.mxu0 0.0
        %538 = vmatpush1.msra.mxu0 0.0
        %539 = vmatprep.subr.mxu0 0.0
        %540 = vmatpush1.msra.mxu0 0.0
        %541 = vmatprep.subr.mxu0 0.0
        %542 = vmatpush1.msra.mxu0 0.0
        %543 = vmatprep.subr.mxu0 0.0
        %544 = vmatpush1.msra.mxu0 0.0
        %545 = vmatprep.subr.mxu0 0.0
        %546 = vmatpush1.msra.mxu0 0.0
        %547 = vmatprep.subr.mxu0 0.0
        %548 = vmatpush1.msra.mxu0 0.0
        %549 = vmatprep.subr.mxu0 0.0
        %550 = vmatpush1.msra.mxu0 0.0
        %551 = vmatprep.subr.mxu0 0.0
        %552 = vmatpush1.msra.mxu0 0.0
        %553 = vmatprep.subr.mxu0 0.0
        %554 = vmatpush1.msra.mxu0 0.0
        %555 = vmatprep.subr.mxu0 0.0
        %556 = vmatpush1.msra.mxu0 0.0
        %557 = vmatprep.subr.mxu0 0.0
        %558 = vmatpush1.msra.mxu0 0.0
        %559 = vmatprep.subr.mxu0 0.0
        %560 = vmatpush1.msra.mxu0 0.0
        %561 = vmatprep.subr.mxu0 0.0
        %562 = vmatpush1.msra.mxu0 0.0
        %563 = vmatprep.subr.mxu0 0.0
        %564 = vmatpush1.msra.mxu0 0.0
        %565 = vmatprep.subr.mxu0 0.0
        %566 = vmatpush1.msra.mxu0 0.0
        %567 = vmatprep.subr.mxu0 0.0
        %568 = vmatpush1.msra.mxu0 0.0
        %569 = vmatprep.subr.mxu0 0.0
        %570 = vmatpush1.msra.mxu0 0.0
        %571 = vmatprep.subr.mxu0 0.0
        %572 = vmatpush1.msra.mxu0 0.0
        %573 = vmatprep.subr.mxu0 0.0
        %574 = vmatpush1.msra.mxu0 0.0
        %575 = vmatprep.subr.mxu0 0.0
        %576 = vmatpush1.msra.mxu0 0.0
        %577 = vmatprep.mubr.f32.mxu0 0.0
        %578 = vmatmul.mubr.f32.gmra.mrb[0].mxu0 %v487
        %v579 = vpop.f32.mrb[0].mxu0
        %v580 = vadd.f32 %v448, %v579
        %v581 = vpop.f32.mrb[0].mxu0
        %582 = vmatprep.mubr.f32.mxu0 0.0
        %583 = vmatmul.mubr.f32.gmra.mrb[0].mxu0 %v490
        %v584 = vpop.f32.mrb[0].mxu0
        %v585 = vadd.f32 %v453, %v584
        %v586 = vpop.f32.mrb[0].mxu0
        %587 = vmatprep.mubr.f32.mxu0 0.0
        %588 = vmatmul.mubr.f32.gmra.mrb[0].mxu0 %v493
        %v589 = vpop.f32.mrb[0].mxu0
        %v590 = vadd.f32 %v458, %v589
        %v591 = vpop.f32.mrb[0].mxu0
        %592 = vmatprep.mubr.f32.mxu0 0.0
        %593 = vmatmul.mubr.f32.gmra.mrb[0].mxu0 %v496
        %v594 = vpop.f32.mrb[0].mxu0
        %v595 = vadd.f32 %v463, %v594
        %v596 = vpop.f32.mrb[0].mxu0
        %597 = vmatprep.mubr.f32.mxu0 0.0
        %598 = vmatmul.mubr.f32.gmra.mrb[0].mxu0 %v499
        %v599 = vpop.f32.mrb[0].mxu0
        %v600 = vadd.f32 %v468, %v599
        %v601 = vpop.f32.mrb[0].mxu0
        %602 = vmatprep.mubr.f32.mxu0 0.0
        %603 = vmatmul.mubr.f32.gmra.mrb[0].mxu0 %v502
        %v604 = vpop.f32.mrb[0].mxu0
        %v605 = vadd.f32 %v473, %v604
        %v606 = vpop.f32.mrb[0].mxu0
        %607 = vmatprep.mubr.f32.mxu0 0.0
        %608 = vmatmul.mubr.f32.gmra.mrb[0].mxu0 %v505
        %v609 = vpop.f32.mrb[0].mxu0
        %v610 = vadd.f32 %v478, %v609
        %v611 = vpop.f32.mrb[0].mxu0
        %612 = vmatprep.mubr.f32.mxu0 0.0
        %613 = vmatmul.mubr.f32.gmra.mrb[0].mxu0 %v508
        %v614 = vpop.f32.mrb[0].mxu0
        %v615 = vadd.f32 %v483, %v614
        %v616 = vpop.f32.mrb[0].mxu0
        %617 = vdwg.mxu0
        %v618 = vld [vmem:[%s310 + $0x2] sm:$0xff]
        %v619 = vld [vmem:[%s310 + $0x12] sm:$0xff]
        %v620 = vld [vmem:[%s310 + $0x22] sm:$0xff]
        %v621 = vld [vmem:[%s310 + $0x32] sm:$0xff]
        %v622 = vld [vmem:[%s310 + $0x42] sm:$0xff]
        %v623 = vld [vmem:[%s310 + $0x52] sm:$0xff]
        %v624 = vld [vmem:[%s310 + $0x62] sm:$0xff]
        %v625 = vld [vmem:[%s310 + $0x72] sm:$0xff]
        %s626 = scalar_lea.vmem %s3, 8
        %v627 = vld [vmem:[%s626] sm:$0xf]
        %v629 = vsel %vm352, %v618, 0
        %v632 = vsel %vm352, %v619, 0
        %v635 = vsel %vm352, %v620, 0
        %v638 = vsel %vm352, %v621, 0
        %v641 = vsel %vm352, %v622, 0
        %v644 = vsel %vm352, %v623, 0
        %v647 = vsel %vm352, %v624, 0
        %v650 = vsel %vm352, %v625, 0
        %v653 = vsel %vm377, %v627, 0
        %655 = vmatprep.subr.mxu0 0.0
        %656 = vmatpush1.msra.mxu0 %v653
        %657 = vmatprep.subr.mxu0 0.0
        %658 = vmatpush1.msra.mxu0 0.0
        %659 = vmatprep.subr.mxu0 0.0
        %660 = vmatpush1.msra.mxu0 0.0
        %661 = vmatprep.subr.mxu0 0.0
        %662 = vmatpush1.msra.mxu0 0.0
        %663 = vmatprep.subr.mxu0 0.0
        %664 = vmatpush1.msra.mxu0 0.0
        %665 = vmatprep.subr.mxu0 0.0
        %666 = vmatpush1.msra.mxu0 0.0
        %667 = vmatprep.subr.mxu0 0.0
        %668 = vmatpush1.msra.mxu0 0.0
        %669 = vmatprep.subr.mxu0 0.0
        %670 = vmatpush1.msra.mxu0 0.0
        %671 = vmatprep.subr.mxu0 0.0
        %672 = vmatpush1.msra.mxu0 0.0
        %673 = vmatprep.subr.mxu0 0.0
        %674 = vmatpush1.msra.mxu0 0.0
        %675 = vmatprep.subr.mxu0 0.0
        %676 = vmatpush1.msra.mxu0 0.0
        %677 = vmatprep.subr.mxu0 0.0
        %678 = vmatpush1.msra.mxu0 0.0
        %679 = vmatprep.subr.mxu0 0.0
        %680 = vmatpush1.msra.mxu0 0.0
        %681 = vmatprep.subr.mxu0 0.0
        %682 = vmatpush1.msra.mxu0 0.0
        %683 = vmatprep.subr.mxu0 0.0
        %684 = vmatpush1.msra.mxu0 0.0
        %685 = vmatprep.subr.mxu0 0.0
        %686 = vmatpush1.msra.mxu0 0.0
        %687 = vmatprep.subr.mxu0 0.0
        %688 = vmatpush1.msra.mxu0 0.0
        %689 = vmatprep.subr.mxu0 0.0
        %690 = vmatpush1.msra.mxu0 0.0
        %691 = vmatprep.subr.mxu0 0.0
        %692 = vmatpush1.msra.mxu0 0.0
        %693 = vmatprep.subr.mxu0 0.0
        %694 = vmatpush1.msra.mxu0 0.0
        %695 = vmatprep.subr.mxu0 0.0
        %696 = vmatpush1.msra.mxu0 0.0
        %697 = vmatprep.subr.mxu0 0.0
        %698 = vmatpush1.msra.mxu0 0.0
        %699 = vmatprep.subr.mxu0 0.0
        %700 = vmatpush1.msra.mxu0 0.0
        %701 = vmatprep.subr.mxu0 0.0
        %702 = vmatpush1.msra.mxu0 0.0
        %703 = vmatprep.subr.mxu0 0.0
        %704 = vmatpush1.msra.mxu0 0.0
        %705 = vmatprep.subr.mxu0 0.0
        %706 = vmatpush1.msra.mxu0 0.0
        %707 = vmatprep.subr.mxu0 0.0
        %708 = vmatpush1.msra.mxu0 0.0
        %709 = vmatprep.subr.mxu0 0.0
        %710 = vmatpush1.msra.mxu0 0.0
        %711 = vmatprep.subr.mxu0 0.0
        %712 = vmatpush1.msra.mxu0 0.0
        %713 = vmatprep.subr.mxu0 0.0
        %714 = vmatpush1.msra.mxu0 0.0
        %715 = vmatprep.subr.mxu0 0.0
        %716 = vmatpush1.msra.mxu0 0.0
        %717 = vmatprep.subr.mxu0 0.0
        %718 = vmatpush1.msra.mxu0 0.0
        %719 = vmatprep.mubr.f32.mxu0 0.0
        %720 = vmatmul.mubr.f32.gmra.mrb[0].mxu0 %v629
        %v721 = vpop.f32.mrb[0].mxu0
        %v722 = vadd.f32 0.0, %v721
        %v723 = vpop.f32.mrb[0].mxu0
        %724 = vmatprep.mubr.f32.mxu0 0.0
        %725 = vmatmul.mubr.f32.gmra.mrb[0].mxu0 %v632
        %v726 = vpop.f32.mrb[0].mxu0
        %v727 = vadd.f32 0.0, %v726
        %v728 = vpop.f32.mrb[0].mxu0
        %729 = vmatprep.mubr.f32.mxu0 0.0
        %730 = vmatmul.mubr.f32.gmra.mrb[0].mxu0 %v635
        %v731 = vpop.f32.mrb[0].mxu0
        %v732 = vadd.f32 0.0, %v731
        %v733 = vpop.f32.mrb[0].mxu0
        %734 = vmatprep.mubr.f32.mxu0 0.0
        %735 = vmatmul.mubr.f32.gmra.mrb[0].mxu0 %v638
        %v736 = vpop.f32.mrb[0].mxu0
        %v737 = vadd.f32 0.0, %v736
        %v738 = vpop.f32.mrb[0].mxu0
        %739 = vmatprep.mubr.f32.mxu0 0.0
        %740 = vmatmul.mubr.f32.gmra.mrb[0].mxu0 %v641
        %v741 = vpop.f32.mrb[0].mxu0
        %v742 = vadd.f32 0.0, %v741
        %v743 = vpop.f32.mrb[0].mxu0
        %744 = vmatprep.mubr.f32.mxu0 0.0
        %745 = vmatmul.mubr.f32.gmra.mrb[0].mxu0 %v644
        %v746 = vpop.f32.mrb[0].mxu0
        %v747 = vadd.f32 0.0, %v746
        %v748 = vpop.f32.mrb[0].mxu0
        %749 = vmatprep.mubr.f32.mxu0 0.0
        %750 = vmatmul.mubr.f32.gmra.mrb[0].mxu0 %v647
        %v751 = vpop.f32.mrb[0].mxu0
        %v752 = vadd.f32 0.0, %v751
        %v753 = vpop.f32.mrb[0].mxu0
        %754 = vmatprep.mubr.f32.mxu0 0.0
        %755 = vmatmul.mubr.f32.gmra.mrb[0].mxu0 %v650
        %v756 = vpop.f32.mrb[0].mxu0
        %v757 = vadd.f32 0.0, %v756
        %v758 = vpop.f32.mrb[0].mxu0
        %759 = vdwg.mxu0
        %v760 = vadd.f32 %v580, %v722
        %v761 = vadd.f32 %v585, %v727
        %v762 = vadd.f32 %v590, %v732
        %v763 = vadd.f32 %v595, %v737
        %v764 = vadd.f32 %v600, %v742
        %v765 = vadd.f32 %v605, %v747
        %v766 = vadd.f32 %v610, %v752
        %v767 = vadd.f32 %v615, %v757
        %s768 = scalar_lea.vmem %s310, 16
        %v769 = vld [vmem:[%s768] sm:$0xff]
        %v770 = vld [vmem:[%s768 + $0x10] sm:$0xff]
        %v771 = vld [vmem:[%s768 + $0x20] sm:$0xff]
        %v772 = vld [vmem:[%s768 + $0x30] sm:$0xff]
        %v773 = vld [vmem:[%s768 + $0x40] sm:$0xff]
        %v774 = vld [vmem:[%s768 + $0x50] sm:$0xff]
        %v775 = vld [vmem:[%s768 + $0x60] sm:$0xff]
        %v776 = vld [vmem:[%s768 + $0x70] sm:$0xff]
        %s777 = scalar_lea.vmem %s3, 12
        %v778 = vld [vmem:[%s777] sm:$0xf]
        %v780 = vsel %vm352, %v769, 0
        %v783 = vsel %vm352, %v770, 0
        %v786 = vsel %vm352, %v771, 0
        %v789 = vsel %vm352, %v772, 0
        %v792 = vsel %vm352, %v773, 0
        %v795 = vsel %vm352, %v774, 0
        %v798 = vsel %vm352, %v775, 0
        %v801 = vsel %vm352, %v776, 0
        %v804 = vsel %vm377, %v778, 0
        %806 = vmatprep.subr.mxu0 0.0
        %807 = vmatpush1.msra.mxu0 %v804
        %808 = vmatprep.subr.mxu0 0.0
        %809 = vmatpush1.msra.mxu0 0.0
        %810 = vmatprep.subr.mxu0 0.0
        %811 = vmatpush1.msra.mxu0 0.0
        %812 = vmatprep.subr.mxu0 0.0
        %813 = vmatpush1.msra.mxu0 0.0
        %814 = vmatprep.subr.mxu0 0.0
        %815 = vmatpush1.msra.mxu0 0.0
        %816 = vmatprep.subr.mxu0 0.0
        %817 = vmatpush1.msra.mxu0 0.0
        %818 = vmatprep.subr.mxu0 0.0
        %819 = vmatpush1.msra.mxu0 0.0
        %820 = vmatprep.subr.mxu0 0.0
        %821 = vmatpush1.msra.mxu0 0.0
        %822 = vmatprep.subr.mxu0 0.0
        %823 = vmatpush1.msra.mxu0 0.0
        %824 = vmatprep.subr.mxu0 0.0
        %825 = vmatpush1.msra.mxu0 0.0
        %826 = vmatprep.subr.mxu0 0.0
        %827 = vmatpush1.msra.mxu0 0.0
        %828 = vmatprep.subr.mxu0 0.0
        %829 = vmatpush1.msra.mxu0 0.0
        %830 = vmatprep.subr.mxu0 0.0
        %831 = vmatpush1.msra.mxu0 0.0
        %832 = vmatprep.subr.mxu0 0.0
        %833 = vmatpush1.msra.mxu0 0.0
        %834 = vmatprep.subr.mxu0 0.0
        %835 = vmatpush1.msra.mxu0 0.0
        %836 = vmatprep.subr.mxu0 0.0
        %837 = vmatpush1.msra.mxu0 0.0
        %838 = vmatprep.subr.mxu0 0.0
        %839 = vmatpush1.msra.mxu0 0.0
        %840 = vmatprep.subr.mxu0 0.0
        %841 = vmatpush1.msra.mxu0 0.0
        %842 = vmatprep.subr.mxu0 0.0
        %843 = vmatpush1.msra.mxu0 0.0
        %844 = vmatprep.subr.mxu0 0.0
        %845 = vmatpush1.msra.mxu0 0.0
        %846 = vmatprep.subr.mxu0 0.0
        %847 = vmatpush1.msra.mxu0 0.0
        %848 = vmatprep.subr.mxu0 0.0
        %849 = vmatpush1.msra.mxu0 0.0
        %850 = vmatprep.subr.mxu0 0.0
        %851 = vmatpush1.msra.mxu0 0.0
        %852 = vmatprep.subr.mxu0 0.0
        %853 = vmatpush1.msra.mxu0 0.0
        %854 = vmatprep.subr.mxu0 0.0
        %855 = vmatpush1.msra.mxu0 0.0
        %856 = vmatprep.subr.mxu0 0.0
        %857 = vmatpush1.msra.mxu0 0.0
        %858 = vmatprep.subr.mxu0 0.0
        %859 = vmatpush1.msra.mxu0 0.0
        %860 = vmatprep.subr.mxu0 0.0
        %861 = vmatpush1.msra.mxu0 0.0
        %862 = vmatprep.subr.mxu0 0.0
        %863 = vmatpush1.msra.mxu0 0.0
        %864 = vmatprep.subr.mxu0 0.0
        %865 = vmatpush1.msra.mxu0 0.0
        %866 = vmatprep.subr.mxu0 0.0
        %867 = vmatpush1.msra.mxu0 0.0
        %868 = vmatprep.subr.mxu0 0.0
        %869 = vmatpush1.msra.mxu0 0.0
        %870 = vmatprep.mubr.f32.mxu0 0.0
        %871 = vmatmul.mubr.f32.gmra.mrb[0].mxu0 %v780
        %v872 = vpop.f32.mrb[0].mxu0
        %v873 = vadd.f32 0.0, %v872
        %v874 = vpop.f32.mrb[0].mxu0
        %875 = vmatprep.mubr.f32.mxu0 0.0
        %876 = vmatmul.mubr.f32.gmra.mrb[0].mxu0 %v783
        %v877 = vpop.f32.mrb[0].mxu0
        %v878 = vadd.f32 0.0, %v877
        %v879 = vpop.f32.mrb[0].mxu0
        %880 = vmatprep.mubr.f32.mxu0 0.0
        %881 = vmatmul.mubr.f32.gmra.mrb[0].mxu0 %v786
        %v882 = vpop.f32.mrb[0].mxu0
        %v883 = vadd.f32 0.0, %v882
        %v884 = vpop.f32.mrb[0].mxu0
        %885 = vmatprep.mubr.f32.mxu0 0.0
        %886 = vmatmul.mubr.f32.gmra.mrb[0].mxu0 %v789
        %v887 = vpop.f32.mrb[0].mxu0
        %v888 = vadd.f32 0.0, %v887
        %v889 = vpop.f32.mrb[0].mxu0
        %890 = vmatprep.mubr.f32.mxu0 0.0
        %891 = vmatmul.mubr.f32.gmra.mrb[0].mxu0 %v792
        %v892 = vpop.f32.mrb[0].mxu0
        %v893 = vadd.f32 0.0, %v892
        %v894 = vpop.f32.mrb[0].mxu0
        %895 = vmatprep.mubr.f32.mxu0 0.0
        %896 = vmatmul.mubr.f32.gmra.mrb[0].mxu0 %v795
        %v897 = vpop.f32.mrb[0].mxu0
        %v898 = vadd.f32 0.0, %v897
        %v899 = vpop.f32.mrb[0].mxu0
        %900 = vmatprep.mubr.f32.mxu0 0.0
        %901 = vmatmul.mubr.f32.gmra.mrb[0].mxu0 %v798
        %v902 = vpop.f32.mrb[0].mxu0
        %v903 = vadd.f32 0.0, %v902
        %v904 = vpop.f32.mrb[0].mxu0
        %905 = vmatprep.mubr.f32.mxu0 0.0
        %906 = vmatmul.mubr.f32.gmra.mrb[0].mxu0 %v801
        %v907 = vpop.f32.mrb[0].mxu0
        %v908 = vadd.f32 0.0, %v907
        %v909 = vpop.f32.mrb[0].mxu0
        %910 = vdwg.mxu0
        %v911 = vadd.f32 %v760, %v873
        %v912 = vadd.f32 %v761, %v878
        %v913 = vadd.f32 %v762, %v883
        %v914 = vadd.f32 %v763, %v888
        %v915 = vadd.f32 %v764, %v893
        %v916 = vadd.f32 %v765, %v898
        %v917 = vadd.f32 %v766, %v903
        %v918 = vadd.f32 %v767, %v908
        %v919 = vld [vmem:[%s768 + $0x1] sm:$0xff]
        %v920 = vld [vmem:[%s768 + $0x11] sm:$0xff]
        %v921 = vld [vmem:[%s768 + $0x21] sm:$0xff]
        %v922 = vld [vmem:[%s768 + $0x31] sm:$0xff]
        %v923 = vld [vmem:[%s768 + $0x41] sm:$0xff]
        %v924 = vld [vmem:[%s768 + $0x51] sm:$0xff]
        %v925 = vld [vmem:[%s768 + $0x61] sm:$0xff]
        %v926 = vld [vmem:[%s768 + $0x71] sm:$0xff]
        %s927 = scalar_lea.vmem %s3, 16
        %v928 = vld [vmem:[%s927] sm:$0xf]
        %v930 = vsel %vm352, %v919, 0
        %v933 = vsel %vm352, %v920, 0
        %v936 = vsel %vm352, %v921, 0
        %v939 = vsel %vm352, %v922, 0
        %v942 = vsel %vm352, %v923, 0
        %v945 = vsel %vm352, %v924, 0
        %v948 = vsel %vm352, %v925, 0
        %v951 = vsel %vm352, %v926, 0
        %v954 = vsel %vm377, %v928, 0
        %956 = vmatprep.subr.mxu0 0.0
        %957 = vmatpush1.msra.mxu0 %v954
        %958 = vmatprep.subr.mxu0 0.0
        %959 = vmatpush1.msra.mxu0 0.0
        %960 = vmatprep.subr.mxu0 0.0
        %961 = vmatpush1.msra.mxu0 0.0
        %962 = vmatprep.subr.mxu0 0.0
        %963 = vmatpush1.msra.mxu0 0.0
        %964 = vmatprep.subr.mxu0 0.0
        %965 = vmatpush1.msra.mxu0 0.0
        %966 = vmatprep.subr.mxu0 0.0
        %967 = vmatpush1.msra.mxu0 0.0
        %968 = vmatprep.subr.mxu0 0.0
        %969 = vmatpush1.msra.mxu0 0.0
        %970 = vmatprep.subr.mxu0 0.0
        %971 = vmatpush1.msra.mxu0 0.0
        %972 = vmatprep.subr.mxu0 0.0
        %973 = vmatpush1.msra.mxu0 0.0
        %974 = vmatprep.subr.mxu0 0.0
        %975 = vmatpush1.msra.mxu0 0.0
        %976 = vmatprep.subr.mxu0 0.0
        %977 = vmatpush1.msra.mxu0 0.0
        %978 = vmatprep.subr.mxu0 0.0
        %979 = vmatpush1.msra.mxu0 0.0
        %980 = vmatprep.subr.mxu0 0.0
        %981 = vmatpush1.msra.mxu0 0.0
        %982 = vmatprep.subr.mxu0 0.0
        %983 = vmatpush1.msra.mxu0 0.0
        %984 = vmatprep.subr.mxu0 0.0
        %985 = vmatpush1.msra.mxu0 0.0
        %986 = vmatprep.subr.mxu0 0.0
        %987 = vmatpush1.msra.mxu0 0.0
        %988 = vmatprep.subr.mxu0 0.0
        %989 = vmatpush1.msra.mxu0 0.0
        %990 = vmatprep.subr.mxu0 0.0
        %991 = vmatpush1.msra.mxu0 0.0
        %992 = vmatprep.subr.mxu0 0.0
        %993 = vmatpush1.msra.mxu0 0.0
        %994 = vmatprep.subr.mxu0 0.0
        %995 = vmatpush1.msra.mxu0 0.0
        %996 = vmatprep.subr.mxu0 0.0
        %997 = vmatpush1.msra.mxu0 0.0
        %998 = vmatprep.subr.mxu0 0.0
        %999 = vmatpush1.msra.mxu0 0.0
        %1000 = vmatprep.subr.mxu0 0.0
        %1001 = vmatpush1.msra.mxu0 0.0
        %1002 = vmatprep.subr.mxu0 0.0
        %1003 = vmatpush1.msra.mxu0 0.0
        %1004 = vmatprep.subr.mxu0 0.0
        %1005 = vmatpush1.msra.mxu0 0.0
        %1006 = vmatprep.subr.mxu0 0.0
        %1007 = vmatpush1.msra.mxu0 0.0
        %1008 = vmatprep.subr.mxu0 0.0
        %1009 = vmatpush1.msra.mxu0 0.0
        %1010 = vmatprep.subr.mxu0 0.0
        %1011 = vmatpush1.msra.mxu0 0.0
        %1012 = vmatprep.subr.mxu0 0.0
        %1013 = vmatpush1.msra.mxu0 0.0
        %1014 = vmatprep.subr.mxu0 0.0
        %1015 = vmatpush1.msra.mxu0 0.0
        %1016 = vmatprep.subr.mxu0 0.0
        %1017 = vmatpush1.msra.mxu0 0.0
        %1018 = vmatprep.subr.mxu0 0.0
        %1019 = vmatpush1.msra.mxu0 0.0
        %1020 = vmatprep.mubr.f32.mxu0 0.0
        %1021 = vmatmul.mubr.f32.gmra.mrb[0].mxu0 %v930
        %v1022 = vpop.f32.mrb[0].mxu0
        %v1023 = vadd.f32 0.0, %v1022
        %v1024 = vpop.f32.mrb[0].mxu0
        %1025 = vmatprep.mubr.f32.mxu0 0.0
        %1026 = vmatmul.mubr.f32.gmra.mrb[0].mxu0 %v933
        %v1027 = vpop.f32.mrb[0].mxu0
        %v1028 = vadd.f32 0.0, %v1027
        %v1029 = vpop.f32.mrb[0].mxu0
        %1030 = vmatprep.mubr.f32.mxu0 0.0
        %1031 = vmatmul.mubr.f32.gmra.mrb[0].mxu0 %v936
        %v1032 = vpop.f32.mrb[0].mxu0
        %v1033 = vadd.f32 0.0, %v1032
        %v1034 = vpop.f32.mrb[0].mxu0
        %1035 = vmatprep.mubr.f32.mxu0 0.0
        %1036 = vmatmul.mubr.f32.gmra.mrb[0].mxu0 %v939
        %v1037 = vpop.f32.mrb[0].mxu0
        %v1038 = vadd.f32 0.0, %v1037
        %v1039 = vpop.f32.mrb[0].mxu0
        %1040 = vmatprep.mubr.f32.mxu0 0.0
        %1041 = vmatmul.mubr.f32.gmra.mrb[0].mxu0 %v942
        %v1042 = vpop.f32.mrb[0].mxu0
        %v1043 = vadd.f32 0.0, %v1042
        %v1044 = vpop.f32.mrb[0].mxu0
        %1045 = vmatprep.mubr.f32.mxu0 0.0
        %1046 = vmatmul.mubr.f32.gmra.mrb[0].mxu0 %v945
        %v1047 = vpop.f32.mrb[0].mxu0
        %v1048 = vadd.f32 0.0, %v1047
        %v1049 = vpop.f32.mrb[0].mxu0
        %1050 = vmatprep.mubr.f32.mxu0 0.0
        %1051 = vmatmul.mubr.f32.gmra.mrb[0].mxu0 %v948
        %v1052 = vpop.f32.mrb[0].mxu0
        %v1053 = vadd.f32 0.0, %v1052
        %v1054 = vpop.f32.mrb[0].mxu0
        %1055 = vmatprep.mubr.f32.mxu0 0.0
        %1056 = vmatmul.mubr.f32.gmra.mrb[0].mxu0 %v951
        %v1057 = vpop.f32.mrb[0].mxu0
        %v1058 = vadd.f32 0.0, %v1057
        %v1059 = vpop.f32.mrb[0].mxu0
        %1060 = vdwg.mxu0
        %v1061 = vadd.f32 %v911, %v1023
        %v1062 = vadd.f32 %v912, %v1028
        %v1063 = vadd.f32 %v913, %v1033
        %v1064 = vadd.f32 %v914, %v1038
        %v1065 = vadd.f32 %v915, %v1043
        %v1066 = vadd.f32 %v916, %v1048
        %v1067 = vadd.f32 %v917, %v1053
        %v1068 = vadd.f32 %v918, %v1058
        %v1069 = vld [vmem:[%s768 + $0x2] sm:$0xff]
        %v1070 = vld [vmem:[%s768 + $0x12] sm:$0xff]
        %v1071 = vld [vmem:[%s768 + $0x22] sm:$0xff]
        %v1072 = vld [vmem:[%s768 + $0x32] sm:$0xff]
        %v1073 = vld [vmem:[%s768 + $0x42] sm:$0xff]
        %v1074 = vld [vmem:[%s768 + $0x52] sm:$0xff]
        %v1075 = vld [vmem:[%s768 + $0x62] sm:$0xff]
        %v1076 = vld [vmem:[%s768 + $0x72] sm:$0xff]
        %s1077 = scalar_lea.vmem %s3, 20
        %v1078 = vld [vmem:[%s1077] sm:$0xf]
        %v1080 = vsel %vm352, %v1069, 0
        %v1083 = vsel %vm352, %v1070, 0
        %v1086 = vsel %vm352, %v1071, 0
        %v1089 = vsel %vm352, %v1072, 0
        %v1092 = vsel %vm352, %v1073, 0
        %v1095 = vsel %vm352, %v1074, 0
        %v1098 = vsel %vm352, %v1075, 0
        %v1101 = vsel %vm352, %v1076, 0
        %v1104 = vsel %vm377, %v1078, 0
        %1106 = vmatprep.subr.mxu0 0.0
        %1107 = vmatpush1.msra.mxu0 %v1104
        %1108 = vmatprep.subr.mxu0 0.0
        %1109 = vmatpush1.msra.mxu0 0.0
        %1110 = vmatprep.subr.mxu0 0.0
        %1111 = vmatpush1.msra.mxu0 0.0
        %1112 = vmatprep.subr.mxu0 0.0
        %1113 = vmatpush1.msra.mxu0 0.0
        %1114 = vmatprep.subr.mxu0 0.0
        %1115 = vmatpush1.msra.mxu0 0.0
        %1116 = vmatprep.subr.mxu0 0.0
        %1117 = vmatpush1.msra.mxu0 0.0
        %1118 = vmatprep.subr.mxu0 0.0
        %1119 = vmatpush1.msra.mxu0 0.0
        %1120 = vmatprep.subr.mxu0 0.0
        %1121 = vmatpush1.msra.mxu0 0.0
        %1122 = vmatprep.subr.mxu0 0.0
        %1123 = vmatpush1.msra.mxu0 0.0
        %1124 = vmatprep.subr.mxu0 0.0
        %1125 = vmatpush1.msra.mxu0 0.0
        %1126 = vmatprep.subr.mxu0 0.0
        %1127 = vmatpush1.msra.mxu0 0.0
        %1128 = vmatprep.subr.mxu0 0.0
        %1129 = vmatpush1.msra.mxu0 0.0
        %1130 = vmatprep.subr.mxu0 0.0
        %1131 = vmatpush1.msra.mxu0 0.0
        %1132 = vmatprep.subr.mxu0 0.0
        %1133 = vmatpush1.msra.mxu0 0.0
        %1134 = vmatprep.subr.mxu0 0.0
        %1135 = vmatpush1.msra.mxu0 0.0
        %1136 = vmatprep.subr.mxu0 0.0
        %1137 = vmatpush1.msra.mxu0 0.0
        %1138 = vmatprep.subr.mxu0 0.0
        %1139 = vmatpush1.msra.mxu0 0.0
        %1140 = vmatprep.subr.mxu0 0.0
        %1141 = vmatpush1.msra.mxu0 0.0
        %1142 = vmatprep.subr.mxu0 0.0
        %1143 = vmatpush1.msra.mxu0 0.0
        %1144 = vmatprep.subr.mxu0 0.0
        %1145 = vmatpush1.msra.mxu0 0.0
        %1146 = vmatprep.subr.mxu0 0.0
        %1147 = vmatpush1.msra.mxu0 0.0
        %1148 = vmatprep.subr.mxu0 0.0
        %1149 = vmatpush1.msra.mxu0 0.0
        %1150 = vmatprep.subr.mxu0 0.0
        %1151 = vmatpush1.msra.mxu0 0.0
        %1152 = vmatprep.subr.mxu0 0.0
        %1153 = vmatpush1.msra.mxu0 0.0
        %1154 = vmatprep.subr.mxu0 0.0
        %1155 = vmatpush1.msra.mxu0 0.0
        %1156 = vmatprep.subr.mxu0 0.0
        %1157 = vmatpush1.msra.mxu0 0.0
        %1158 = vmatprep.subr.mxu0 0.0
        %1159 = vmatpush1.msra.mxu0 0.0
        %1160 = vmatprep.subr.mxu0 0.0
        %1161 = vmatpush1.msra.mxu0 0.0
        %1162 = vmatprep.subr.mxu0 0.0
        %1163 = vmatpush1.msra.mxu0 0.0
        %1164 = vmatprep.subr.mxu0 0.0
        %1165 = vmatpush1.msra.mxu0 0.0
        %1166 = vmatprep.subr.mxu0 0.0
        %1167 = vmatpush1.msra.mxu0 0.0
        %1168 = vmatprep.subr.mxu0 0.0
        %1169 = vmatpush1.msra.mxu0 0.0
        %1170 = vmatprep.mubr.f32.mxu0 0.0
        %1171 = vmatmul.mubr.f32.gmra.mrb[0].mxu0 %v1080
        %v1172 = vpop.f32.mrb[0].mxu0
        %v1173 = vadd.f32 0.0, %v1172
        %v1174 = vpop.f32.mrb[0].mxu0
        %1175 = vmatprep.mubr.f32.mxu0 0.0
        %1176 = vmatmul.mubr.f32.gmra.mrb[0].mxu0 %v1083
        %v1177 = vpop.f32.mrb[0].mxu0
        %v1178 = vadd.f32 0.0, %v1177
        %v1179 = vpop.f32.mrb[0].mxu0
        %1180 = vmatprep.mubr.f32.mxu0 0.0
        %1181 = vmatmul.mubr.f32.gmra.mrb[0].mxu0 %v1086
        %v1182 = vpop.f32.mrb[0].mxu0
        %v1183 = vadd.f32 0.0, %v1182
        %v1184 = vpop.f32.mrb[0].mxu0
        %1185 = vmatprep.mubr.f32.mxu0 0.0
        %1186 = vmatmul.mubr.f32.gmra.mrb[0].mxu0 %v1089
        %v1187 = vpop.f32.mrb[0].mxu0
        %v1188 = vadd.f32 0.0, %v1187
        %v1189 = vpop.f32.mrb[0].mxu0
        %1190 = vmatprep.mubr.f32.mxu0 0.0
        %1191 = vmatmul.mubr.f32.gmra.mrb[0].mxu0 %v1092
        %v1192 = vpop.f32.mrb[0].mxu0
        %v1193 = vadd.f32 0.0, %v1192
        %v1194 = vpop.f32.mrb[0].mxu0
        %1195 = vmatprep.mubr.f32.mxu0 0.0
        %1196 = vmatmul.mubr.f32.gmra.mrb[0].mxu0 %v1095
        %v1197 = vpop.f32.mrb[0].mxu0
        %v1198 = vadd.f32 0.0, %v1197
        %v1199 = vpop.f32.mrb[0].mxu0
        %1200 = vmatprep.mubr.f32.mxu0 0.0
        %1201 = vmatmul.mubr.f32.gmra.mrb[0].mxu0 %v1098
        %v1202 = vpop.f32.mrb[0].mxu0
        %v1203 = vadd.f32 0.0, %v1202
        %v1204 = vpop.f32.mrb[0].mxu0
        %1205 = vmatprep.mubr.f32.mxu0 0.0
        %1206 = vmatmul.mubr.f32.gmra.mrb[0].mxu0 %v1101
        %v1207 = vpop.f32.mrb[0].mxu0
        %v1208 = vadd.f32 0.0, %v1207
        %v1209 = vpop.f32.mrb[0].mxu0
        %1210 = vdwg.mxu0
        %v1211 = vadd.f32 %v1061, %v1173
        %v1212 = vadd.f32 %v1062, %v1178
        %v1213 = vadd.f32 %v1063, %v1183
        %v1214 = vadd.f32 %v1064, %v1188
        %v1215 = vadd.f32 %v1065, %v1193
        %v1216 = vadd.f32 %v1066, %v1198
        %v1217 = vadd.f32 %v1067, %v1203
        %v1218 = vadd.f32 %v1068, %v1208
        %s1219 = scalar_lea.vmem %s310, 32
        %v1220 = vld [vmem:[%s1219] sm:$0xff]
        %v1221 = vld [vmem:[%s1219 + $0x10] sm:$0xff]
        %v1222 = vld [vmem:[%s1219 + $0x20] sm:$0xff]
        %v1223 = vld [vmem:[%s1219 + $0x30] sm:$0xff]
        %v1224 = vld [vmem:[%s1219 + $0x40] sm:$0xff]
        %v1225 = vld [vmem:[%s1219 + $0x50] sm:$0xff]
        %v1226 = vld [vmem:[%s1219 + $0x60] sm:$0xff]
        %v1227 = vld [vmem:[%s1219 + $0x70] sm:$0xff]
        %s1228 = scalar_lea.vmem %s3, 24
        %v1229 = vld [vmem:[%s1228] sm:$0xf]
        %v1231 = vsel %vm352, %v1220, 0
        %v1234 = vsel %vm352, %v1221, 0
        %v1237 = vsel %vm352, %v1222, 0
        %v1240 = vsel %vm352, %v1223, 0
        %v1243 = vsel %vm352, %v1224, 0
        %v1246 = vsel %vm352, %v1225, 0
        %v1249 = vsel %vm352, %v1226, 0
        %v1252 = vsel %vm352, %v1227, 0
        %v1255 = vsel %vm377, %v1229, 0
        %1257 = vmatprep.subr.mxu0 0.0
        %1258 = vmatpush1.msra.mxu0 %v1255
        %1259 = vmatprep.subr.mxu0 0.0
        %1260 = vmatpush1.msra.mxu0 0.0
        %1261 = vmatprep.subr.mxu0 0.0
        %1262 = vmatpush1.msra.mxu0 0.0
        %1263 = vmatprep.subr.mxu0 0.0
        %1264 = vmatpush1.msra.mxu0 0.0
        %1265 = vmatprep.subr.mxu0 0.0
        %1266 = vmatpush1.msra.mxu0 0.0
        %1267 = vmatprep.subr.mxu0 0.0
        %1268 = vmatpush1.msra.mxu0 0.0
        %1269 = vmatprep.subr.mxu0 0.0
        %1270 = vmatpush1.msra.mxu0 0.0
        %1271 = vmatprep.subr.mxu0 0.0
        %1272 = vmatpush1.msra.mxu0 0.0
        %1273 = vmatprep.subr.mxu0 0.0
        %1274 = vmatpush1.msra.mxu0 0.0
        %1275 = vmatprep.subr.mxu0 0.0
        %1276 = vmatpush1.msra.mxu0 0.0
        %1277 = vmatprep.subr.mxu0 0.0
        %1278 = vmatpush1.msra.mxu0 0.0
        %1279 = vmatprep.subr.mxu0 0.0
        %1280 = vmatpush1.msra.mxu0 0.0
        %1281 = vmatprep.subr.mxu0 0.0
        %1282 = vmatpush1.msra.mxu0 0.0
        %1283 = vmatprep.subr.mxu0 0.0
        %1284 = vmatpush1.msra.mxu0 0.0
        %1285 = vmatprep.subr.mxu0 0.0
        %1286 = vmatpush1.msra.mxu0 0.0
        %1287 = vmatprep.subr.mxu0 0.0
        %1288 = vmatpush1.msra.mxu0 0.0
        %1289 = vmatprep.subr.mxu0 0.0
        %1290 = vmatpush1.msra.mxu0 0.0
        %1291 = vmatprep.subr.mxu0 0.0
        %1292 = vmatpush1.msra.mxu0 0.0
        %1293 = vmatprep.subr.mxu0 0.0
        %1294 = vmatpush1.msra.mxu0 0.0
        %1295 = vmatprep.subr.mxu0 0.0
        %1296 = vmatpush1.msra.mxu0 0.0
        %1297 = vmatprep.subr.mxu0 0.0
        %1298 = vmatpush1.msra.mxu0 0.0
        %1299 = vmatprep.subr.mxu0 0.0
        %1300 = vmatpush1.msra.mxu0 0.0
        %1301 = vmatprep.subr.mxu0 0.0
        %1302 = vmatpush1.msra.mxu0 0.0
        %1303 = vmatprep.subr.mxu0 0.0
        %1304 = vmatpush1.msra.mxu0 0.0
        %1305 = vmatprep.subr.mxu0 0.0
        %1306 = vmatpush1.msra.mxu0 0.0
        %1307 = vmatprep.subr.mxu0 0.0
        %1308 = vmatpush1.msra.mxu0 0.0
        %1309 = vmatprep.subr.mxu0 0.0
        %1310 = vmatpush1.msra.mxu0 0.0
        %1311 = vmatprep.subr.mxu0 0.0
        %1312 = vmatpush1.msra.mxu0 0.0
        %1313 = vmatprep.subr.mxu0 0.0
        %1314 = vmatpush1.msra.mxu0 0.0
        %1315 = vmatprep.subr.mxu0 0.0
        %1316 = vmatpush1.msra.mxu0 0.0
        %1317 = vmatprep.subr.mxu0 0.0
        %1318 = vmatpush1.msra.mxu0 0.0
        %1319 = vmatprep.subr.mxu0 0.0
        %1320 = vmatpush1.msra.mxu0 0.0
        %1321 = vmatprep.mubr.f32.mxu0 0.0
        %1322 = vmatmul.mubr.f32.gmra.mrb[0].mxu0 %v1231
        %v1323 = vpop.f32.mrb[0].mxu0
        %v1324 = vadd.f32 0.0, %v1323
        %v1325 = vpop.f32.mrb[0].mxu0
        %1326 = vmatprep.mubr.f32.mxu0 0.0
        %1327 = vmatmul.mubr.f32.gmra.mrb[0].mxu0 %v1234
        %v1328 = vpop.f32.mrb[0].mxu0
        %v1329 = vadd.f32 0.0, %v1328
        %v1330 = vpop.f32.mrb[0].mxu0
        %1331 = vmatprep.mubr.f32.mxu0 0.0
        %1332 = vmatmul.mubr.f32.gmra.mrb[0].mxu0 %v1237
        %v1333 = vpop.f32.mrb[0].mxu0
        %v1334 = vadd.f32 0.0, %v1333
        %v1335 = vpop.f32.mrb[0].mxu0
        %1336 = vmatprep.mubr.f32.mxu0 0.0
        %1337 = vmatmul.mubr.f32.gmra.mrb[0].mxu0 %v1240
        %v1338 = vpop.f32.mrb[0].mxu0
        %v1339 = vadd.f32 0.0, %v1338
        %v1340 = vpop.f32.mrb[0].mxu0
        %1341 = vmatprep.mubr.f32.mxu0 0.0
        %1342 = vmatmul.mubr.f32.gmra.mrb[0].mxu0 %v1243
        %v1343 = vpop.f32.mrb[0].mxu0
        %v1344 = vadd.f32 0.0, %v1343
        %v1345 = vpop.f32.mrb[0].mxu0
        %1346 = vmatprep.mubr.f32.mxu0 0.0
        %1347 = vmatmul.mubr.f32.gmra.mrb[0].mxu0 %v1246
        %v1348 = vpop.f32.mrb[0].mxu0
        %v1349 = vadd.f32 0.0, %v1348
        %v1350 = vpop.f32.mrb[0].mxu0
        %1351 = vmatprep.mubr.f32.mxu0 0.0
        %1352 = vmatmul.mubr.f32.gmra.mrb[0].mxu0 %v1249
        %v1353 = vpop.f32.mrb[0].mxu0
        %v1354 = vadd.f32 0.0, %v1353
        %v1355 = vpop.f32.mrb[0].mxu0
        %1356 = vmatprep.mubr.f32.mxu0 0.0
        %1357 = vmatmul.mubr.f32.gmra.mrb[0].mxu0 %v1252
        %v1358 = vpop.f32.mrb[0].mxu0
        %v1359 = vadd.f32 0.0, %v1358
        %v1360 = vpop.f32.mrb[0].mxu0
        %1361 = vdwg.mxu0
        %v1362 = vadd.f32 %v1211, %v1324
        %v1363 = vadd.f32 %v1212, %v1329
        %v1364 = vadd.f32 %v1213, %v1334
        %v1365 = vadd.f32 %v1214, %v1339
        %v1366 = vadd.f32 %v1215, %v1344
        %v1367 = vadd.f32 %v1216, %v1349
        %v1368 = vadd.f32 %v1217, %v1354
        %v1369 = vadd.f32 %v1218, %v1359
        %v1370 = vld [vmem:[%s1219 + $0x1] sm:$0xff]
        %v1371 = vld [vmem:[%s1219 + $0x11] sm:$0xff]
        %v1372 = vld [vmem:[%s1219 + $0x21] sm:$0xff]
        %v1373 = vld [vmem:[%s1219 + $0x31] sm:$0xff]
        %v1374 = vld [vmem:[%s1219 + $0x41] sm:$0xff]
        %v1375 = vld [vmem:[%s1219 + $0x51] sm:$0xff]
        %v1376 = vld [vmem:[%s1219 + $0x61] sm:$0xff]
        %v1377 = vld [vmem:[%s1219 + $0x71] sm:$0xff]
        %s1378 = scalar_lea.vmem %s3, 28
        %v1379 = vld [vmem:[%s1378] sm:$0xf]
        %v1381 = vsel %vm352, %v1370, 0
        %v1384 = vsel %vm352, %v1371, 0
        %v1387 = vsel %vm352, %v1372, 0
        %v1390 = vsel %vm352, %v1373, 0
        %v1393 = vsel %vm352, %v1374, 0
        %v1396 = vsel %vm352, %v1375, 0
        %v1399 = vsel %vm352, %v1376, 0
        %v1402 = vsel %vm352, %v1377, 0
        %v1405 = vsel %vm377, %v1379, 0
        %1407 = vmatprep.subr.mxu0 0.0
        %1408 = vmatpush1.msra.mxu0 %v1405
        %1409 = vmatprep.subr.mxu0 0.0
        %1410 = vmatpush1.msra.mxu0 0.0
        %1411 = vmatprep.subr.mxu0 0.0
        %1412 = vmatpush1.msra.mxu0 0.0
        %1413 = vmatprep.subr.mxu0 0.0
        %1414 = vmatpush1.msra.mxu0 0.0
        %1415 = vmatprep.subr.mxu0 0.0
        %1416 = vmatpush1.msra.mxu0 0.0
        %1417 = vmatprep.subr.mxu0 0.0
        %1418 = vmatpush1.msra.mxu0 0.0
        %1419 = vmatprep.subr.mxu0 0.0
        %1420 = vmatpush1.msra.mxu0 0.0
        %1421 = vmatprep.subr.mxu0 0.0
        %1422 = vmatpush1.msra.mxu0 0.0
        %1423 = vmatprep.subr.mxu0 0.0
        %1424 = vmatpush1.msra.mxu0 0.0
        %1425 = vmatprep.subr.mxu0 0.0
        %1426 = vmatpush1.msra.mxu0 0.0
        %1427 = vmatprep.subr.mxu0 0.0
        %1428 = vmatpush1.msra.mxu0 0.0
        %1429 = vmatprep.subr.mxu0 0.0
        %1430 = vmatpush1.msra.mxu0 0.0
        %1431 = vmatprep.subr.mxu0 0.0
        %1432 = vmatpush1.msra.mxu0 0.0
        %1433 = vmatprep.subr.mxu0 0.0
        %1434 = vmatpush1.msra.mxu0 0.0
        %1435 = vmatprep.subr.mxu0 0.0
        %1436 = vmatpush1.msra.mxu0 0.0
        %1437 = vmatprep.subr.mxu0 0.0
        %1438 = vmatpush1.msra.mxu0 0.0
        %1439 = vmatprep.subr.mxu0 0.0
        %1440 = vmatpush1.msra.mxu0 0.0
        %1441 = vmatprep.subr.mxu0 0.0
        %1442 = vmatpush1.msra.mxu0 0.0
        %1443 = vmatprep.subr.mxu0 0.0
        %1444 = vmatpush1.msra.mxu0 0.0
        %1445 = vmatprep.subr.mxu0 0.0
        %1446 = vmatpush1.msra.mxu0 0.0
        %1447 = vmatprep.subr.mxu0 0.0
        %1448 = vmatpush1.msra.mxu0 0.0
        %1449 = vmatprep.subr.mxu0 0.0
        %1450 = vmatpush1.msra.mxu0 0.0
        %1451 = vmatprep.subr.mxu0 0.0
        %1452 = vmatpush1.msra.mxu0 0.0
        %1453 = vmatprep.subr.mxu0 0.0
        %1454 = vmatpush1.msra.mxu0 0.0
        %1455 = vmatprep.subr.mxu0 0.0
        %1456 = vmatpush1.msra.mxu0 0.0
        %1457 = vmatprep.subr.mxu0 0.0
        %1458 = vmatpush1.msra.mxu0 0.0
        %1459 = vmatprep.subr.mxu0 0.0
        %1460 = vmatpush1.msra.mxu0 0.0
        %1461 = vmatprep.subr.mxu0 0.0
        %1462 = vmatpush1.msra.mxu0 0.0
        %1463 = vmatprep.subr.mxu0 0.0
        %1464 = vmatpush1.msra.mxu0 0.0
        %1465 = vmatprep.subr.mxu0 0.0
        %1466 = vmatpush1.msra.mxu0 0.0
        %1467 = vmatprep.subr.mxu0 0.0
        %1468 = vmatpush1.msra.mxu0 0.0
        %1469 = vmatprep.subr.mxu0 0.0
        %1470 = vmatpush1.msra.mxu0 0.0
        %1471 = vmatprep.mubr.f32.mxu0 0.0
        %1472 = vmatmul.mubr.f32.gmra.mrb[0].mxu0 %v1381
        %v1473 = vpop.f32.mrb[0].mxu0
        %v1474 = vadd.f32 0.0, %v1473
        %v1475 = vpop.f32.mrb[0].mxu0
        %1476 = vmatprep.mubr.f32.mxu0 0.0
        %1477 = vmatmul.mubr.f32.gmra.mrb[0].mxu0 %v1384
        %v1478 = vpop.f32.mrb[0].mxu0
        %v1479 = vadd.f32 0.0, %v1478
        %v1480 = vpop.f32.mrb[0].mxu0
        %1481 = vmatprep.mubr.f32.mxu0 0.0
        %1482 = vmatmul.mubr.f32.gmra.mrb[0].mxu0 %v1387
        %v1483 = vpop.f32.mrb[0].mxu0
        %v1484 = vadd.f32 0.0, %v1483
        %v1485 = vpop.f32.mrb[0].mxu0
        %1486 = vmatprep.mubr.f32.mxu0 0.0
        %1487 = vmatmul.mubr.f32.gmra.mrb[0].mxu0 %v1390
        %v1488 = vpop.f32.mrb[0].mxu0
        %v1489 = vadd.f32 0.0, %v1488
        %v1490 = vpop.f32.mrb[0].mxu0
        %1491 = vmatprep.mubr.f32.mxu0 0.0
        %1492 = vmatmul.mubr.f32.gmra.mrb[0].mxu0 %v1393
        %v1493 = vpop.f32.mrb[0].mxu0
        %v1494 = vadd.f32 0.0, %v1493
        %v1495 = vpop.f32.mrb[0].mxu0
        %1496 = vmatprep.mubr.f32.mxu0 0.0
        %1497 = vmatmul.mubr.f32.gmra.mrb[0].mxu0 %v1396
        %v1498 = vpop.f32.mrb[0].mxu0
        %v1499 = vadd.f32 0.0, %v1498
        %v1500 = vpop.f32.mrb[0].mxu0
        %1501 = vmatprep.mubr.f32.mxu0 0.0
        %1502 = vmatmul.mubr.f32.gmra.mrb[0].mxu0 %v1399
        %v1503 = vpop.f32.mrb[0].mxu0
        %v1504 = vadd.f32 0.0, %v1503
        %v1505 = vpop.f32.mrb[0].mxu0
        %1506 = vmatprep.mubr.f32.mxu0 0.0
        %1507 = vmatmul.mubr.f32.gmra.mrb[0].mxu0 %v1402
        %v1508 = vpop.f32.mrb[0].mxu0
        %v1509 = vadd.f32 0.0, %v1508
        %v1510 = vpop.f32.mrb[0].mxu0
        %1511 = vdwg.mxu0
        %v1512 = vadd.f32 %v1362, %v1474
        %v1513 = vadd.f32 %v1363, %v1479
        %v1514 = vadd.f32 %v1364, %v1484
        %v1515 = vadd.f32 %v1365, %v1489
        %v1516 = vadd.f32 %v1366, %v1494
        %v1517 = vadd.f32 %v1367, %v1499
        %v1518 = vadd.f32 %v1368, %v1504
        %v1519 = vadd.f32 %v1369, %v1509
        %v1520 = vld [vmem:[%s1219 + $0x2] sm:$0xff]
        %v1521 = vld [vmem:[%s1219 + $0x12] sm:$0xff]
        %v1522 = vld [vmem:[%s1219 + $0x22] sm:$0xff]
        %v1523 = vld [vmem:[%s1219 + $0x32] sm:$0xff]
        %v1524 = vld [vmem:[%s1219 + $0x42] sm:$0xff]
        %v1525 = vld [vmem:[%s1219 + $0x52] sm:$0xff]
        %v1526 = vld [vmem:[%s1219 + $0x62] sm:$0xff]
        %v1527 = vld [vmem:[%s1219 + $0x72] sm:$0xff]
        %s1528 = scalar_lea.vmem %s3, 32
        %v1529 = vld [vmem:[%s1528] sm:$0xf]
        %v1531 = vsel %vm352, %v1520, 0
        %v1534 = vsel %vm352, %v1521, 0
        %v1537 = vsel %vm352, %v1522, 0
        %v1540 = vsel %vm352, %v1523, 0
        %v1543 = vsel %vm352, %v1524, 0
        %v1546 = vsel %vm352, %v1525, 0
        %v1549 = vsel %vm352, %v1526, 0
        %v1552 = vsel %vm352, %v1527, 0
        %v1555 = vsel %vm377, %v1529, 0
        %1557 = vmatprep.subr.mxu0 0.0
        %1558 = vmatpush1.msra.mxu0 %v1555
        %1559 = vmatprep.subr.mxu0 0.0
        %1560 = vmatpush1.msra.mxu0 0.0
        %1561 = vmatprep.subr.mxu0 0.0
        %1562 = vmatpush1.msra.mxu0 0.0
        %1563 = vmatprep.subr.mxu0 0.0
        %1564 = vmatpush1.msra.mxu0 0.0
        %1565 = vmatprep.subr.mxu0 0.0
        %1566 = vmatpush1.msra.mxu0 0.0
        %1567 = vmatprep.subr.mxu0 0.0
        %1568 = vmatpush1.msra.mxu0 0.0
        %1569 = vmatprep.subr.mxu0 0.0
        %1570 = vmatpush1.msra.mxu0 0.0
        %1571 = vmatprep.subr.mxu0 0.0
        %1572 = vmatpush1.msra.mxu0 0.0
        %1573 = vmatprep.subr.mxu0 0.0
        %1574 = vmatpush1.msra.mxu0 0.0
        %1575 = vmatprep.subr.mxu0 0.0
        %1576 = vmatpush1.msra.mxu0 0.0
        %1577 = vmatprep.subr.mxu0 0.0
        %1578 = vmatpush1.msra.mxu0 0.0
        %1579 = vmatprep.subr.mxu0 0.0
        %1580 = vmatpush1.msra.mxu0 0.0
        %1581 = vmatprep.subr.mxu0 0.0
        %1582 = vmatpush1.msra.mxu0 0.0
        %1583 = vmatprep.subr.mxu0 0.0
        %1584 = vmatpush1.msra.mxu0 0.0
        %1585 = vmatprep.subr.mxu0 0.0
        %1586 = vmatpush1.msra.mxu0 0.0
        %1587 = vmatprep.subr.mxu0 0.0
        %1588 = vmatpush1.msra.mxu0 0.0
        %1589 = vmatprep.subr.mxu0 0.0
        %1590 = vmatpush1.msra.mxu0 0.0
        %1591 = vmatprep.subr.mxu0 0.0
        %1592 = vmatpush1.msra.mxu0 0.0
        %1593 = vmatprep.subr.mxu0 0.0
        %1594 = vmatpush1.msra.mxu0 0.0
        %1595 = vmatprep.subr.mxu0 0.0
        %1596 = vmatpush1.msra.mxu0 0.0
        %1597 = vmatprep.subr.mxu0 0.0
        %1598 = vmatpush1.msra.mxu0 0.0
        %1599 = vmatprep.subr.mxu0 0.0
        %1600 = vmatpush1.msra.mxu0 0.0
        %1601 = vmatprep.subr.mxu0 0.0
        %1602 = vmatpush1.msra.mxu0 0.0
        %1603 = vmatprep.subr.mxu0 0.0
        %1604 = vmatpush1.msra.mxu0 0.0
        %1605 = vmatprep.subr.mxu0 0.0
        %1606 = vmatpush1.msra.mxu0 0.0
        %1607 = vmatprep.subr.mxu0 0.0
        %1608 = vmatpush1.msra.mxu0 0.0
        %1609 = vmatprep.subr.mxu0 0.0
        %1610 = vmatpush1.msra.mxu0 0.0
        %1611 = vmatprep.subr.mxu0 0.0
        %1612 = vmatpush1.msra.mxu0 0.0
        %1613 = vmatprep.subr.mxu0 0.0
        %1614 = vmatpush1.msra.mxu0 0.0
        %1615 = vmatprep.subr.mxu0 0.0
        %1616 = vmatpush1.msra.mxu0 0.0
        %1617 = vmatprep.subr.mxu0 0.0
        %1618 = vmatpush1.msra.mxu0 0.0
        %1619 = vmatprep.subr.mxu0 0.0
        %1620 = vmatpush1.msra.mxu0 0.0
        %1621 = vmatprep.mubr.f32.mxu0 0.0
        %1622 = vmatmul.mubr.f32.gmra.mrb[0].mxu0 %v1531
        %v1623 = vpop.f32.mrb[0].mxu0
        %v1624 = vadd.f32 0.0, %v1623
        %v1625 = vpop.f32.mrb[0].mxu0
        %1626 = vmatprep.mubr.f32.mxu0 0.0
        %1627 = vmatmul.mubr.f32.gmra.mrb[0].mxu0 %v1534
        %v1628 = vpop.f32.mrb[0].mxu0
        %v1629 = vadd.f32 0.0, %v1628
        %v1630 = vpop.f32.mrb[0].mxu0
        %1631 = vmatprep.mubr.f32.mxu0 0.0
        %1632 = vmatmul.mubr.f32.gmra.mrb[0].mxu0 %v1537
        %v1633 = vpop.f32.mrb[0].mxu0
        %v1634 = vadd.f32 0.0, %v1633
        %v1635 = vpop.f32.mrb[0].mxu0
        %1636 = vmatprep.mubr.f32.mxu0 0.0
        %1637 = vmatmul.mubr.f32.gmra.mrb[0].mxu0 %v1540
        %v1638 = vpop.f32.mrb[0].mxu0
        %v1639 = vadd.f32 0.0, %v1638
        %v1640 = vpop.f32.mrb[0].mxu0
        %1641 = vmatprep.mubr.f32.mxu0 0.0
        %1642 = vmatmul.mubr.f32.gmra.mrb[0].mxu0 %v1543
        %v1643 = vpop.f32.mrb[0].mxu0
        %v1644 = vadd.f32 0.0, %v1643
        %v1645 = vpop.f32.mrb[0].mxu0
        %1646 = vmatprep.mubr.f32.mxu0 0.0
        %1647 = vmatmul.mubr.f32.gmra.mrb[0].mxu0 %v1546
        %v1648 = vpop.f32.mrb[0].mxu0
        %v1649 = vadd.f32 0.0, %v1648
        %v1650 = vpop.f32.mrb[0].mxu0
        %1651 = vmatprep.mubr.f32.mxu0 0.0
        %1652 = vmatmul.mubr.f32.gmra.mrb[0].mxu0 %v1549
        %v1653 = vpop.f32.mrb[0].mxu0
        %v1654 = vadd.f32 0.0, %v1653
        %v1655 = vpop.f32.mrb[0].mxu0
        %1656 = vmatprep.mubr.f32.mxu0 0.0
        %1657 = vmatmul.mubr.f32.gmra.mrb[0].mxu0 %v1552
        %v1658 = vpop.f32.mrb[0].mxu0
        %v1659 = vadd.f32 0.0, %v1658
        %v1660 = vpop.f32.mrb[0].mxu0
        %1661 = vdwg.mxu0
        %v1662 = vadd.f32 %v1512, %v1624
        %v1663 = vadd.f32 %v1513, %v1629
        %v1664 = vadd.f32 %v1514, %v1634
        %v1665 = vadd.f32 %v1515, %v1639
        %v1666 = vadd.f32 %v1516, %v1644
        %v1667 = vadd.f32 %v1517, %v1649
        %v1668 = vadd.f32 %v1518, %v1654
        %v1669 = vadd.f32 %v1519, %v1659
        %v1670 = vld [vmem:[%s320] sm:$0xff]
        %v1671 = vld [vmem:[%s320 + $0x10] sm:$0xff]
        %v1672 = vld [vmem:[%s320 + $0x20] sm:$0xff]
        %v1673 = vld [vmem:[%s320 + $0x30] sm:$0xff]
        %v1674 = vld [vmem:[%s320 + $0x40] sm:$0xff]
        %v1675 = vld [vmem:[%s320 + $0x50] sm:$0xff]
        %v1676 = vld [vmem:[%s320 + $0x60] sm:$0xff]
        %v1677 = vld [vmem:[%s320 + $0x70] sm:$0xff]
        %s1678 = scalar_lea.vmem %s3, 36
        %v1679 = vld [vmem:[%s1678] sm:$0xf]
        %v1681 = vsel %vm352, %v1670, 0
        %v1684 = vsel %vm352, %v1671, 0
        %v1687 = vsel %vm352, %v1672, 0
        %v1690 = vsel %vm352, %v1673, 0
        %v1693 = vsel %vm352, %v1674, 0
        %v1696 = vsel %vm352, %v1675, 0
        %v1699 = vsel %vm352, %v1676, 0
        %v1702 = vsel %vm352, %v1677, 0
        %v1705 = vsel %vm377, %v1679, 0
        %1707 = vmatprep.subr.mxu0 0.0
        %1708 = vmatpush1.msra.mxu0 %v1705
        %1709 = vmatprep.subr.mxu0 0.0
        %1710 = vmatpush1.msra.mxu0 0.0
        %1711 = vmatprep.subr.mxu0 0.0
        %1712 = vmatpush1.msra.mxu0 0.0
        %1713 = vmatprep.subr.mxu0 0.0
        %1714 = vmatpush1.msra.mxu0 0.0
        %1715 = vmatprep.subr.mxu0 0.0
        %1716 = vmatpush1.msra.mxu0 0.0
        %1717 = vmatprep.subr.mxu0 0.0
        %1718 = vmatpush1.msra.mxu0 0.0
        %1719 = vmatprep.subr.mxu0 0.0
        %1720 = vmatpush1.msra.mxu0 0.0
        %1721 = vmatprep.subr.mxu0 0.0
        %1722 = vmatpush1.msra.mxu0 0.0
        %1723 = vmatprep.subr.mxu0 0.0
        %1724 = vmatpush1.msra.mxu0 0.0
        %1725 = vmatprep.subr.mxu0 0.0
        %1726 = vmatpush1.msra.mxu0 0.0
        %1727 = vmatprep.subr.mxu0 0.0
        %1728 = vmatpush1.msra.mxu0 0.0
        %1729 = vmatprep.subr.mxu0 0.0
        %1730 = vmatpush1.msra.mxu0 0.0
        %1731 = vmatprep.subr.mxu0 0.0
        %1732 = vmatpush1.msra.mxu0 0.0
        %1733 = vmatprep.subr.mxu0 0.0
        %1734 = vmatpush1.msra.mxu0 0.0
        %1735 = vmatprep.subr.mxu0 0.0
        %1736 = vmatpush1.msra.mxu0 0.0
        %1737 = vmatprep.subr.mxu0 0.0
        %1738 = vmatpush1.msra.mxu0 0.0
        %1739 = vmatprep.subr.mxu0 0.0
        %1740 = vmatpush1.msra.mxu0 0.0
        %1741 = vmatprep.subr.mxu0 0.0
        %1742 = vmatpush1.msra.mxu0 0.0
        %1743 = vmatprep.subr.mxu0 0.0
        %1744 = vmatpush1.msra.mxu0 0.0
        %1745 = vmatprep.subr.mxu0 0.0
        %1746 = vmatpush1.msra.mxu0 0.0
        %1747 = vmatprep.subr.mxu0 0.0
        %1748 = vmatpush1.msra.mxu0 0.0
        %1749 = vmatprep.subr.mxu0 0.0
        %1750 = vmatpush1.msra.mxu0 0.0
        %1751 = vmatprep.subr.mxu0 0.0
        %1752 = vmatpush1.msra.mxu0 0.0
        %1753 = vmatprep.subr.mxu0 0.0
        %1754 = vmatpush1.msra.mxu0 0.0
        %1755 = vmatprep.subr.mxu0 0.0
        %1756 = vmatpush1.msra.mxu0 0.0
        %1757 = vmatprep.subr.mxu0 0.0
        %1758 = vmatpush1.msra.mxu0 0.0
        %1759 = vmatprep.subr.mxu0 0.0
        %1760 = vmatpush1.msra.mxu0 0.0
        %1761 = vmatprep.subr.mxu0 0.0
        %1762 = vmatpush1.msra.mxu0 0.0
        %1763 = vmatprep.subr.mxu0 0.0
        %1764 = vmatpush1.msra.mxu0 0.0
        %1765 = vmatprep.subr.mxu0 0.0
        %1766 = vmatpush1.msra.mxu0 0.0
        %1767 = vmatprep.subr.mxu0 0.0
        %1768 = vmatpush1.msra.mxu0 0.0
        %1769 = vmatprep.subr.mxu0 0.0
        %1770 = vmatpush1.msra.mxu0 0.0
        %1771 = vmatprep.mubr.f32.mxu0 0.0
        %1772 = vmatmul.mubr.f32.gmra.mrb[0].mxu0 %v1681
        %v1773 = vpop.f32.mrb[0].mxu0
        %v1774 = vadd.f32 0.0, %v1773
        %v1775 = vpop.f32.mrb[0].mxu0
        %1776 = vmatprep.mubr.f32.mxu0 0.0
        %1777 = vmatmul.mubr.f32.gmra.mrb[0].mxu0 %v1684
        %v1778 = vpop.f32.mrb[0].mxu0
        %v1779 = vadd.f32 0.0, %v1778
        %v1780 = vpop.f32.mrb[0].mxu0
        %1781 = vmatprep.mubr.f32.mxu0 0.0
        %1782 = vmatmul.mubr.f32.gmra.mrb[0].mxu0 %v1687
        %v1783 = vpop.f32.mrb[0].mxu0
        %v1784 = vadd.f32 0.0, %v1783
        %v1785 = vpop.f32.mrb[0].mxu0
        %1786 = vmatprep.mubr.f32.mxu0 0.0
        %1787 = vmatmul.mubr.f32.gmra.mrb[0].mxu0 %v1690
        %v1788 = vpop.f32.mrb[0].mxu0
        %v1789 = vadd.f32 0.0, %v1788
        %v1790 = vpop.f32.mrb[0].mxu0
        %1791 = vmatprep.mubr.f32.mxu0 0.0
        %1792 = vmatmul.mubr.f32.gmra.mrb[0].mxu0 %v1693
        %v1793 = vpop.f32.mrb[0].mxu0
        %v1794 = vadd.f32 0.0, %v1793
        %v1795 = vpop.f32.mrb[0].mxu0
        %1796 = vmatprep.mubr.f32.mxu0 0.0
        %1797 = vmatmul.mubr.f32.gmra.mrb[0].mxu0 %v1696
        %v1798 = vpop.f32.mrb[0].mxu0
        %v1799 = vadd.f32 0.0, %v1798
        %v1800 = vpop.f32.mrb[0].mxu0
        %1801 = vmatprep.mubr.f32.mxu0 0.0
        %1802 = vmatmul.mubr.f32.gmra.mrb[0].mxu0 %v1699
        %v1803 = vpop.f32.mrb[0].mxu0
        %v1804 = vadd.f32 0.0, %v1803
        %v1805 = vpop.f32.mrb[0].mxu0
        %1806 = vmatprep.mubr.f32.mxu0 0.0
        %1807 = vmatmul.mubr.f32.gmra.mrb[0].mxu0 %v1702
        %v1808 = vpop.f32.mrb[0].mxu0
        %v1809 = vadd.f32 0.0, %v1808
        %v1810 = vpop.f32.mrb[0].mxu0
        %1811 = vdwg.mxu0
        %v1812 = vadd.f32 %v1662, %v1774
        %v1813 = vadd.f32 %v1663, %v1779
        %v1814 = vadd.f32 %v1664, %v1784
        %v1815 = vadd.f32 %v1665, %v1789
        %v1816 = vadd.f32 %v1666, %v1794
        %v1817 = vadd.f32 %v1667, %v1799
        %v1818 = vadd.f32 %v1668, %v1804
        %v1819 = vadd.f32 %v1669, %v1809
        %v1820 = vld [vmem:[%s320 + $0x1] sm:$0xff]
        %v1821 = vld [vmem:[%s320 + $0x11] sm:$0xff]
        %v1822 = vld [vmem:[%s320 + $0x21] sm:$0xff]
        %v1823 = vld [vmem:[%s320 + $0x31] sm:$0xff]
        %v1824 = vld [vmem:[%s320 + $0x41] sm:$0xff]
        %v1825 = vld [vmem:[%s320 + $0x51] sm:$0xff]
        %v1826 = vld [vmem:[%s320 + $0x61] sm:$0xff]
        %v1827 = vld [vmem:[%s320 + $0x71] sm:$0xff]
        %s1828 = scalar_lea.vmem %s3, 40
        %v1829 = vld [vmem:[%s1828] sm:$0xf]
        %v1831 = vsel %vm352, %v1820, 0
        %v1834 = vsel %vm352, %v1821, 0
        %v1837 = vsel %vm352, %v1822, 0
        %v1840 = vsel %vm352, %v1823, 0
        %v1843 = vsel %vm352, %v1824, 0
        %v1846 = vsel %vm352, %v1825, 0
        %v1849 = vsel %vm352, %v1826, 0
        %v1852 = vsel %vm352, %v1827, 0
        %v1855 = vsel %vm377, %v1829, 0
        %1857 = vmatprep.subr.mxu0 0.0
        %1858 = vmatpush1.msra.mxu0 %v1855
        %1859 = vmatprep.subr.mxu0 0.0
        %1860 = vmatpush1.msra.mxu0 0.0
        %1861 = vmatprep.subr.mxu0 0.0
        %1862 = vmatpush1.msra.mxu0 0.0
        %1863 = vmatprep.subr.mxu0 0.0
        %1864 = vmatpush1.msra.mxu0 0.0
        %1865 = vmatprep.subr.mxu0 0.0
        %1866 = vmatpush1.msra.mxu0 0.0
        %1867 = vmatprep.subr.mxu0 0.0
        %1868 = vmatpush1.msra.mxu0 0.0
        %1869 = vmatprep.subr.mxu0 0.0
        %1870 = vmatpush1.msra.mxu0 0.0
        %1871 = vmatprep.subr.mxu0 0.0
        %1872 = vmatpush1.msra.mxu0 0.0
        %1873 = vmatprep.subr.mxu0 0.0
        %1874 = vmatpush1.msra.mxu0 0.0
        %1875 = vmatprep.subr.mxu0 0.0
        %1876 = vmatpush1.msra.mxu0 0.0
        %1877 = vmatprep.subr.mxu0 0.0
        %1878 = vmatpush1.msra.mxu0 0.0
        %1879 = vmatprep.subr.mxu0 0.0
        %1880 = vmatpush1.msra.mxu0 0.0
        %1881 = vmatprep.subr.mxu0 0.0
        %1882 = vmatpush1.msra.mxu0 0.0
        %1883 = vmatprep.subr.mxu0 0.0
        %1884 = vmatpush1.msra.mxu0 0.0
        %1885 = vmatprep.subr.mxu0 0.0
        %1886 = vmatpush1.msra.mxu0 0.0
        %1887 = vmatprep.subr.mxu0 0.0
        %1888 = vmatpush1.msra.mxu0 0.0
        %1889 = vmatprep.subr.mxu0 0.0
        %1890 = vmatpush1.msra.mxu0 0.0
        %1891 = vmatprep.subr.mxu0 0.0
        %1892 = vmatpush1.msra.mxu0 0.0
        %1893 = vmatprep.subr.mxu0 0.0
        %1894 = vmatpush1.msra.mxu0 0.0
        %1895 = vmatprep.subr.mxu0 0.0
        %1896 = vmatpush1.msra.mxu0 0.0
        %1897 = vmatprep.subr.mxu0 0.0
        %1898 = vmatpush1.msra.mxu0 0.0
        %1899 = vmatprep.subr.mxu0 0.0
        %1900 = vmatpush1.msra.mxu0 0.0
        %1901 = vmatprep.subr.mxu0 0.0
        %1902 = vmatpush1.msra.mxu0 0.0
        %1903 = vmatprep.subr.mxu0 0.0
        %1904 = vmatpush1.msra.mxu0 0.0
        %1905 = vmatprep.subr.mxu0 0.0
        %1906 = vmatpush1.msra.mxu0 0.0
        %1907 = vmatprep.subr.mxu0 0.0
        %1908 = vmatpush1.msra.mxu0 0.0
        %1909 = vmatprep.subr.mxu0 0.0
        %1910 = vmatpush1.msra.mxu0 0.0
        %1911 = vmatprep.subr.mxu0 0.0
        %1912 = vmatpush1.msra.mxu0 0.0
        %1913 = vmatprep.subr.mxu0 0.0
        %1914 = vmatpush1.msra.mxu0 0.0
        %1915 = vmatprep.subr.mxu0 0.0
        %1916 = vmatpush1.msra.mxu0 0.0
        %1917 = vmatprep.subr.mxu0 0.0
        %1918 = vmatpush1.msra.mxu0 0.0
        %1919 = vmatprep.subr.mxu0 0.0
        %1920 = vmatpush1.msra.mxu0 0.0
        %1921 = vmatprep.mubr.f32.mxu0 0.0
        %1922 = vmatmul.mubr.f32.gmra.mrb[0].mxu0 %v1831
        %v1923 = vpop.f32.mrb[0].mxu0
        %v1924 = vadd.f32 0.0, %v1923
        %v1925 = vpop.f32.mrb[0].mxu0
        %1926 = vmatprep.mubr.f32.mxu0 0.0
        %1927 = vmatmul.mubr.f32.gmra.mrb[0].mxu0 %v1834
        %v1928 = vpop.f32.mrb[0].mxu0
        %v1929 = vadd.f32 0.0, %v1928
        %v1930 = vpop.f32.mrb[0].mxu0
        %1931 = vmatprep.mubr.f32.mxu0 0.0
        %1932 = vmatmul.mubr.f32.gmra.mrb[0].mxu0 %v1837
        %v1933 = vpop.f32.mrb[0].mxu0
        %v1934 = vadd.f32 0.0, %v1933
        %v1935 = vpop.f32.mrb[0].mxu0
        %1936 = vmatprep.mubr.f32.mxu0 0.0
        %1937 = vmatmul.mubr.f32.gmra.mrb[0].mxu0 %v1840
        %v1938 = vpop.f32.mrb[0].mxu0
        %v1939 = vadd.f32 0.0, %v1938
        %v1940 = vpop.f32.mrb[0].mxu0
        %1941 = vmatprep.mubr.f32.mxu0 0.0
        %1942 = vmatmul.mubr.f32.gmra.mrb[0].mxu0 %v1843
        %v1943 = vpop.f32.mrb[0].mxu0
        %v1944 = vadd.f32 0.0, %v1943
        %v1945 = vpop.f32.mrb[0].mxu0
        %1946 = vmatprep.mubr.f32.mxu0 0.0
        %1947 = vmatmul.mubr.f32.gmra.mrb[0].mxu0 %v1846
        %v1948 = vpop.f32.mrb[0].mxu0
        %v1949 = vadd.f32 0.0, %v1948
        %v1950 = vpop.f32.mrb[0].mxu0
        %1951 = vmatprep.mubr.f32.mxu0 0.0
        %1952 = vmatmul.mubr.f32.gmra.mrb[0].mxu0 %v1849
        %v1953 = vpop.f32.mrb[0].mxu0
        %v1954 = vadd.f32 0.0, %v1953
        %v1955 = vpop.f32.mrb[0].mxu0
        %1956 = vmatprep.mubr.f32.mxu0 0.0
        %1957 = vmatmul.mubr.f32.gmra.mrb[0].mxu0 %v1852
        %v1958 = vpop.f32.mrb[0].mxu0
        %v1959 = vadd.f32 0.0, %v1958
        %v1960 = vpop.f32.mrb[0].mxu0
        %1961 = vdwg.mxu0
        %v1962 = vadd.f32 %v1812, %v1924
        %v1963 = vadd.f32 %v1813, %v1929
        %v1964 = vadd.f32 %v1814, %v1934
        %v1965 = vadd.f32 %v1815, %v1939
        %v1966 = vadd.f32 %v1816, %v1944
        %v1967 = vadd.f32 %v1817, %v1949
        %v1968 = vadd.f32 %v1818, %v1954
        %v1969 = vadd.f32 %v1819, %v1959
        %v1970 = vld [vmem:[%s320 + $0x2] sm:$0xff]
        %v1971 = vld [vmem:[%s320 + $0x12] sm:$0xff]
        %v1972 = vld [vmem:[%s320 + $0x22] sm:$0xff]
        %v1973 = vld [vmem:[%s320 + $0x32] sm:$0xff]
        %v1974 = vld [vmem:[%s320 + $0x42] sm:$0xff]
        %v1975 = vld [vmem:[%s320 + $0x52] sm:$0xff]
        %v1976 = vld [vmem:[%s320 + $0x62] sm:$0xff]
        %v1977 = vld [vmem:[%s320 + $0x72] sm:$0xff]
        %s1978 = scalar_lea.vmem %s3, 44
        %v1979 = vld [vmem:[%s1978] sm:$0xf]
        %v1981 = vsel %vm352, %v1970, 0
        %v1984 = vsel %vm352, %v1971, 0
        %v1987 = vsel %vm352, %v1972, 0
        %v1990 = vsel %vm352, %v1973, 0
        %v1993 = vsel %vm352, %v1974, 0
        %v1996 = vsel %vm352, %v1975, 0
        %v1999 = vsel %vm352, %v1976, 0
        %v2002 = vsel %vm352, %v1977, 0
        %v2005 = vsel %vm377, %v1979, 0
        %2007 = vmatprep.subr.mxu0 0.0
        %2008 = vmatpush1.msra.mxu0 %v2005
        %2009 = vmatprep.subr.mxu0 0.0
        %2010 = vmatpush1.msra.mxu0 0.0
        %2011 = vmatprep.subr.mxu0 0.0
        %2012 = vmatpush1.msra.mxu0 0.0
        %2013 = vmatprep.subr.mxu0 0.0
        %2014 = vmatpush1.msra.mxu0 0.0
        %2015 = vmatprep.subr.mxu0 0.0
        %2016 = vmatpush1.msra.mxu0 0.0
        %2017 = vmatprep.subr.mxu0 0.0
        %2018 = vmatpush1.msra.mxu0 0.0
        %2019 = vmatprep.subr.mxu0 0.0
        %2020 = vmatpush1.msra.mxu0 0.0
        %2021 = vmatprep.subr.mxu0 0.0
        %2022 = vmatpush1.msra.mxu0 0.0
        %2023 = vmatprep.subr.mxu0 0.0
        %2024 = vmatpush1.msra.mxu0 0.0
        %2025 = vmatprep.subr.mxu0 0.0
        %2026 = vmatpush1.msra.mxu0 0.0
        %2027 = vmatprep.subr.mxu0 0.0
        %2028 = vmatpush1.msra.mxu0 0.0
        %2029 = vmatprep.subr.mxu0 0.0
        %2030 = vmatpush1.msra.mxu0 0.0
        %2031 = vmatprep.subr.mxu0 0.0
        %2032 = vmatpush1.msra.mxu0 0.0
        %2033 = vmatprep.subr.mxu0 0.0
        %2034 = vmatpush1.msra.mxu0 0.0
        %2035 = vmatprep.subr.mxu0 0.0
        %2036 = vmatpush1.msra.mxu0 0.0
        %2037 = vmatprep.subr.mxu0 0.0
        %2038 = vmatpush1.msra.mxu0 0.0
        %2039 = vmatprep.subr.mxu0 0.0
        %2040 = vmatpush1.msra.mxu0 0.0
        %2041 = vmatprep.subr.mxu0 0.0
        %2042 = vmatpush1.msra.mxu0 0.0
        %2043 = vmatprep.subr.mxu0 0.0
        %2044 = vmatpush1.msra.mxu0 0.0
        %2045 = vmatprep.subr.mxu0 0.0
        %2046 = vmatpush1.msra.mxu0 0.0
        %2047 = vmatprep.subr.mxu0 0.0
        %2048 = vmatpush1.msra.mxu0 0.0
        %2049 = vmatprep.subr.mxu0 0.0
        %2050 = vmatpush1.msra.mxu0 0.0
        %2051 = vmatprep.subr.mxu0 0.0
        %2052 = vmatpush1.msra.mxu0 0.0
        %2053 = vmatprep.subr.mxu0 0.0
        %2054 = vmatpush1.msra.mxu0 0.0
        %2055 = vmatprep.subr.mxu0 0.0
        %2056 = vmatpush1.msra.mxu0 0.0
        %2057 = vmatprep.subr.mxu0 0.0
        %2058 = vmatpush1.msra.mxu0 0.0
        %2059 = vmatprep.subr.mxu0 0.0
        %2060 = vmatpush1.msra.mxu0 0.0
        %2061 = vmatprep.subr.mxu0 0.0
        %2062 = vmatpush1.msra.mxu0 0.0
        %2063 = vmatprep.subr.mxu0 0.0
        %2064 = vmatpush1.msra.mxu0 0.0
        %2065 = vmatprep.subr.mxu0 0.0
        %2066 = vmatpush1.msra.mxu0 0.0
        %2067 = vmatprep.subr.mxu0 0.0
        %2068 = vmatpush1.msra.mxu0 0.0
        %2069 = vmatprep.subr.mxu0 0.0
        %2070 = vmatpush1.msra.mxu0 0.0
        %2071 = vmatprep.mubr.f32.mxu0 0.0
        %2072 = vmatmul.mubr.f32.gmra.mrb[0].mxu0 %v1981
        %v2073 = vpop.f32.mrb[0].mxu0
        %v2074 = vadd.f32 0.0, %v2073
        %v2075 = vpop.f32.mrb[0].mxu0
        %2076 = vmatprep.mubr.f32.mxu0 0.0
        %2077 = vmatmul.mubr.f32.gmra.mrb[0].mxu0 %v1984
        %v2078 = vpop.f32.mrb[0].mxu0
        %v2079 = vadd.f32 0.0, %v2078
        %v2080 = vpop.f32.mrb[0].mxu0
        %2081 = vmatprep.mubr.f32.mxu0 0.0
        %2082 = vmatmul.mubr.f32.gmra.mrb[0].mxu0 %v1987
        %v2083 = vpop.f32.mrb[0].mxu0
        %v2084 = vadd.f32 0.0, %v2083
        %v2085 = vpop.f32.mrb[0].mxu0
        %2086 = vmatprep.mubr.f32.mxu0 0.0
        %2087 = vmatmul.mubr.f32.gmra.mrb[0].mxu0 %v1990
        %v2088 = vpop.f32.mrb[0].mxu0
        %v2089 = vadd.f32 0.0, %v2088
        %v2090 = vpop.f32.mrb[0].mxu0
        %2091 = vmatprep.mubr.f32.mxu0 0.0
        %2092 = vmatmul.mubr.f32.gmra.mrb[0].mxu0 %v1993
        %v2093 = vpop.f32.mrb[0].mxu0
        %v2094 = vadd.f32 0.0, %v2093
        %v2095 = vpop.f32.mrb[0].mxu0
        %2096 = vmatprep.mubr.f32.mxu0 0.0
        %2097 = vmatmul.mubr.f32.gmra.mrb[0].mxu0 %v1996
        %v2098 = vpop.f32.mrb[0].mxu0
        %v2099 = vadd.f32 0.0, %v2098
        %v2100 = vpop.f32.mrb[0].mxu0
        %2101 = vmatprep.mubr.f32.mxu0 0.0
        %2102 = vmatmul.mubr.f32.gmra.mrb[0].mxu0 %v1999
        %v2103 = vpop.f32.mrb[0].mxu0
        %v2104 = vadd.f32 0.0, %v2103
        %v2105 = vpop.f32.mrb[0].mxu0
        %2106 = vmatprep.mubr.f32.mxu0 0.0
        %2107 = vmatmul.mubr.f32.gmra.mrb[0].mxu0 %v2002
        %v2108 = vpop.f32.mrb[0].mxu0
        %v2109 = vadd.f32 0.0, %v2108
        %v2110 = vpop.f32.mrb[0].mxu0
        %2111 = vdwg.mxu0
        %v2112 = vadd.f32 %v1962, %v2074
        %v2113 = vadd.f32 %v1963, %v2079
        %v2114 = vadd.f32 %v1964, %v2084
        %v2115 = vadd.f32 %v1965, %v2089
        %v2116 = vadd.f32 %v1966, %v2094
        %v2117 = vadd.f32 %v1967, %v2099
        %v2118 = vadd.f32 %v1968, %v2104
        %v2119 = vadd.f32 %v1969, %v2109
        %s2120 = scalar_lea.vmem %s320, 16
        %v2121 = vld [vmem:[%s2120] sm:$0xff]
        %v2122 = vld [vmem:[%s2120 + $0x10] sm:$0xff]
        %v2123 = vld [vmem:[%s2120 + $0x20] sm:$0xff]
        %v2124 = vld [vmem:[%s2120 + $0x30] sm:$0xff]
        %v2125 = vld [vmem:[%s2120 + $0x40] sm:$0xff]
        %v2126 = vld [vmem:[%s2120 + $0x50] sm:$0xff]
        %v2127 = vld [vmem:[%s2120 + $0x60] sm:$0xff]
        %v2128 = vld [vmem:[%s2120 + $0x70] sm:$0xff]
        %s2129 = scalar_lea.vmem %s3, 48
        %v2130 = vld [vmem:[%s2129] sm:$0xf]
        %v2132 = vsel %vm352, %v2121, 0
        %v2135 = vsel %vm352, %v2122, 0
        %v2138 = vsel %vm352, %v2123, 0
        %v2141 = vsel %vm352, %v2124, 0
        %v2144 = vsel %vm352, %v2125, 0
        %v2147 = vsel %vm352, %v2126, 0
        %v2150 = vsel %vm352, %v2127, 0
        %v2153 = vsel %vm352, %v2128, 0
        %v2156 = vsel %vm377, %v2130, 0
        %2158 = vmatprep.subr.mxu0 0.0
        %2159 = vmatpush1.msra.mxu0 %v2156
        %2160 = vmatprep.subr.mxu0 0.0
        %2161 = vmatpush1.msra.mxu0 0.0
        %2162 = vmatprep.subr.mxu0 0.0
        %2163 = vmatpush1.msra.mxu0 0.0
        %2164 = vmatprep.subr.mxu0 0.0
        %2165 = vmatpush1.msra.mxu0 0.0
        %2166 = vmatprep.subr.mxu0 0.0
        %2167 = vmatpush1.msra.mxu0 0.0
        %2168 = vmatprep.subr.mxu0 0.0
        %2169 = vmatpush1.msra.mxu0 0.0
        %2170 = vmatprep.subr.mxu0 0.0
        %2171 = vmatpush1.msra.mxu0 0.0
        %2172 = vmatprep.subr.mxu0 0.0
        %2173 = vmatpush1.msra.mxu0 0.0
        %2174 = vmatprep.subr.mxu0 0.0
        %2175 = vmatpush1.msra.mxu0 0.0
        %2176 = vmatprep.subr.mxu0 0.0
        %2177 = vmatpush1.msra.mxu0 0.0
        %2178 = vmatprep.subr.mxu0 0.0
        %2179 = vmatpush1.msra.mxu0 0.0
        %2180 = vmatprep.subr.mxu0 0.0
        %2181 = vmatpush1.msra.mxu0 0.0
        %2182 = vmatprep.subr.mxu0 0.0
        %2183 = vmatpush1.msra.mxu0 0.0
        %2184 = vmatprep.subr.mxu0 0.0
        %2185 = vmatpush1.msra.mxu0 0.0
        %2186 = vmatprep.subr.mxu0 0.0
        %2187 = vmatpush1.msra.mxu0 0.0
        %2188 = vmatprep.subr.mxu0 0.0
        %2189 = vmatpush1.msra.mxu0 0.0
        %2190 = vmatprep.subr.mxu0 0.0
        %2191 = vmatpush1.msra.mxu0 0.0
        %2192 = vmatprep.subr.mxu0 0.0
        %2193 = vmatpush1.msra.mxu0 0.0
        %2194 = vmatprep.subr.mxu0 0.0
        %2195 = vmatpush1.msra.mxu0 0.0
        %2196 = vmatprep.subr.mxu0 0.0
        %2197 = vmatpush1.msra.mxu0 0.0
        %2198 = vmatprep.subr.mxu0 0.0
        %2199 = vmatpush1.msra.mxu0 0.0
        %2200 = vmatprep.subr.mxu0 0.0
        %2201 = vmatpush1.msra.mxu0 0.0
        %2202 = vmatprep.subr.mxu0 0.0
        %2203 = vmatpush1.msra.mxu0 0.0
        %2204 = vmatprep.subr.mxu0 0.0
        %2205 = vmatpush1.msra.mxu0 0.0
        %2206 = vmatprep.subr.mxu0 0.0
        %2207 = vmatpush1.msra.mxu0 0.0
        %2208 = vmatprep.subr.mxu0 0.0
        %2209 = vmatpush1.msra.mxu0 0.0
        %2210 = vmatprep.subr.mxu0 0.0
        %2211 = vmatpush1.msra.mxu0 0.0
        %2212 = vmatprep.subr.mxu0 0.0
        %2213 = vmatpush1.msra.mxu0 0.0
        %2214 = vmatprep.subr.mxu0 0.0
        %2215 = vmatpush1.msra.mxu0 0.0
        %2216 = vmatprep.subr.mxu0 0.0
        %2217 = vmatpush1.msra.mxu0 0.0
        %2218 = vmatprep.subr.mxu0 0.0
        %2219 = vmatpush1.msra.mxu0 0.0
        %2220 = vmatprep.subr.mxu0 0.0
        %2221 = vmatpush1.msra.mxu0 0.0
        %2222 = vmatprep.mubr.f32.mxu0 0.0
        %2223 = vmatmul.mubr.f32.gmra.mrb[0].mxu0 %v2132
        %v2224 = vpop.f32.mrb[0].mxu0
        %v2225 = vadd.f32 0.0, %v2224
        %v2226 = vpop.f32.mrb[0].mxu0
        %2227 = vmatprep.mubr.f32.mxu0 0.0
        %2228 = vmatmul.mubr.f32.gmra.mrb[0].mxu0 %v2135
        %v2229 = vpop.f32.mrb[0].mxu0
        %v2230 = vadd.f32 0.0, %v2229
        %v2231 = vpop.f32.mrb[0].mxu0
        %2232 = vmatprep.mubr.f32.mxu0 0.0
        %2233 = vmatmul.mubr.f32.gmra.mrb[0].mxu0 %v2138
        %v2234 = vpop.f32.mrb[0].mxu0
        %v2235 = vadd.f32 0.0, %v2234
        %v2236 = vpop.f32.mrb[0].mxu0
        %2237 = vmatprep.mubr.f32.mxu0 0.0
        %2238 = vmatmul.mubr.f32.gmra.mrb[0].mxu0 %v2141
        %v2239 = vpop.f32.mrb[0].mxu0
        %v2240 = vadd.f32 0.0, %v2239
        %v2241 = vpop.f32.mrb[0].mxu0
        %2242 = vmatprep.mubr.f32.mxu0 0.0
        %2243 = vmatmul.mubr.f32.gmra.mrb[0].mxu0 %v2144
        %v2244 = vpop.f32.mrb[0].mxu0
        %v2245 = vadd.f32 0.0, %v2244
        %v2246 = vpop.f32.mrb[0].mxu0
        %2247 = vmatprep.mubr.f32.mxu0 0.0
        %2248 = vmatmul.mubr.f32.gmra.mrb[0].mxu0 %v2147
        %v2249 = vpop.f32.mrb[0].mxu0
        %v2250 = vadd.f32 0.0, %v2249
        %v2251 = vpop.f32.mrb[0].mxu0
        %2252 = vmatprep.mubr.f32.mxu0 0.0
        %2253 = vmatmul.mubr.f32.gmra.mrb[0].mxu0 %v2150
        %v2254 = vpop.f32.mrb[0].mxu0
        %v2255 = vadd.f32 0.0, %v2254
        %v2256 = vpop.f32.mrb[0].mxu0
        %2257 = vmatprep.mubr.f32.mxu0 0.0
        %2258 = vmatmul.mubr.f32.gmra.mrb[0].mxu0 %v2153
        %v2259 = vpop.f32.mrb[0].mxu0
        %v2260 = vadd.f32 0.0, %v2259
        %v2261 = vpop.f32.mrb[0].mxu0
        %2262 = vdwg.mxu0
        %v2263 = vadd.f32 %v2112, %v2225
        %v2264 = vadd.f32 %v2113, %v2230
        %v2265 = vadd.f32 %v2114, %v2235
        %v2266 = vadd.f32 %v2115, %v2240
        %v2267 = vadd.f32 %v2116, %v2245
        %v2268 = vadd.f32 %v2117, %v2250
        %v2269 = vadd.f32 %v2118, %v2255
        %v2270 = vadd.f32 %v2119, %v2260
        %v2271 = vld [vmem:[%s2120 + $0x1] sm:$0xff]
        %v2272 = vld [vmem:[%s2120 + $0x11] sm:$0xff]
        %v2273 = vld [vmem:[%s2120 + $0x21] sm:$0xff]
        %v2274 = vld [vmem:[%s2120 + $0x31] sm:$0xff]
        %v2275 = vld [vmem:[%s2120 + $0x41] sm:$0xff]
        %v2276 = vld [vmem:[%s2120 + $0x51] sm:$0xff]
        %v2277 = vld [vmem:[%s2120 + $0x61] sm:$0xff]
        %v2278 = vld [vmem:[%s2120 + $0x71] sm:$0xff]
        %s2279 = scalar_lea.vmem %s3, 52
        %v2280 = vld [vmem:[%s2279] sm:$0xf]
        %v2282 = vsel %vm352, %v2271, 0
        %v2285 = vsel %vm352, %v2272, 0
        %v2288 = vsel %vm352, %v2273, 0
        %v2291 = vsel %vm352, %v2274, 0
        %v2294 = vsel %vm352, %v2275, 0
        %v2297 = vsel %vm352, %v2276, 0
        %v2300 = vsel %vm352, %v2277, 0
        %v2303 = vsel %vm352, %v2278, 0
        %v2306 = vsel %vm377, %v2280, 0
        %2308 = vmatprep.subr.mxu0 0.0
        %2309 = vmatpush1.msra.mxu0 %v2306
        %2310 = vmatprep.subr.mxu0 0.0
        %2311 = vmatpush1.msra.mxu0 0.0
        %2312 = vmatprep.subr.mxu0 0.0
        %2313 = vmatpush1.msra.mxu0 0.0
        %2314 = vmatprep.subr.mxu0 0.0
        %2315 = vmatpush1.msra.mxu0 0.0
        %2316 = vmatprep.subr.mxu0 0.0
        %2317 = vmatpush1.msra.mxu0 0.0
        %2318 = vmatprep.subr.mxu0 0.0
        %2319 = vmatpush1.msra.mxu0 0.0
        %2320 = vmatprep.subr.mxu0 0.0
        %2321 = vmatpush1.msra.mxu0 0.0
        %2322 = vmatprep.subr.mxu0 0.0
        %2323 = vmatpush1.msra.mxu0 0.0
        %2324 = vmatprep.subr.mxu0 0.0
        %2325 = vmatpush1.msra.mxu0 0.0
        %2326 = vmatprep.subr.mxu0 0.0
        %2327 = vmatpush1.msra.mxu0 0.0
        %2328 = vmatprep.subr.mxu0 0.0
        %2329 = vmatpush1.msra.mxu0 0.0
        %2330 = vmatprep.subr.mxu0 0.0
        %2331 = vmatpush1.msra.mxu0 0.0
        %2332 = vmatprep.subr.mxu0 0.0
        %2333 = vmatpush1.msra.mxu0 0.0
        %2334 = vmatprep.subr.mxu0 0.0
        %2335 = vmatpush1.msra.mxu0 0.0
        %2336 = vmatprep.subr.mxu0 0.0
        %2337 = vmatpush1.msra.mxu0 0.0
        %2338 = vmatprep.subr.mxu0 0.0
        %2339 = vmatpush1.msra.mxu0 0.0
        %2340 = vmatprep.subr.mxu0 0.0
        %2341 = vmatpush1.msra.mxu0 0.0
        %2342 = vmatprep.subr.mxu0 0.0
        %2343 = vmatpush1.msra.mxu0 0.0
        %2344 = vmatprep.subr.mxu0 0.0
        %2345 = vmatpush1.msra.mxu0 0.0
        %2346 = vmatprep.subr.mxu0 0.0
        %2347 = vmatpush1.msra.mxu0 0.0
        %2348 = vmatprep.subr.mxu0 0.0
        %2349 = vmatpush1.msra.mxu0 0.0
        %2350 = vmatprep.subr.mxu0 0.0
        %2351 = vmatpush1.msra.mxu0 0.0
        %2352 = vmatprep.subr.mxu0 0.0
        %2353 = vmatpush1.msra.mxu0 0.0
        %2354 = vmatprep.subr.mxu0 0.0
        %2355 = vmatpush1.msra.mxu0 0.0
        %2356 = vmatprep.subr.mxu0 0.0
        %2357 = vmatpush1.msra.mxu0 0.0
        %2358 = vmatprep.subr.mxu0 0.0
        %2359 = vmatpush1.msra.mxu0 0.0
        %2360 = vmatprep.subr.mxu0 0.0
        %2361 = vmatpush1.msra.mxu0 0.0
        %2362 = vmatprep.subr.mxu0 0.0
        %2363 = vmatpush1.msra.mxu0 0.0
        %2364 = vmatprep.subr.mxu0 0.0
        %2365 = vmatpush1.msra.mxu0 0.0
        %2366 = vmatprep.subr.mxu0 0.0
        %2367 = vmatpush1.msra.mxu0 0.0
        %2368 = vmatprep.subr.mxu0 0.0
        %2369 = vmatpush1.msra.mxu0 0.0
        %2370 = vmatprep.subr.mxu0 0.0
        %2371 = vmatpush1.msra.mxu0 0.0
        %2372 = vmatprep.mubr.f32.mxu0 0.0
        %2373 = vmatmul.mubr.f32.gmra.mrb[0].mxu0 %v2282
        %v2374 = vpop.f32.mrb[0].mxu0
        %v2375 = vadd.f32 0.0, %v2374
        %v2376 = vpop.f32.mrb[0].mxu0
        %2377 = vmatprep.mubr.f32.mxu0 0.0
        %2378 = vmatmul.mubr.f32.gmra.mrb[0].mxu0 %v2285
        %v2379 = vpop.f32.mrb[0].mxu0
        %v2380 = vadd.f32 0.0, %v2379
        %v2381 = vpop.f32.mrb[0].mxu0
        %2382 = vmatprep.mubr.f32.mxu0 0.0
        %2383 = vmatmul.mubr.f32.gmra.mrb[0].mxu0 %v2288
        %v2384 = vpop.f32.mrb[0].mxu0
        %v2385 = vadd.f32 0.0, %v2384
        %v2386 = vpop.f32.mrb[0].mxu0
        %2387 = vmatprep.mubr.f32.mxu0 0.0
        %2388 = vmatmul.mubr.f32.gmra.mrb[0].mxu0 %v2291
        %v2389 = vpop.f32.mrb[0].mxu0
        %v2390 = vadd.f32 0.0, %v2389
        %v2391 = vpop.f32.mrb[0].mxu0
        %2392 = vmatprep.mubr.f32.mxu0 0.0
        %2393 = vmatmul.mubr.f32.gmra.mrb[0].mxu0 %v2294
        %v2394 = vpop.f32.mrb[0].mxu0
        %v2395 = vadd.f32 0.0, %v2394
        %v2396 = vpop.f32.mrb[0].mxu0
        %2397 = vmatprep.mubr.f32.mxu0 0.0
        %2398 = vmatmul.mubr.f32.gmra.mrb[0].mxu0 %v2297
        %v2399 = vpop.f32.mrb[0].mxu0
        %v2400 = vadd.f32 0.0, %v2399
        %v2401 = vpop.f32.mrb[0].mxu0
        %2402 = vmatprep.mubr.f32.mxu0 0.0
        %2403 = vmatmul.mubr.f32.gmra.mrb[0].mxu0 %v2300
        %v2404 = vpop.f32.mrb[0].mxu0
        %v2405 = vadd.f32 0.0, %v2404
        %v2406 = vpop.f32.mrb[0].mxu0
        %2407 = vmatprep.mubr.f32.mxu0 0.0
        %2408 = vmatmul.mubr.f32.gmra.mrb[0].mxu0 %v2303
        %v2409 = vpop.f32.mrb[0].mxu0
        %v2410 = vadd.f32 0.0, %v2409
        %v2411 = vpop.f32.mrb[0].mxu0
        %2412 = vdwg.mxu0
        %v2413 = vadd.f32 %v2263, %v2375
        %v2414 = vadd.f32 %v2264, %v2380
        %v2415 = vadd.f32 %v2265, %v2385
        %v2416 = vadd.f32 %v2266, %v2390
        %v2417 = vadd.f32 %v2267, %v2395
        %v2418 = vadd.f32 %v2268, %v2400
        %v2419 = vadd.f32 %v2269, %v2405
        %v2420 = vadd.f32 %v2270, %v2410
        %v2421 = vld [vmem:[%s2120 + $0x2] sm:$0xff]
        %v2422 = vld [vmem:[%s2120 + $0x12] sm:$0xff]
        %v2423 = vld [vmem:[%s2120 + $0x22] sm:$0xff]
        %v2424 = vld [vmem:[%s2120 + $0x32] sm:$0xff]
        %v2425 = vld [vmem:[%s2120 + $0x42] sm:$0xff]
        %v2426 = vld [vmem:[%s2120 + $0x52] sm:$0xff]
        %v2427 = vld [vmem:[%s2120 + $0x62] sm:$0xff]
        %v2428 = vld [vmem:[%s2120 + $0x72] sm:$0xff]
        %s2429 = scalar_lea.vmem %s3, 56
        %v2430 = vld [vmem:[%s2429] sm:$0xf]
        %v2432 = vsel %vm352, %v2421, 0
        %v2435 = vsel %vm352, %v2422, 0
        %v2438 = vsel %vm352, %v2423, 0
        %v2441 = vsel %vm352, %v2424, 0
        %v2444 = vsel %vm352, %v2425, 0
        %v2447 = vsel %vm352, %v2426, 0
        %v2450 = vsel %vm352, %v2427, 0
        %v2453 = vsel %vm352, %v2428, 0
        %v2456 = vsel %vm377, %v2430, 0
        %2458 = vmatprep.subr.mxu0 0.0
        %2459 = vmatpush1.msra.mxu0 %v2456
        %2460 = vmatprep.subr.mxu0 0.0
        %2461 = vmatpush1.msra.mxu0 0.0
        %2462 = vmatprep.subr.mxu0 0.0
        %2463 = vmatpush1.msra.mxu0 0.0
        %2464 = vmatprep.subr.mxu0 0.0
        %2465 = vmatpush1.msra.mxu0 0.0
        %2466 = vmatprep.subr.mxu0 0.0
        %2467 = vmatpush1.msra.mxu0 0.0
        %2468 = vmatprep.subr.mxu0 0.0
        %2469 = vmatpush1.msra.mxu0 0.0
        %2470 = vmatprep.subr.mxu0 0.0
        %2471 = vmatpush1.msra.mxu0 0.0
        %2472 = vmatprep.subr.mxu0 0.0
        %2473 = vmatpush1.msra.mxu0 0.0
        %2474 = vmatprep.subr.mxu0 0.0
        %2475 = vmatpush1.msra.mxu0 0.0
        %2476 = vmatprep.subr.mxu0 0.0
        %2477 = vmatpush1.msra.mxu0 0.0
        %2478 = vmatprep.subr.mxu0 0.0
        %2479 = vmatpush1.msra.mxu0 0.0
        %2480 = vmatprep.subr.mxu0 0.0
        %2481 = vmatpush1.msra.mxu0 0.0
        %2482 = vmatprep.subr.mxu0 0.0
        %2483 = vmatpush1.msra.mxu0 0.0
        %2484 = vmatprep.subr.mxu0 0.0
        %2485 = vmatpush1.msra.mxu0 0.0
        %2486 = vmatprep.subr.mxu0 0.0
        %2487 = vmatpush1.msra.mxu0 0.0
        %2488 = vmatprep.subr.mxu0 0.0
        %2489 = vmatpush1.msra.mxu0 0.0
        %2490 = vmatprep.subr.mxu0 0.0
        %2491 = vmatpush1.msra.mxu0 0.0
        %2492 = vmatprep.subr.mxu0 0.0
        %2493 = vmatpush1.msra.mxu0 0.0
        %2494 = vmatprep.subr.mxu0 0.0
        %2495 = vmatpush1.msra.mxu0 0.0
        %2496 = vmatprep.subr.mxu0 0.0
        %2497 = vmatpush1.msra.mxu0 0.0
        %2498 = vmatprep.subr.mxu0 0.0
        %2499 = vmatpush1.msra.mxu0 0.0
        %2500 = vmatprep.subr.mxu0 0.0
        %2501 = vmatpush1.msra.mxu0 0.0
        %2502 = vmatprep.subr.mxu0 0.0
        %2503 = vmatpush1.msra.mxu0 0.0
        %2504 = vmatprep.subr.mxu0 0.0
        %2505 = vmatpush1.msra.mxu0 0.0
        %2506 = vmatprep.subr.mxu0 0.0
        %2507 = vmatpush1.msra.mxu0 0.0
        %2508 = vmatprep.subr.mxu0 0.0
        %2509 = vmatpush1.msra.mxu0 0.0
        %2510 = vmatprep.subr.mxu0 0.0
        %2511 = vmatpush1.msra.mxu0 0.0
        %2512 = vmatprep.subr.mxu0 0.0
        %2513 = vmatpush1.msra.mxu0 0.0
        %2514 = vmatprep.subr.mxu0 0.0
        %2515 = vmatpush1.msra.mxu0 0.0
        %2516 = vmatprep.subr.mxu0 0.0
        %2517 = vmatpush1.msra.mxu0 0.0
        %2518 = vmatprep.subr.mxu0 0.0
        %2519 = vmatpush1.msra.mxu0 0.0
        %2520 = vmatprep.subr.mxu0 0.0
        %2521 = vmatpush1.msra.mxu0 0.0
        %2522 = vmatprep.mubr.f32.mxu0 0.0
        %2523 = vmatmul.mubr.f32.gmra.mrb[0].mxu0 %v2432
        %v2524 = vpop.f32.mrb[0].mxu0
        %v2525 = vadd.f32 0.0, %v2524
        %v2526 = vpop.f32.mrb[0].mxu0
        %2527 = vmatprep.mubr.f32.mxu0 0.0
        %2528 = vmatmul.mubr.f32.gmra.mrb[0].mxu0 %v2435
        %v2529 = vpop.f32.mrb[0].mxu0
        %v2530 = vadd.f32 0.0, %v2529
        %v2531 = vpop.f32.mrb[0].mxu0
        %2532 = vmatprep.mubr.f32.mxu0 0.0
        %2533 = vmatmul.mubr.f32.gmra.mrb[0].mxu0 %v2438
        %v2534 = vpop.f32.mrb[0].mxu0
        %v2535 = vadd.f32 0.0, %v2534
        %v2536 = vpop.f32.mrb[0].mxu0
        %2537 = vmatprep.mubr.f32.mxu0 0.0
        %2538 = vmatmul.mubr.f32.gmra.mrb[0].mxu0 %v2441
        %v2539 = vpop.f32.mrb[0].mxu0
        %v2540 = vadd.f32 0.0, %v2539
        %v2541 = vpop.f32.mrb[0].mxu0
        %2542 = vmatprep.mubr.f32.mxu0 0.0
        %2543 = vmatmul.mubr.f32.gmra.mrb[0].mxu0 %v2444
        %v2544 = vpop.f32.mrb[0].mxu0
        %v2545 = vadd.f32 0.0, %v2544
        %v2546 = vpop.f32.mrb[0].mxu0
        %2547 = vmatprep.mubr.f32.mxu0 0.0
        %2548 = vmatmul.mubr.f32.gmra.mrb[0].mxu0 %v2447
        %v2549 = vpop.f32.mrb[0].mxu0
        %v2550 = vadd.f32 0.0, %v2549
        %v2551 = vpop.f32.mrb[0].mxu0
        %2552 = vmatprep.mubr.f32.mxu0 0.0
        %2553 = vmatmul.mubr.f32.gmra.mrb[0].mxu0 %v2450
        %v2554 = vpop.f32.mrb[0].mxu0
        %v2555 = vadd.f32 0.0, %v2554
        %v2556 = vpop.f32.mrb[0].mxu0
        %2557 = vmatprep.mubr.f32.mxu0 0.0
        %2558 = vmatmul.mubr.f32.gmra.mrb[0].mxu0 %v2453
        %v2559 = vpop.f32.mrb[0].mxu0
        %v2560 = vadd.f32 0.0, %v2559
        %v2561 = vpop.f32.mrb[0].mxu0
        %2562 = vdwg.mxu0
        %v2563 = vadd.f32 %v2413, %v2525
        %v2564 = vadd.f32 %v2414, %v2530
        %v2565 = vadd.f32 %v2415, %v2535
        %v2566 = vadd.f32 %v2416, %v2540
        %v2567 = vadd.f32 %v2417, %v2545
        %v2568 = vadd.f32 %v2418, %v2550
        %v2569 = vadd.f32 %v2419, %v2555
        %v2570 = vadd.f32 %v2420, %v2560
        %s2571 = scalar_lea.vmem %s320, 32
        %v2572 = vld [vmem:[%s2571] sm:$0xff]
        %v2573 = vld [vmem:[%s2571 + $0x10] sm:$0xff]
        %v2574 = vld [vmem:[%s2571 + $0x20] sm:$0xff]
        %v2575 = vld [vmem:[%s2571 + $0x30] sm:$0xff]
        %v2576 = vld [vmem:[%s2571 + $0x40] sm:$0xff]
        %v2577 = vld [vmem:[%s2571 + $0x50] sm:$0xff]
        %v2578 = vld [vmem:[%s2571 + $0x60] sm:$0xff]
        %v2579 = vld [vmem:[%s2571 + $0x70] sm:$0xff]
        %s2580 = scalar_lea.vmem %s3, 60
        %v2581 = vld [vmem:[%s2580] sm:$0xf]
        %v2583 = vsel %vm352, %v2572, 0
        %v2586 = vsel %vm352, %v2573, 0
        %v2589 = vsel %vm352, %v2574, 0
        %v2592 = vsel %vm352, %v2575, 0
        %v2595 = vsel %vm352, %v2576, 0
        %v2598 = vsel %vm352, %v2577, 0
        %v2601 = vsel %vm352, %v2578, 0
        %v2604 = vsel %vm352, %v2579, 0
        %v2607 = vsel %vm377, %v2581, 0
        %2609 = vmatprep.subr.mxu0 0.0
        %2610 = vmatpush1.msra.mxu0 %v2607
        %2611 = vmatprep.subr.mxu0 0.0
        %2612 = vmatpush1.msra.mxu0 0.0
        %2613 = vmatprep.subr.mxu0 0.0
        %2614 = vmatpush1.msra.mxu0 0.0
        %2615 = vmatprep.subr.mxu0 0.0
        %2616 = vmatpush1.msra.mxu0 0.0
        %2617 = vmatprep.subr.mxu0 0.0
        %2618 = vmatpush1.msra.mxu0 0.0
        %2619 = vmatprep.subr.mxu0 0.0
        %2620 = vmatpush1.msra.mxu0 0.0
        %2621 = vmatprep.subr.mxu0 0.0
        %2622 = vmatpush1.msra.mxu0 0.0
        %2623 = vmatprep.subr.mxu0 0.0
        %2624 = vmatpush1.msra.mxu0 0.0
        %2625 = vmatprep.subr.mxu0 0.0
        %2626 = vmatpush1.msra.mxu0 0.0
        %2627 = vmatprep.subr.mxu0 0.0
        %2628 = vmatpush1.msra.mxu0 0.0
        %2629 = vmatprep.subr.mxu0 0.0
        %2630 = vmatpush1.msra.mxu0 0.0
        %2631 = vmatprep.subr.mxu0 0.0
        %2632 = vmatpush1.msra.mxu0 0.0
        %2633 = vmatprep.subr.mxu0 0.0
        %2634 = vmatpush1.msra.mxu0 0.0
        %2635 = vmatprep.subr.mxu0 0.0
        %2636 = vmatpush1.msra.mxu0 0.0
        %2637 = vmatprep.subr.mxu0 0.0
        %2638 = vmatpush1.msra.mxu0 0.0
        %2639 = vmatprep.subr.mxu0 0.0
        %2640 = vmatpush1.msra.mxu0 0.0
        %2641 = vmatprep.subr.mxu0 0.0
        %2642 = vmatpush1.msra.mxu0 0.0
        %2643 = vmatprep.subr.mxu0 0.0
        %2644 = vmatpush1.msra.mxu0 0.0
        %2645 = vmatprep.subr.mxu0 0.0
        %2646 = vmatpush1.msra.mxu0 0.0
        %2647 = vmatprep.subr.mxu0 0.0
        %2648 = vmatpush1.msra.mxu0 0.0
        %2649 = vmatprep.subr.mxu0 0.0
        %2650 = vmatpush1.msra.mxu0 0.0
        %2651 = vmatprep.subr.mxu0 0.0
        %2652 = vmatpush1.msra.mxu0 0.0
        %2653 = vmatprep.subr.mxu0 0.0
        %2654 = vmatpush1.msra.mxu0 0.0
        %2655 = vmatprep.subr.mxu0 0.0
        %2656 = vmatpush1.msra.mxu0 0.0
        %2657 = vmatprep.subr.mxu0 0.0
        %2658 = vmatpush1.msra.mxu0 0.0
        %2659 = vmatprep.subr.mxu0 0.0
        %2660 = vmatpush1.msra.mxu0 0.0
        %2661 = vmatprep.subr.mxu0 0.0
        %2662 = vmatpush1.msra.mxu0 0.0
        %2663 = vmatprep.subr.mxu0 0.0
        %2664 = vmatpush1.msra.mxu0 0.0
        %2665 = vmatprep.subr.mxu0 0.0
        %2666 = vmatpush1.msra.mxu0 0.0
        %2667 = vmatprep.subr.mxu0 0.0
        %2668 = vmatpush1.msra.mxu0 0.0
        %2669 = vmatprep.subr.mxu0 0.0
        %2670 = vmatpush1.msra.mxu0 0.0
        %2671 = vmatprep.subr.mxu0 0.0
        %2672 = vmatpush1.msra.mxu0 0.0
        %2673 = vmatprep.mubr.f32.mxu0 0.0
        %2674 = vmatmul.mubr.f32.gmra.mrb[0].mxu0 %v2583
        %v2675 = vpop.f32.mrb[0].mxu0
        %v2676 = vadd.f32 0.0, %v2675
        %v2677 = vpop.f32.mrb[0].mxu0
        %2678 = vmatprep.mubr.f32.mxu0 0.0
        %2679 = vmatmul.mubr.f32.gmra.mrb[0].mxu0 %v2586
        %v2680 = vpop.f32.mrb[0].mxu0
        %v2681 = vadd.f32 0.0, %v2680
        %v2682 = vpop.f32.mrb[0].mxu0
        %2683 = vmatprep.mubr.f32.mxu0 0.0
        %2684 = vmatmul.mubr.f32.gmra.mrb[0].mxu0 %v2589
        %v2685 = vpop.f32.mrb[0].mxu0
        %v2686 = vadd.f32 0.0, %v2685
        %v2687 = vpop.f32.mrb[0].mxu0
        %2688 = vmatprep.mubr.f32.mxu0 0.0
        %2689 = vmatmul.mubr.f32.gmra.mrb[0].mxu0 %v2592
        %v2690 = vpop.f32.mrb[0].mxu0
        %v2691 = vadd.f32 0.0, %v2690
        %v2692 = vpop.f32.mrb[0].mxu0
        %2693 = vmatprep.mubr.f32.mxu0 0.0
        %2694 = vmatmul.mubr.f32.gmra.mrb[0].mxu0 %v2595
        %v2695 = vpop.f32.mrb[0].mxu0
        %v2696 = vadd.f32 0.0, %v2695
        %v2697 = vpop.f32.mrb[0].mxu0
        %2698 = vmatprep.mubr.f32.mxu0 0.0
        %2699 = vmatmul.mubr.f32.gmra.mrb[0].mxu0 %v2598
        %v2700 = vpop.f32.mrb[0].mxu0
        %v2701 = vadd.f32 0.0, %v2700
        %v2702 = vpop.f32.mrb[0].mxu0
        %2703 = vmatprep.mubr.f32.mxu0 0.0
        %2704 = vmatmul.mubr.f32.gmra.mrb[0].mxu0 %v2601
        %v2705 = vpop.f32.mrb[0].mxu0
        %v2706 = vadd.f32 0.0, %v2705
        %v2707 = vpop.f32.mrb[0].mxu0
        %2708 = vmatprep.mubr.f32.mxu0 0.0
        %2709 = vmatmul.mubr.f32.gmra.mrb[0].mxu0 %v2604
        %v2710 = vpop.f32.mrb[0].mxu0
        %v2711 = vadd.f32 0.0, %v2710
        %v2712 = vpop.f32.mrb[0].mxu0
        %2713 = vdwg.mxu0
        %v2714 = vadd.f32 %v2563, %v2676
        %v2715 = vadd.f32 %v2564, %v2681
        %v2716 = vadd.f32 %v2565, %v2686
        %v2717 = vadd.f32 %v2566, %v2691
        %v2718 = vadd.f32 %v2567, %v2696
        %v2719 = vadd.f32 %v2568, %v2701
        %v2720 = vadd.f32 %v2569, %v2706
        %v2721 = vadd.f32 %v2570, %v2711
        %v2722 = vld [vmem:[%s2571 + $0x1] sm:$0xff]
        %v2723 = vld [vmem:[%s2571 + $0x11] sm:$0xff]
        %v2724 = vld [vmem:[%s2571 + $0x21] sm:$0xff]
        %v2725 = vld [vmem:[%s2571 + $0x31] sm:$0xff]
        %v2726 = vld [vmem:[%s2571 + $0x41] sm:$0xff]
        %v2727 = vld [vmem:[%s2571 + $0x51] sm:$0xff]
        %v2728 = vld [vmem:[%s2571 + $0x61] sm:$0xff]
        %v2729 = vld [vmem:[%s2571 + $0x71] sm:$0xff]
        %s2730 = scalar_lea.vmem %s3, 64
        %v2731 = vld [vmem:[%s2730] sm:$0xf]
        %v2733 = vsel %vm352, %v2722, 0
        %v2736 = vsel %vm352, %v2723, 0
        %v2739 = vsel %vm352, %v2724, 0
        %v2742 = vsel %vm352, %v2725, 0
        %v2745 = vsel %vm352, %v2726, 0
        %v2748 = vsel %vm352, %v2727, 0
        %v2751 = vsel %vm352, %v2728, 0
        %v2754 = vsel %vm352, %v2729, 0
        %v2757 = vsel %vm377, %v2731, 0
        %2759 = vmatprep.subr.mxu0 0.0
        %2760 = vmatpush1.msra.mxu0 %v2757
        %2761 = vmatprep.subr.mxu0 0.0
        %2762 = vmatpush1.msra.mxu0 0.0
        %2763 = vmatprep.subr.mxu0 0.0
        %2764 = vmatpush1.msra.mxu0 0.0
        %2765 = vmatprep.subr.mxu0 0.0
        %2766 = vmatpush1.msra.mxu0 0.0
        %2767 = vmatprep.subr.mxu0 0.0
        %2768 = vmatpush1.msra.mxu0 0.0
        %2769 = vmatprep.subr.mxu0 0.0
        %2770 = vmatpush1.msra.mxu0 0.0
        %2771 = vmatprep.subr.mxu0 0.0
        %2772 = vmatpush1.msra.mxu0 0.0
        %2773 = vmatprep.subr.mxu0 0.0
        %2774 = vmatpush1.msra.mxu0 0.0
        %2775 = vmatprep.subr.mxu0 0.0
        %2776 = vmatpush1.msra.mxu0 0.0
        %2777 = vmatprep.subr.mxu0 0.0
        %2778 = vmatpush1.msra.mxu0 0.0
        %2779 = vmatprep.subr.mxu0 0.0
        %2780 = vmatpush1.msra.mxu0 0.0
        %2781 = vmatprep.subr.mxu0 0.0
        %2782 = vmatpush1.msra.mxu0 0.0
        %2783 = vmatprep.subr.mxu0 0.0
        %2784 = vmatpush1.msra.mxu0 0.0
        %2785 = vmatprep.subr.mxu0 0.0
        %2786 = vmatpush1.msra.mxu0 0.0
        %2787 = vmatprep.subr.mxu0 0.0
        %2788 = vmatpush1.msra.mxu0 0.0
        %2789 = vmatprep.subr.mxu0 0.0
        %2790 = vmatpush1.msra.mxu0 0.0
        %2791 = vmatprep.subr.mxu0 0.0
        %2792 = vmatpush1.msra.mxu0 0.0
        %2793 = vmatprep.subr.mxu0 0.0
        %2794 = vmatpush1.msra.mxu0 0.0
        %2795 = vmatprep.subr.mxu0 0.0
        %2796 = vmatpush1.msra.mxu0 0.0
        %2797 = vmatprep.subr.mxu0 0.0
        %2798 = vmatpush1.msra.mxu0 0.0
        %2799 = vmatprep.subr.mxu0 0.0
        %2800 = vmatpush1.msra.mxu0 0.0
        %2801 = vmatprep.subr.mxu0 0.0
        %2802 = vmatpush1.msra.mxu0 0.0
        %2803 = vmatprep.subr.mxu0 0.0
        %2804 = vmatpush1.msra.mxu0 0.0
        %2805 = vmatprep.subr.mxu0 0.0
        %2806 = vmatpush1.msra.mxu0 0.0
        %2807 = vmatprep.subr.mxu0 0.0
        %2808 = vmatpush1.msra.mxu0 0.0
        %2809 = vmatprep.subr.mxu0 0.0
        %2810 = vmatpush1.msra.mxu0 0.0
        %2811 = vmatprep.subr.mxu0 0.0
        %2812 = vmatpush1.msra.mxu0 0.0
        %2813 = vmatprep.subr.mxu0 0.0
        %2814 = vmatpush1.msra.mxu0 0.0
        %2815 = vmatprep.subr.mxu0 0.0
        %2816 = vmatpush1.msra.mxu0 0.0
        %2817 = vmatprep.subr.mxu0 0.0
        %2818 = vmatpush1.msra.mxu0 0.0
        %2819 = vmatprep.subr.mxu0 0.0
        %2820 = vmatpush1.msra.mxu0 0.0
        %2821 = vmatprep.subr.mxu0 0.0
        %2822 = vmatpush1.msra.mxu0 0.0
        %2823 = vmatprep.mubr.f32.mxu0 0.0
        %2824 = vmatmul.mubr.f32.gmra.mrb[0].mxu0 %v2733
        %v2825 = vpop.f32.mrb[0].mxu0
        %v2826 = vadd.f32 0.0, %v2825
        %v2827 = vpop.f32.mrb[0].mxu0
        %2828 = vmatprep.mubr.f32.mxu0 0.0
        %2829 = vmatmul.mubr.f32.gmra.mrb[0].mxu0 %v2736
        %v2830 = vpop.f32.mrb[0].mxu0
        %v2831 = vadd.f32 0.0, %v2830
        %v2832 = vpop.f32.mrb[0].mxu0
        %2833 = vmatprep.mubr.f32.mxu0 0.0
        %2834 = vmatmul.mubr.f32.gmra.mrb[0].mxu0 %v2739
        %v2835 = vpop.f32.mrb[0].mxu0
        %v2836 = vadd.f32 0.0, %v2835
        %v2837 = vpop.f32.mrb[0].mxu0
        %2838 = vmatprep.mubr.f32.mxu0 0.0
        %2839 = vmatmul.mubr.f32.gmra.mrb[0].mxu0 %v2742
        %v2840 = vpop.f32.mrb[0].mxu0
        %v2841 = vadd.f32 0.0, %v2840
        %v2842 = vpop.f32.mrb[0].mxu0
        %2843 = vmatprep.mubr.f32.mxu0 0.0
        %2844 = vmatmul.mubr.f32.gmra.mrb[0].mxu0 %v2745
        %v2845 = vpop.f32.mrb[0].mxu0
        %v2846 = vadd.f32 0.0, %v2845
        %v2847 = vpop.f32.mrb[0].mxu0
        %2848 = vmatprep.mubr.f32.mxu0 0.0
        %2849 = vmatmul.mubr.f32.gmra.mrb[0].mxu0 %v2748
        %v2850 = vpop.f32.mrb[0].mxu0
        %v2851 = vadd.f32 0.0, %v2850
        %v2852 = vpop.f32.mrb[0].mxu0
        %2853 = vmatprep.mubr.f32.mxu0 0.0
        %2854 = vmatmul.mubr.f32.gmra.mrb[0].mxu0 %v2751
        %v2855 = vpop.f32.mrb[0].mxu0
        %v2856 = vadd.f32 0.0, %v2855
        %v2857 = vpop.f32.mrb[0].mxu0
        %2858 = vmatprep.mubr.f32.mxu0 0.0
        %2859 = vmatmul.mubr.f32.gmra.mrb[0].mxu0 %v2754
        %v2860 = vpop.f32.mrb[0].mxu0
        %v2861 = vadd.f32 0.0, %v2860
        %v2862 = vpop.f32.mrb[0].mxu0
        %2863 = vdwg.mxu0
        %v2864 = vadd.f32 %v2714, %v2826
        %v2865 = vadd.f32 %v2715, %v2831
        %v2866 = vadd.f32 %v2716, %v2836
        %v2867 = vadd.f32 %v2717, %v2841
        %v2868 = vadd.f32 %v2718, %v2846
        %v2869 = vadd.f32 %v2719, %v2851
        %v2870 = vadd.f32 %v2720, %v2856
        %v2871 = vadd.f32 %v2721, %v2861
        %v2872 = vld [vmem:[%s2571 + $0x2] sm:$0xff]
        %v2873 = vld [vmem:[%s2571 + $0x12] sm:$0xff]
        %v2874 = vld [vmem:[%s2571 + $0x22] sm:$0xff]
        %v2875 = vld [vmem:[%s2571 + $0x32] sm:$0xff]
        %v2876 = vld [vmem:[%s2571 + $0x42] sm:$0xff]
        %v2877 = vld [vmem:[%s2571 + $0x52] sm:$0xff]
        %v2878 = vld [vmem:[%s2571 + $0x62] sm:$0xff]
        %v2879 = vld [vmem:[%s2571 + $0x72] sm:$0xff]
        %s2880 = scalar_lea.vmem %s3, 68
        %v2881 = vld [vmem:[%s2880] sm:$0xf]
        %v2883 = vsel %vm352, %v2872, 0
        %v2886 = vsel %vm352, %v2873, 0
        %v2889 = vsel %vm352, %v2874, 0
        %v2892 = vsel %vm352, %v2875, 0
        %v2895 = vsel %vm352, %v2876, 0
        %v2898 = vsel %vm352, %v2877, 0
        %v2901 = vsel %vm352, %v2878, 0
        %v2904 = vsel %vm352, %v2879, 0
        %v2907 = vsel %vm377, %v2881, 0
        %2909 = vmatprep.subr.mxu0 0.0
        %2910 = vmatpush1.msra.mxu0 %v2907
        %2911 = vmatprep.subr.mxu0 0.0
        %2912 = vmatpush1.msra.mxu0 0.0
        %2913 = vmatprep.subr.mxu0 0.0
        %2914 = vmatpush1.msra.mxu0 0.0
        %2915 = vmatprep.subr.mxu0 0.0
        %2916 = vmatpush1.msra.mxu0 0.0
        %2917 = vmatprep.subr.mxu0 0.0
        %2918 = vmatpush1.msra.mxu0 0.0
        %2919 = vmatprep.subr.mxu0 0.0
        %2920 = vmatpush1.msra.mxu0 0.0
        %2921 = vmatprep.subr.mxu0 0.0
        %2922 = vmatpush1.msra.mxu0 0.0
        %2923 = vmatprep.subr.mxu0 0.0
        %2924 = vmatpush1.msra.mxu0 0.0
        %2925 = vmatprep.subr.mxu0 0.0
        %2926 = vmatpush1.msra.mxu0 0.0
        %2927 = vmatprep.subr.mxu0 0.0
        %2928 = vmatpush1.msra.mxu0 0.0
        %2929 = vmatprep.subr.mxu0 0.0
        %2930 = vmatpush1.msra.mxu0 0.0
        %2931 = vmatprep.subr.mxu0 0.0
        %2932 = vmatpush1.msra.mxu0 0.0
        %2933 = vmatprep.subr.mxu0 0.0
        %2934 = vmatpush1.msra.mxu0 0.0
        %2935 = vmatprep.subr.mxu0 0.0
        %2936 = vmatpush1.msra.mxu0 0.0
        %2937 = vmatprep.subr.mxu0 0.0
        %2938 = vmatpush1.msra.mxu0 0.0
        %2939 = vmatprep.subr.mxu0 0.0
        %2940 = vmatpush1.msra.mxu0 0.0
        %2941 = vmatprep.subr.mxu0 0.0
        %2942 = vmatpush1.msra.mxu0 0.0
        %2943 = vmatprep.subr.mxu0 0.0
        %2944 = vmatpush1.msra.mxu0 0.0
        %2945 = vmatprep.subr.mxu0 0.0
        %2946 = vmatpush1.msra.mxu0 0.0
        %2947 = vmatprep.subr.mxu0 0.0
        %2948 = vmatpush1.msra.mxu0 0.0
        %2949 = vmatprep.subr.mxu0 0.0
        %2950 = vmatpush1.msra.mxu0 0.0
        %2951 = vmatprep.subr.mxu0 0.0
        %2952 = vmatpush1.msra.mxu0 0.0
        %2953 = vmatprep.subr.mxu0 0.0
        %2954 = vmatpush1.msra.mxu0 0.0
        %2955 = vmatprep.subr.mxu0 0.0
        %2956 = vmatpush1.msra.mxu0 0.0
        %2957 = vmatprep.subr.mxu0 0.0
        %2958 = vmatpush1.msra.mxu0 0.0
        %2959 = vmatprep.subr.mxu0 0.0
        %2960 = vmatpush1.msra.mxu0 0.0
        %2961 = vmatprep.subr.mxu0 0.0
        %2962 = vmatpush1.msra.mxu0 0.0
        %2963 = vmatprep.subr.mxu0 0.0
        %2964 = vmatpush1.msra.mxu0 0.0
        %2965 = vmatprep.subr.mxu0 0.0
        %2966 = vmatpush1.msra.mxu0 0.0
        %2967 = vmatprep.subr.mxu0 0.0
        %2968 = vmatpush1.msra.mxu0 0.0
        %2969 = vmatprep.subr.mxu0 0.0
        %2970 = vmatpush1.msra.mxu0 0.0
        %2971 = vmatprep.subr.mxu0 0.0
        %2972 = vmatpush1.msra.mxu0 0.0
        %2973 = vmatprep.mubr.f32.mxu0 0.0
        %2974 = vmatmul.mubr.f32.gmra.mrb[0].mxu0 %v2883
        %v2975 = vpop.f32.mrb[0].mxu0
        %v2976 = vadd.f32 0.0, %v2975
        %v2977 = vpop.f32.mrb[0].mxu0
        %2978 = vmatprep.mubr.f32.mxu0 0.0
        %2979 = vmatmul.mubr.f32.gmra.mrb[0].mxu0 %v2886
        %v2980 = vpop.f32.mrb[0].mxu0
        %v2981 = vadd.f32 0.0, %v2980
        %v2982 = vpop.f32.mrb[0].mxu0
        %2983 = vmatprep.mubr.f32.mxu0 0.0
        %2984 = vmatmul.mubr.f32.gmra.mrb[0].mxu0 %v2889
        %v2985 = vpop.f32.mrb[0].mxu0
        %v2986 = vadd.f32 0.0, %v2985
        %v2987 = vpop.f32.mrb[0].mxu0
        %2988 = vmatprep.mubr.f32.mxu0 0.0
        %2989 = vmatmul.mubr.f32.gmra.mrb[0].mxu0 %v2892
        %v2990 = vpop.f32.mrb[0].mxu0
        %v2991 = vadd.f32 0.0, %v2990
        %v2992 = vpop.f32.mrb[0].mxu0
        %2993 = vmatprep.mubr.f32.mxu0 0.0
        %2994 = vmatmul.mubr.f32.gmra.mrb[0].mxu0 %v2895
        %v2995 = vpop.f32.mrb[0].mxu0
        %v2996 = vadd.f32 0.0, %v2995
        %v2997 = vpop.f32.mrb[0].mxu0
        %2998 = vmatprep.mubr.f32.mxu0 0.0
        %2999 = vmatmul.mubr.f32.gmra.mrb[0].mxu0 %v2898
        %v3000 = vpop.f32.mrb[0].mxu0
        %v3001 = vadd.f32 0.0, %v3000
        %v3002 = vpop.f32.mrb[0].mxu0
        %3003 = vmatprep.mubr.f32.mxu0 0.0
        %3004 = vmatmul.mubr.f32.gmra.mrb[0].mxu0 %v2901
        %v3005 = vpop.f32.mrb[0].mxu0
        %v3006 = vadd.f32 0.0, %v3005
        %v3007 = vpop.f32.mrb[0].mxu0
        %3008 = vmatprep.mubr.f32.mxu0 0.0
        %3009 = vmatmul.mubr.f32.gmra.mrb[0].mxu0 %v2904
        %v3010 = vpop.f32.mrb[0].mxu0
        %v3011 = vadd.f32 0.0, %v3010
        %v3012 = vpop.f32.mrb[0].mxu0
        %3013 = vdwg.mxu0
        %v3014 = vadd.f32 %v2864, %v2976
        %v3015 = vadd.f32 %v2865, %v2981
        %v3016 = vadd.f32 %v2866, %v2986
        %v3017 = vadd.f32 %v2867, %v2991
        %v3018 = vadd.f32 %v2868, %v2996
        %v3019 = vadd.f32 %v2869, %v3001
        %v3020 = vadd.f32 %v2870, %v3006
        %v3021 = vadd.f32 %v2871, %v3011
        %v3022 = vld [vmem:[%s331] sm:$0xff]
        %v3023 = vld [vmem:[%s331 + $0x10] sm:$0xff]
        %v3024 = vld [vmem:[%s331 + $0x20] sm:$0xff]
        %v3025 = vld [vmem:[%s331 + $0x30] sm:$0xff]
        %v3026 = vld [vmem:[%s331 + $0x40] sm:$0xff]
        %v3027 = vld [vmem:[%s331 + $0x50] sm:$0xff]
        %v3028 = vld [vmem:[%s331 + $0x60] sm:$0xff]
        %v3029 = vld [vmem:[%s331 + $0x70] sm:$0xff]
        %s3030 = scalar_lea.vmem %s3, 72
        %v3031 = vld [vmem:[%s3030] sm:$0xf]
        %v3033 = vsel %vm352, %v3022, 0
        %v3036 = vsel %vm352, %v3023, 0
        %v3039 = vsel %vm352, %v3024, 0
        %v3042 = vsel %vm352, %v3025, 0
        %v3045 = vsel %vm352, %v3026, 0
        %v3048 = vsel %vm352, %v3027, 0
        %v3051 = vsel %vm352, %v3028, 0
        %v3054 = vsel %vm352, %v3029, 0
        %v3057 = vsel %vm377, %v3031, 0
        %3059 = vmatprep.subr.mxu0 0.0
        %3060 = vmatpush1.msra.mxu0 %v3057
        %3061 = vmatprep.subr.mxu0 0.0
        %3062 = vmatpush1.msra.mxu0 0.0
        %3063 = vmatprep.subr.mxu0 0.0
        %3064 = vmatpush1.msra.mxu0 0.0
        %3065 = vmatprep.subr.mxu0 0.0
        %3066 = vmatpush1.msra.mxu0 0.0
        %3067 = vmatprep.subr.mxu0 0.0
        %3068 = vmatpush1.msra.mxu0 0.0
        %3069 = vmatprep.subr.mxu0 0.0
        %3070 = vmatpush1.msra.mxu0 0.0
        %3071 = vmatprep.subr.mxu0 0.0
        %3072 = vmatpush1.msra.mxu0 0.0
        %3073 = vmatprep.subr.mxu0 0.0
        %3074 = vmatpush1.msra.mxu0 0.0
        %3075 = vmatprep.subr.mxu0 0.0
        %3076 = vmatpush1.msra.mxu0 0.0
        %3077 = vmatprep.subr.mxu0 0.0
        %3078 = vmatpush1.msra.mxu0 0.0
        %3079 = vmatprep.subr.mxu0 0.0
        %3080 = vmatpush1.msra.mxu0 0.0
        %3081 = vmatprep.subr.mxu0 0.0
        %3082 = vmatpush1.msra.mxu0 0.0
        %3083 = vmatprep.subr.mxu0 0.0
        %3084 = vmatpush1.msra.mxu0 0.0
        %3085 = vmatprep.subr.mxu0 0.0
        %3086 = vmatpush1.msra.mxu0 0.0
        %3087 = vmatprep.subr.mxu0 0.0
        %3088 = vmatpush1.msra.mxu0 0.0
        %3089 = vmatprep.subr.mxu0 0.0
        %3090 = vmatpush1.msra.mxu0 0.0
        %3091 = vmatprep.subr.mxu0 0.0
        %3092 = vmatpush1.msra.mxu0 0.0
        %3093 = vmatprep.subr.mxu0 0.0
        %3094 = vmatpush1.msra.mxu0 0.0
        %3095 = vmatprep.subr.mxu0 0.0
        %3096 = vmatpush1.msra.mxu0 0.0
        %3097 = vmatprep.subr.mxu0 0.0
        %3098 = vmatpush1.msra.mxu0 0.0
        %3099 = vmatprep.subr.mxu0 0.0
        %3100 = vmatpush1.msra.mxu0 0.0
        %3101 = vmatprep.subr.mxu0 0.0
        %3102 = vmatpush1.msra.mxu0 0.0
        %3103 = vmatprep.subr.mxu0 0.0
        %3104 = vmatpush1.msra.mxu0 0.0
        %3105 = vmatprep.subr.mxu0 0.0
        %3106 = vmatpush1.msra.mxu0 0.0
        %3107 = vmatprep.subr.mxu0 0.0
        %3108 = vmatpush1.msra.mxu0 0.0
        %3109 = vmatprep.subr.mxu0 0.0
        %3110 = vmatpush1.msra.mxu0 0.0
        %3111 = vmatprep.subr.mxu0 0.0
        %3112 = vmatpush1.msra.mxu0 0.0
        %3113 = vmatprep.subr.mxu0 0.0
        %3114 = vmatpush1.msra.mxu0 0.0
        %3115 = vmatprep.subr.mxu0 0.0
        %3116 = vmatpush1.msra.mxu0 0.0
        %3117 = vmatprep.subr.mxu0 0.0
        %3118 = vmatpush1.msra.mxu0 0.0
        %3119 = vmatprep.subr.mxu0 0.0
        %3120 = vmatpush1.msra.mxu0 0.0
        %3121 = vmatprep.subr.mxu0 0.0
        %3122 = vmatpush1.msra.mxu0 0.0
        %3123 = vmatprep.mubr.f32.mxu0 0.0
        %3124 = vmatmul.mubr.f32.gmra.mrb[0].mxu0 %v3033
        %v3125 = vpop.f32.mrb[0].mxu0
        %v3126 = vadd.f32 0.0, %v3125
        %v3127 = vpop.f32.mrb[0].mxu0
        %3128 = vmatprep.mubr.f32.mxu0 0.0
        %3129 = vmatmul.mubr.f32.gmra.mrb[0].mxu0 %v3036
        %v3130 = vpop.f32.mrb[0].mxu0
        %v3131 = vadd.f32 0.0, %v3130
        %v3132 = vpop.f32.mrb[0].mxu0
        %3133 = vmatprep.mubr.f32.mxu0 0.0
        %3134 = vmatmul.mubr.f32.gmra.mrb[0].mxu0 %v3039
        %v3135 = vpop.f32.mrb[0].mxu0
        %v3136 = vadd.f32 0.0, %v3135
        %v3137 = vpop.f32.mrb[0].mxu0
        %3138 = vmatprep.mubr.f32.mxu0 0.0
        %3139 = vmatmul.mubr.f32.gmra.mrb[0].mxu0 %v3042
        %v3140 = vpop.f32.mrb[0].mxu0
        %v3141 = vadd.f32 0.0, %v3140
        %v3142 = vpop.f32.mrb[0].mxu0
        %3143 = vmatprep.mubr.f32.mxu0 0.0
        %3144 = vmatmul.mubr.f32.gmra.mrb[0].mxu0 %v3045
        %v3145 = vpop.f32.mrb[0].mxu0
        %v3146 = vadd.f32 0.0, %v3145
        %v3147 = vpop.f32.mrb[0].mxu0
        %3148 = vmatprep.mubr.f32.mxu0 0.0
        %3149 = vmatmul.mubr.f32.gmra.mrb[0].mxu0 %v3048
        %v3150 = vpop.f32.mrb[0].mxu0
        %v3151 = vadd.f32 0.0, %v3150
        %v3152 = vpop.f32.mrb[0].mxu0
        %3153 = vmatprep.mubr.f32.mxu0 0.0
        %3154 = vmatmul.mubr.f32.gmra.mrb[0].mxu0 %v3051
        %v3155 = vpop.f32.mrb[0].mxu0
        %v3156 = vadd.f32 0.0, %v3155
        %v3157 = vpop.f32.mrb[0].mxu0
        %3158 = vmatprep.mubr.f32.mxu0 0.0
        %3159 = vmatmul.mubr.f32.gmra.mrb[0].mxu0 %v3054
        %v3160 = vpop.f32.mrb[0].mxu0
        %v3161 = vadd.f32 0.0, %v3160
        %v3162 = vpop.f32.mrb[0].mxu0
        %3163 = vdwg.mxu0
        %v3164 = vadd.f32 %v3014, %v3126
        %v3165 = vadd.f32 %v3015, %v3131
        %v3166 = vadd.f32 %v3016, %v3136
        %v3167 = vadd.f32 %v3017, %v3141
        %v3168 = vadd.f32 %v3018, %v3146
        %v3169 = vadd.f32 %v3019, %v3151
        %v3170 = vadd.f32 %v3020, %v3156
        %v3171 = vadd.f32 %v3021, %v3161
        %v3172 = vld [vmem:[%s331 + $0x1] sm:$0xff]
        %v3173 = vld [vmem:[%s331 + $0x11] sm:$0xff]
        %v3174 = vld [vmem:[%s331 + $0x21] sm:$0xff]
        %v3175 = vld [vmem:[%s331 + $0x31] sm:$0xff]
        %v3176 = vld [vmem:[%s331 + $0x41] sm:$0xff]
        %v3177 = vld [vmem:[%s331 + $0x51] sm:$0xff]
        %v3178 = vld [vmem:[%s331 + $0x61] sm:$0xff]
        %v3179 = vld [vmem:[%s331 + $0x71] sm:$0xff]
        %s3180 = scalar_lea.vmem %s3, 76
        %v3181 = vld [vmem:[%s3180] sm:$0xf]
        %v3183 = vsel %vm352, %v3172, 0
        %v3186 = vsel %vm352, %v3173, 0
        %v3189 = vsel %vm352, %v3174, 0
        %v3192 = vsel %vm352, %v3175, 0
        %v3195 = vsel %vm352, %v3176, 0
        %v3198 = vsel %vm352, %v3177, 0
        %v3201 = vsel %vm352, %v3178, 0
        %v3204 = vsel %vm352, %v3179, 0
        %v3207 = vsel %vm377, %v3181, 0
        %3209 = vmatprep.subr.mxu0 0.0
        %3210 = vmatpush1.msra.mxu0 %v3207
        %3211 = vmatprep.subr.mxu0 0.0
        %3212 = vmatpush1.msra.mxu0 0.0
        %3213 = vmatprep.subr.mxu0 0.0
        %3214 = vmatpush1.msra.mxu0 0.0
        %3215 = vmatprep.subr.mxu0 0.0
        %3216 = vmatpush1.msra.mxu0 0.0
        %3217 = vmatprep.subr.mxu0 0.0
        %3218 = vmatpush1.msra.mxu0 0.0
        %3219 = vmatprep.subr.mxu0 0.0
        %3220 = vmatpush1.msra.mxu0 0.0
        %3221 = vmatprep.subr.mxu0 0.0
        %3222 = vmatpush1.msra.mxu0 0.0
        %3223 = vmatprep.subr.mxu0 0.0
        %3224 = vmatpush1.msra.mxu0 0.0
        %3225 = vmatprep.subr.mxu0 0.0
        %3226 = vmatpush1.msra.mxu0 0.0
        %3227 = vmatprep.subr.mxu0 0.0
        %3228 = vmatpush1.msra.mxu0 0.0
        %3229 = vmatprep.subr.mxu0 0.0
        %3230 = vmatpush1.msra.mxu0 0.0
        %3231 = vmatprep.subr.mxu0 0.0
        %3232 = vmatpush1.msra.mxu0 0.0
        %3233 = vmatprep.subr.mxu0 0.0
        %3234 = vmatpush1.msra.mxu0 0.0
        %3235 = vmatprep.subr.mxu0 0.0
        %3236 = vmatpush1.msra.mxu0 0.0
        %3237 = vmatprep.subr.mxu0 0.0
        %3238 = vmatpush1.msra.mxu0 0.0
        %3239 = vmatprep.subr.mxu0 0.0
        %3240 = vmatpush1.msra.mxu0 0.0
        %3241 = vmatprep.subr.mxu0 0.0
        %3242 = vmatpush1.msra.mxu0 0.0
        %3243 = vmatprep.subr.mxu0 0.0
        %3244 = vmatpush1.msra.mxu0 0.0
        %3245 = vmatprep.subr.mxu0 0.0
        %3246 = vmatpush1.msra.mxu0 0.0
        %3247 = vmatprep.subr.mxu0 0.0
        %3248 = vmatpush1.msra.mxu0 0.0
        %3249 = vmatprep.subr.mxu0 0.0
        %3250 = vmatpush1.msra.mxu0 0.0
        %3251 = vmatprep.subr.mxu0 0.0
        %3252 = vmatpush1.msra.mxu0 0.0
        %3253 = vmatprep.subr.mxu0 0.0
        %3254 = vmatpush1.msra.mxu0 0.0
        %3255 = vmatprep.subr.mxu0 0.0
        %3256 = vmatpush1.msra.mxu0 0.0
        %3257 = vmatprep.subr.mxu0 0.0
        %3258 = vmatpush1.msra.mxu0 0.0
        %3259 = vmatprep.subr.mxu0 0.0
        %3260 = vmatpush1.msra.mxu0 0.0
        %3261 = vmatprep.subr.mxu0 0.0
        %3262 = vmatpush1.msra.mxu0 0.0
        %3263 = vmatprep.subr.mxu0 0.0
        %3264 = vmatpush1.msra.mxu0 0.0
        %3265 = vmatprep.subr.mxu0 0.0
        %3266 = vmatpush1.msra.mxu0 0.0
        %3267 = vmatprep.subr.mxu0 0.0
        %3268 = vmatpush1.msra.mxu0 0.0
        %3269 = vmatprep.subr.mxu0 0.0
        %3270 = vmatpush1.msra.mxu0 0.0
        %3271 = vmatprep.subr.mxu0 0.0
        %3272 = vmatpush1.msra.mxu0 0.0
        %3273 = vmatprep.mubr.f32.mxu0 0.0
        %3274 = vmatmul.mubr.f32.gmra.mrb[0].mxu0 %v3183
        %v3275 = vpop.f32.mrb[0].mxu0
        %v3276 = vadd.f32 0.0, %v3275
        %v3277 = vpop.f32.mrb[0].mxu0
        %3278 = vmatprep.mubr.f32.mxu0 0.0
        %3279 = vmatmul.mubr.f32.gmra.mrb[0].mxu0 %v3186
        %v3280 = vpop.f32.mrb[0].mxu0
        %v3281 = vadd.f32 0.0, %v3280
        %v3282 = vpop.f32.mrb[0].mxu0
        %3283 = vmatprep.mubr.f32.mxu0 0.0
        %3284 = vmatmul.mubr.f32.gmra.mrb[0].mxu0 %v3189
        %v3285 = vpop.f32.mrb[0].mxu0
        %v3286 = vadd.f32 0.0, %v3285
        %v3287 = vpop.f32.mrb[0].mxu0
        %3288 = vmatprep.mubr.f32.mxu0 0.0
        %3289 = vmatmul.mubr.f32.gmra.mrb[0].mxu0 %v3192
        %v3290 = vpop.f32.mrb[0].mxu0
        %v3291 = vadd.f32 0.0, %v3290
        %v3292 = vpop.f32.mrb[0].mxu0
        %3293 = vmatprep.mubr.f32.mxu0 0.0
        %3294 = vmatmul.mubr.f32.gmra.mrb[0].mxu0 %v3195
        %v3295 = vpop.f32.mrb[0].mxu0
        %v3296 = vadd.f32 0.0, %v3295
        %v3297 = vpop.f32.mrb[0].mxu0
        %3298 = vmatprep.mubr.f32.mxu0 0.0
        %3299 = vmatmul.mubr.f32.gmra.mrb[0].mxu0 %v3198
        %v3300 = vpop.f32.mrb[0].mxu0
        %v3301 = vadd.f32 0.0, %v3300
        %v3302 = vpop.f32.mrb[0].mxu0
        %3303 = vmatprep.mubr.f32.mxu0 0.0
        %3304 = vmatmul.mubr.f32.gmra.mrb[0].mxu0 %v3201
        %v3305 = vpop.f32.mrb[0].mxu0
        %v3306 = vadd.f32 0.0, %v3305
        %v3307 = vpop.f32.mrb[0].mxu0
        %3308 = vmatprep.mubr.f32.mxu0 0.0
        %3309 = vmatmul.mubr.f32.gmra.mrb[0].mxu0 %v3204
        %v3310 = vpop.f32.mrb[0].mxu0
        %v3311 = vadd.f32 0.0, %v3310
        %v3312 = vpop.f32.mrb[0].mxu0
        %3313 = vdwg.mxu0
        %v3314 = vadd.f32 %v3164, %v3276
        %v3315 = vadd.f32 %v3165, %v3281
        %v3316 = vadd.f32 %v3166, %v3286
        %v3317 = vadd.f32 %v3167, %v3291
        %v3318 = vadd.f32 %v3168, %v3296
        %v3319 = vadd.f32 %v3169, %v3301
        %v3320 = vadd.f32 %v3170, %v3306
        %v3321 = vadd.f32 %v3171, %v3311
        %v3322 = vld [vmem:[%s331 + $0x2] sm:$0xff]
        %v3323 = vld [vmem:[%s331 + $0x12] sm:$0xff]
        %v3324 = vld [vmem:[%s331 + $0x22] sm:$0xff]
        %v3325 = vld [vmem:[%s331 + $0x32] sm:$0xff]
        %v3326 = vld [vmem:[%s331 + $0x42] sm:$0xff]
        %v3327 = vld [vmem:[%s331 + $0x52] sm:$0xff]
        %v3328 = vld [vmem:[%s331 + $0x62] sm:$0xff]
        %v3329 = vld [vmem:[%s331 + $0x72] sm:$0xff]
        %s3330 = scalar_lea.vmem %s3, 80
        %v3331 = vld [vmem:[%s3330] sm:$0xf]
        %v3333 = vsel %vm352, %v3322, 0
        %v3336 = vsel %vm352, %v3323, 0
        %v3339 = vsel %vm352, %v3324, 0
        %v3342 = vsel %vm352, %v3325, 0
        %v3345 = vsel %vm352, %v3326, 0
        %v3348 = vsel %vm352, %v3327, 0
        %v3351 = vsel %vm352, %v3328, 0
        %v3354 = vsel %vm352, %v3329, 0
        %v3357 = vsel %vm377, %v3331, 0
        %3359 = vmatprep.subr.mxu0 0.0
        %3360 = vmatpush1.msra.mxu0 %v3357
        %3361 = vmatprep.subr.mxu0 0.0
        %3362 = vmatpush1.msra.mxu0 0.0
        %3363 = vmatprep.subr.mxu0 0.0
        %3364 = vmatpush1.msra.mxu0 0.0
        %3365 = vmatprep.subr.mxu0 0.0
        %3366 = vmatpush1.msra.mxu0 0.0
        %3367 = vmatprep.subr.mxu0 0.0
        %3368 = vmatpush1.msra.mxu0 0.0
        %3369 = vmatprep.subr.mxu0 0.0
        %3370 = vmatpush1.msra.mxu0 0.0
        %3371 = vmatprep.subr.mxu0 0.0
        %3372 = vmatpush1.msra.mxu0 0.0
        %3373 = vmatprep.subr.mxu0 0.0
        %3374 = vmatpush1.msra.mxu0 0.0
        %3375 = vmatprep.subr.mxu0 0.0
        %3376 = vmatpush1.msra.mxu0 0.0
        %3377 = vmatprep.subr.mxu0 0.0
        %3378 = vmatpush1.msra.mxu0 0.0
        %3379 = vmatprep.subr.mxu0 0.0
        %3380 = vmatpush1.msra.mxu0 0.0
        %3381 = vmatprep.subr.mxu0 0.0
        %3382 = vmatpush1.msra.mxu0 0.0
        %3383 = vmatprep.subr.mxu0 0.0
        %3384 = vmatpush1.msra.mxu0 0.0
        %3385 = vmatprep.subr.mxu0 0.0
        %3386 = vmatpush1.msra.mxu0 0.0
        %3387 = vmatprep.subr.mxu0 0.0
        %3388 = vmatpush1.msra.mxu0 0.0
        %3389 = vmatprep.subr.mxu0 0.0
        %3390 = vmatpush1.msra.mxu0 0.0
        %3391 = vmatprep.subr.mxu0 0.0
        %3392 = vmatpush1.msra.mxu0 0.0
        %3393 = vmatprep.subr.mxu0 0.0
        %3394 = vmatpush1.msra.mxu0 0.0
        %3395 = vmatprep.subr.mxu0 0.0
        %3396 = vmatpush1.msra.mxu0 0.0
        %3397 = vmatprep.subr.mxu0 0.0
        %3398 = vmatpush1.msra.mxu0 0.0
        %3399 = vmatprep.subr.mxu0 0.0
        %3400 = vmatpush1.msra.mxu0 0.0
        %3401 = vmatprep.subr.mxu0 0.0
        %3402 = vmatpush1.msra.mxu0 0.0
        %3403 = vmatprep.subr.mxu0 0.0
        %3404 = vmatpush1.msra.mxu0 0.0
        %3405 = vmatprep.subr.mxu0 0.0
        %3406 = vmatpush1.msra.mxu0 0.0
        %3407 = vmatprep.subr.mxu0 0.0
        %3408 = vmatpush1.msra.mxu0 0.0
        %3409 = vmatprep.subr.mxu0 0.0
        %3410 = vmatpush1.msra.mxu0 0.0
        %3411 = vmatprep.subr.mxu0 0.0
        %3412 = vmatpush1.msra.mxu0 0.0
        %3413 = vmatprep.subr.mxu0 0.0
        %3414 = vmatpush1.msra.mxu0 0.0
        %3415 = vmatprep.subr.mxu0 0.0
        %3416 = vmatpush1.msra.mxu0 0.0
        %3417 = vmatprep.subr.mxu0 0.0
        %3418 = vmatpush1.msra.mxu0 0.0
        %3419 = vmatprep.subr.mxu0 0.0
        %3420 = vmatpush1.msra.mxu0 0.0
        %3421 = vmatprep.subr.mxu0 0.0
        %3422 = vmatpush1.msra.mxu0 0.0
        %3423 = vmatprep.mubr.f32.mxu0 0.0
        %3424 = vmatmul.mubr.f32.gmra.mrb[0].mxu0 %v3333
        %v3425 = vpop.f32.mrb[0].mxu0
        %v3426 = vadd.f32 0.0, %v3425
        %v3427 = vpop.f32.mrb[0].mxu0
        %3428 = vmatprep.mubr.f32.mxu0 0.0
        %3429 = vmatmul.mubr.f32.gmra.mrb[0].mxu0 %v3336
        %v3430 = vpop.f32.mrb[0].mxu0
        %v3431 = vadd.f32 0.0, %v3430
        %v3432 = vpop.f32.mrb[0].mxu0
        %3433 = vmatprep.mubr.f32.mxu0 0.0
        %3434 = vmatmul.mubr.f32.gmra.mrb[0].mxu0 %v3339
        %v3435 = vpop.f32.mrb[0].mxu0
        %v3436 = vadd.f32 0.0, %v3435
        %v3437 = vpop.f32.mrb[0].mxu0
        %3438 = vmatprep.mubr.f32.mxu0 0.0
        %3439 = vmatmul.mubr.f32.gmra.mrb[0].mxu0 %v3342
        %v3440 = vpop.f32.mrb[0].mxu0
        %v3441 = vadd.f32 0.0, %v3440
        %v3442 = vpop.f32.mrb[0].mxu0
        %3443 = vmatprep.mubr.f32.mxu0 0.0
        %3444 = vmatmul.mubr.f32.gmra.mrb[0].mxu0 %v3345
        %v3445 = vpop.f32.mrb[0].mxu0
        %v3446 = vadd.f32 0.0, %v3445
        %v3447 = vpop.f32.mrb[0].mxu0
        %3448 = vmatprep.mubr.f32.mxu0 0.0
        %3449 = vmatmul.mubr.f32.gmra.mrb[0].mxu0 %v3348
        %v3450 = vpop.f32.mrb[0].mxu0
        %v3451 = vadd.f32 0.0, %v3450
        %v3452 = vpop.f32.mrb[0].mxu0
        %3453 = vmatprep.mubr.f32.mxu0 0.0
        %3454 = vmatmul.mubr.f32.gmra.mrb[0].mxu0 %v3351
        %v3455 = vpop.f32.mrb[0].mxu0
        %v3456 = vadd.f32 0.0, %v3455
        %v3457 = vpop.f32.mrb[0].mxu0
        %3458 = vmatprep.mubr.f32.mxu0 0.0
        %3459 = vmatmul.mubr.f32.gmra.mrb[0].mxu0 %v3354
        %v3460 = vpop.f32.mrb[0].mxu0
        %v3461 = vadd.f32 0.0, %v3460
        %v3462 = vpop.f32.mrb[0].mxu0
        %3463 = vdwg.mxu0
        %v3464 = vadd.f32 %v3314, %v3426
        %v3465 = vadd.f32 %v3315, %v3431
        %v3466 = vadd.f32 %v3316, %v3436
        %v3467 = vadd.f32 %v3317, %v3441
        %v3468 = vadd.f32 %v3318, %v3446
        %v3469 = vadd.f32 %v3319, %v3451
        %v3470 = vadd.f32 %v3320, %v3456
        %v3471 = vadd.f32 %v3321, %v3461
        %s3472 = scalar_lea.vmem %s331, 16
        %v3473 = vld [vmem:[%s3472] sm:$0xff]
        %v3474 = vld [vmem:[%s3472 + $0x10] sm:$0xff]
        %v3475 = vld [vmem:[%s3472 + $0x20] sm:$0xff]
        %v3476 = vld [vmem:[%s3472 + $0x30] sm:$0xff]
        %v3477 = vld [vmem:[%s3472 + $0x40] sm:$0xff]
        %v3478 = vld [vmem:[%s3472 + $0x50] sm:$0xff]
        %v3479 = vld [vmem:[%s3472 + $0x60] sm:$0xff]
        %v3480 = vld [vmem:[%s3472 + $0x70] sm:$0xff]
        %s3481 = scalar_lea.vmem %s3, 84
        %v3482 = vld [vmem:[%s3481] sm:$0xf]
        %v3484 = vsel %vm352, %v3473, 0
        %v3487 = vsel %vm352, %v3474, 0
        %v3490 = vsel %vm352, %v3475, 0
        %v3493 = vsel %vm352, %v3476, 0
        %v3496 = vsel %vm352, %v3477, 0
        %v3499 = vsel %vm352, %v3478, 0
        %v3502 = vsel %vm352, %v3479, 0
        %v3505 = vsel %vm352, %v3480, 0
        %v3508 = vsel %vm377, %v3482, 0
        %3510 = vmatprep.subr.mxu0 0.0
        %3511 = vmatpush1.msra.mxu0 %v3508
        %3512 = vmatprep.subr.mxu0 0.0
        %3513 = vmatpush1.msra.mxu0 0.0
        %3514 = vmatprep.subr.mxu0 0.0
        %3515 = vmatpush1.msra.mxu0 0.0
        %3516 = vmatprep.subr.mxu0 0.0
        %3517 = vmatpush1.msra.mxu0 0.0
        %3518 = vmatprep.subr.mxu0 0.0
        %3519 = vmatpush1.msra.mxu0 0.0
        %3520 = vmatprep.subr.mxu0 0.0
        %3521 = vmatpush1.msra.mxu0 0.0
        %3522 = vmatprep.subr.mxu0 0.0
        %3523 = vmatpush1.msra.mxu0 0.0
        %3524 = vmatprep.subr.mxu0 0.0
        %3525 = vmatpush1.msra.mxu0 0.0
        %3526 = vmatprep.subr.mxu0 0.0
        %3527 = vmatpush1.msra.mxu0 0.0
        %3528 = vmatprep.subr.mxu0 0.0
        %3529 = vmatpush1.msra.mxu0 0.0
        %3530 = vmatprep.subr.mxu0 0.0
        %3531 = vmatpush1.msra.mxu0 0.0
        %3532 = vmatprep.subr.mxu0 0.0
        %3533 = vmatpush1.msra.mxu0 0.0
        %3534 = vmatprep.subr.mxu0 0.0
        %3535 = vmatpush1.msra.mxu0 0.0
        %3536 = vmatprep.subr.mxu0 0.0
        %3537 = vmatpush1.msra.mxu0 0.0
        %3538 = vmatprep.subr.mxu0 0.0
        %3539 = vmatpush1.msra.mxu0 0.0
        %3540 = vmatprep.subr.mxu0 0.0
        %3541 = vmatpush1.msra.mxu0 0.0
        %3542 = vmatprep.subr.mxu0 0.0
        %3543 = vmatpush1.msra.mxu0 0.0
        %3544 = vmatprep.subr.mxu0 0.0
        %3545 = vmatpush1.msra.mxu0 0.0
        %3546 = vmatprep.subr.mxu0 0.0
        %3547 = vmatpush1.msra.mxu0 0.0
        %3548 = vmatprep.subr.mxu0 0.0
        %3549 = vmatpush1.msra.mxu0 0.0
        %3550 = vmatprep.subr.mxu0 0.0
        %3551 = vmatpush1.msra.mxu0 0.0
        %3552 = vmatprep.subr.mxu0 0.0
        %3553 = vmatpush1.msra.mxu0 0.0
        %3554 = vmatprep.subr.mxu0 0.0
        %3555 = vmatpush1.msra.mxu0 0.0
        %3556 = vmatprep.subr.mxu0 0.0
        %3557 = vmatpush1.msra.mxu0 0.0
        %3558 = vmatprep.subr.mxu0 0.0
        %3559 = vmatpush1.msra.mxu0 0.0
        %3560 = vmatprep.subr.mxu0 0.0
        %3561 = vmatpush1.msra.mxu0 0.0
        %3562 = vmatprep.subr.mxu0 0.0
        %3563 = vmatpush1.msra.mxu0 0.0
        %3564 = vmatprep.subr.mxu0 0.0
        %3565 = vmatpush1.msra.mxu0 0.0
        %3566 = vmatprep.subr.mxu0 0.0
        %3567 = vmatpush1.msra.mxu0 0.0
        %3568 = vmatprep.subr.mxu0 0.0
        %3569 = vmatpush1.msra.mxu0 0.0
        %3570 = vmatprep.subr.mxu0 0.0
        %3571 = vmatpush1.msra.mxu0 0.0
        %3572 = vmatprep.subr.mxu0 0.0
        %3573 = vmatpush1.msra.mxu0 0.0
        %3574 = vmatprep.mubr.f32.mxu0 0.0
        %3575 = vmatmul.mubr.f32.gmra.mrb[0].mxu0 %v3484
        %v3576 = vpop.f32.mrb[0].mxu0
        %v3577 = vadd.f32 0.0, %v3576
        %v3578 = vpop.f32.mrb[0].mxu0
        %3579 = vmatprep.mubr.f32.mxu0 0.0
        %3580 = vmatmul.mubr.f32.gmra.mrb[0].mxu0 %v3487
        %v3581 = vpop.f32.mrb[0].mxu0
        %v3582 = vadd.f32 0.0, %v3581
        %v3583 = vpop.f32.mrb[0].mxu0
        %3584 = vmatprep.mubr.f32.mxu0 0.0
        %3585 = vmatmul.mubr.f32.gmra.mrb[0].mxu0 %v3490
        %v3586 = vpop.f32.mrb[0].mxu0
        %v3587 = vadd.f32 0.0, %v3586
        %v3588 = vpop.f32.mrb[0].mxu0
        %3589 = vmatprep.mubr.f32.mxu0 0.0
        %3590 = vmatmul.mubr.f32.gmra.mrb[0].mxu0 %v3493
        %v3591 = vpop.f32.mrb[0].mxu0
        %v3592 = vadd.f32 0.0, %v3591
        %v3593 = vpop.f32.mrb[0].mxu0
        %3594 = vmatprep.mubr.f32.mxu0 0.0
        %3595 = vmatmul.mubr.f32.gmra.mrb[0].mxu0 %v3496
        %v3596 = vpop.f32.mrb[0].mxu0
        %v3597 = vadd.f32 0.0, %v3596
        %v3598 = vpop.f32.mrb[0].mxu0
        %3599 = vmatprep.mubr.f32.mxu0 0.0
        %3600 = vmatmul.mubr.f32.gmra.mrb[0].mxu0 %v3499
        %v3601 = vpop.f32.mrb[0].mxu0
        %v3602 = vadd.f32 0.0, %v3601
        %v3603 = vpop.f32.mrb[0].mxu0
        %3604 = vmatprep.mubr.f32.mxu0 0.0
        %3605 = vmatmul.mubr.f32.gmra.mrb[0].mxu0 %v3502
        %v3606 = vpop.f32.mrb[0].mxu0
        %v3607 = vadd.f32 0.0, %v3606
        %v3608 = vpop.f32.mrb[0].mxu0
        %3609 = vmatprep.mubr.f32.mxu0 0.0
        %3610 = vmatmul.mubr.f32.gmra.mrb[0].mxu0 %v3505
        %v3611 = vpop.f32.mrb[0].mxu0
        %v3612 = vadd.f32 0.0, %v3611
        %v3613 = vpop.f32.mrb[0].mxu0
        %3614 = vdwg.mxu0
        %v3615 = vadd.f32 %v3464, %v3577
        %v3616 = vadd.f32 %v3465, %v3582
        %v3617 = vadd.f32 %v3466, %v3587
        %v3618 = vadd.f32 %v3467, %v3592
        %v3619 = vadd.f32 %v3468, %v3597
        %v3620 = vadd.f32 %v3469, %v3602
        %v3621 = vadd.f32 %v3470, %v3607
        %v3622 = vadd.f32 %v3471, %v3612
        %v3623 = vld [vmem:[%s3472 + $0x1] sm:$0xff]
        %v3624 = vld [vmem:[%s3472 + $0x11] sm:$0xff]
        %v3625 = vld [vmem:[%s3472 + $0x21] sm:$0xff]
        %v3626 = vld [vmem:[%s3472 + $0x31] sm:$0xff]
        %v3627 = vld [vmem:[%s3472 + $0x41] sm:$0xff]
        %v3628 = vld [vmem:[%s3472 + $0x51] sm:$0xff]
        %v3629 = vld [vmem:[%s3472 + $0x61] sm:$0xff]
        %v3630 = vld [vmem:[%s3472 + $0x71] sm:$0xff]
        %s3631 = scalar_lea.vmem %s3, 88
        %v3632 = vld [vmem:[%s3631] sm:$0xf]
        %v3634 = vsel %vm352, %v3623, 0
        %v3637 = vsel %vm352, %v3624, 0
        %v3640 = vsel %vm352, %v3625, 0
        %v3643 = vsel %vm352, %v3626, 0
        %v3646 = vsel %vm352, %v3627, 0
        %v3649 = vsel %vm352, %v3628, 0
        %v3652 = vsel %vm352, %v3629, 0
        %v3655 = vsel %vm352, %v3630, 0
        %v3658 = vsel %vm377, %v3632, 0
        %3660 = vmatprep.subr.mxu0 0.0
        %3661 = vmatpush1.msra.mxu0 %v3658
        %3662 = vmatprep.subr.mxu0 0.0
        %3663 = vmatpush1.msra.mxu0 0.0
        %3664 = vmatprep.subr.mxu0 0.0
        %3665 = vmatpush1.msra.mxu0 0.0
        %3666 = vmatprep.subr.mxu0 0.0
        %3667 = vmatpush1.msra.mxu0 0.0
        %3668 = vmatprep.subr.mxu0 0.0
        %3669 = vmatpush1.msra.mxu0 0.0
        %3670 = vmatprep.subr.mxu0 0.0
        %3671 = vmatpush1.msra.mxu0 0.0
        %3672 = vmatprep.subr.mxu0 0.0
        %3673 = vmatpush1.msra.mxu0 0.0
        %3674 = vmatprep.subr.mxu0 0.0
        %3675 = vmatpush1.msra.mxu0 0.0
        %3676 = vmatprep.subr.mxu0 0.0
        %3677 = vmatpush1.msra.mxu0 0.0
        %3678 = vmatprep.subr.mxu0 0.0
        %3679 = vmatpush1.msra.mxu0 0.0
        %3680 = vmatprep.subr.mxu0 0.0
        %3681 = vmatpush1.msra.mxu0 0.0
        %3682 = vmatprep.subr.mxu0 0.0
        %3683 = vmatpush1.msra.mxu0 0.0
        %3684 = vmatprep.subr.mxu0 0.0
        %3685 = vmatpush1.msra.mxu0 0.0
        %3686 = vmatprep.subr.mxu0 0.0
        %3687 = vmatpush1.msra.mxu0 0.0
        %3688 = vmatprep.subr.mxu0 0.0
        %3689 = vmatpush1.msra.mxu0 0.0
        %3690 = vmatprep.subr.mxu0 0.0
        %3691 = vmatpush1.msra.mxu0 0.0
        %3692 = vmatprep.subr.mxu0 0.0
        %3693 = vmatpush1.msra.mxu0 0.0
        %3694 = vmatprep.subr.mxu0 0.0
        %3695 = vmatpush1.msra.mxu0 0.0
        %3696 = vmatprep.subr.mxu0 0.0
        %3697 = vmatpush1.msra.mxu0 0.0
        %3698 = vmatprep.subr.mxu0 0.0
        %3699 = vmatpush1.msra.mxu0 0.0
        %3700 = vmatprep.subr.mxu0 0.0
        %3701 = vmatpush1.msra.mxu0 0.0
        %3702 = vmatprep.subr.mxu0 0.0
        %3703 = vmatpush1.msra.mxu0 0.0
        %3704 = vmatprep.subr.mxu0 0.0
        %3705 = vmatpush1.msra.mxu0 0.0
        %3706 = vmatprep.subr.mxu0 0.0
        %3707 = vmatpush1.msra.mxu0 0.0
        %3708 = vmatprep.subr.mxu0 0.0
        %3709 = vmatpush1.msra.mxu0 0.0
        %3710 = vmatprep.subr.mxu0 0.0
        %3711 = vmatpush1.msra.mxu0 0.0
        %3712 = vmatprep.subr.mxu0 0.0
        %3713 = vmatpush1.msra.mxu0 0.0
        %3714 = vmatprep.subr.mxu0 0.0
        %3715 = vmatpush1.msra.mxu0 0.0
        %3716 = vmatprep.subr.mxu0 0.0
        %3717 = vmatpush1.msra.mxu0 0.0
        %3718 = vmatprep.subr.mxu0 0.0
        %3719 = vmatpush1.msra.mxu0 0.0
        %3720 = vmatprep.subr.mxu0 0.0
        %3721 = vmatpush1.msra.mxu0 0.0
        %3722 = vmatprep.subr.mxu0 0.0
        %3723 = vmatpush1.msra.mxu0 0.0
        %3724 = vmatprep.mubr.f32.mxu0 0.0
        %3725 = vmatmul.mubr.f32.gmra.mrb[0].mxu0 %v3634
        %v3726 = vpop.f32.mrb[0].mxu0
        %v3727 = vadd.f32 0.0, %v3726
        %v3728 = vpop.f32.mrb[0].mxu0
        %3729 = vmatprep.mubr.f32.mxu0 0.0
        %3730 = vmatmul.mubr.f32.gmra.mrb[0].mxu0 %v3637
        %v3731 = vpop.f32.mrb[0].mxu0
        %v3732 = vadd.f32 0.0, %v3731
        %v3733 = vpop.f32.mrb[0].mxu0
        %3734 = vmatprep.mubr.f32.mxu0 0.0
        %3735 = vmatmul.mubr.f32.gmra.mrb[0].mxu0 %v3640
        %v3736 = vpop.f32.mrb[0].mxu0
        %v3737 = vadd.f32 0.0, %v3736
        %v3738 = vpop.f32.mrb[0].mxu0
        %3739 = vmatprep.mubr.f32.mxu0 0.0
        %3740 = vmatmul.mubr.f32.gmra.mrb[0].mxu0 %v3643
        %v3741 = vpop.f32.mrb[0].mxu0
        %v3742 = vadd.f32 0.0, %v3741
        %v3743 = vpop.f32.mrb[0].mxu0
        %3744 = vmatprep.mubr.f32.mxu0 0.0
        %3745 = vmatmul.mubr.f32.gmra.mrb[0].mxu0 %v3646
        %v3746 = vpop.f32.mrb[0].mxu0
        %v3747 = vadd.f32 0.0, %v3746
        %v3748 = vpop.f32.mrb[0].mxu0
        %3749 = vmatprep.mubr.f32.mxu0 0.0
        %3750 = vmatmul.mubr.f32.gmra.mrb[0].mxu0 %v3649
        %v3751 = vpop.f32.mrb[0].mxu0
        %v3752 = vadd.f32 0.0, %v3751
        %v3753 = vpop.f32.mrb[0].mxu0
        %3754 = vmatprep.mubr.f32.mxu0 0.0
        %3755 = vmatmul.mubr.f32.gmra.mrb[0].mxu0 %v3652
        %v3756 = vpop.f32.mrb[0].mxu0
        %v3757 = vadd.f32 0.0, %v3756
        %v3758 = vpop.f32.mrb[0].mxu0
        %3759 = vmatprep.mubr.f32.mxu0 0.0
        %3760 = vmatmul.mubr.f32.gmra.mrb[0].mxu0 %v3655
        %v3761 = vpop.f32.mrb[0].mxu0
        %v3762 = vadd.f32 0.0, %v3761
        %v3763 = vpop.f32.mrb[0].mxu0
        %3764 = vdwg.mxu0
        %v3765 = vadd.f32 %v3615, %v3727
        %v3766 = vadd.f32 %v3616, %v3732
        %v3767 = vadd.f32 %v3617, %v3737
        %v3768 = vadd.f32 %v3618, %v3742
        %v3769 = vadd.f32 %v3619, %v3747
        %v3770 = vadd.f32 %v3620, %v3752
        %v3771 = vadd.f32 %v3621, %v3757
        %v3772 = vadd.f32 %v3622, %v3762
        %v3773 = vld [vmem:[%s3472 + $0x2] sm:$0xff]
        %v3774 = vld [vmem:[%s3472 + $0x12] sm:$0xff]
        %v3775 = vld [vmem:[%s3472 + $0x22] sm:$0xff]
        %v3776 = vld [vmem:[%s3472 + $0x32] sm:$0xff]
        %v3777 = vld [vmem:[%s3472 + $0x42] sm:$0xff]
        %v3778 = vld [vmem:[%s3472 + $0x52] sm:$0xff]
        %v3779 = vld [vmem:[%s3472 + $0x62] sm:$0xff]
        %v3780 = vld [vmem:[%s3472 + $0x72] sm:$0xff]
        %s3781 = scalar_lea.vmem %s3, 92
        %v3782 = vld [vmem:[%s3781] sm:$0xf]
        %v3784 = vsel %vm352, %v3773, 0
        %v3787 = vsel %vm352, %v3774, 0
        %v3790 = vsel %vm352, %v3775, 0
        %v3793 = vsel %vm352, %v3776, 0
        %v3796 = vsel %vm352, %v3777, 0
        %v3799 = vsel %vm352, %v3778, 0
        %v3802 = vsel %vm352, %v3779, 0
        %v3805 = vsel %vm352, %v3780, 0
        %v3808 = vsel %vm377, %v3782, 0
        %3810 = vmatprep.subr.mxu0 0.0
        %3811 = vmatpush1.msra.mxu0 %v3808
        %3812 = vmatprep.subr.mxu0 0.0
        %3813 = vmatpush1.msra.mxu0 0.0
        %3814 = vmatprep.subr.mxu0 0.0
        %3815 = vmatpush1.msra.mxu0 0.0
        %3816 = vmatprep.subr.mxu0 0.0
        %3817 = vmatpush1.msra.mxu0 0.0
        %3818 = vmatprep.subr.mxu0 0.0
        %3819 = vmatpush1.msra.mxu0 0.0
        %3820 = vmatprep.subr.mxu0 0.0
        %3821 = vmatpush1.msra.mxu0 0.0
        %3822 = vmatprep.subr.mxu0 0.0
        %3823 = vmatpush1.msra.mxu0 0.0
        %3824 = vmatprep.subr.mxu0 0.0
        %3825 = vmatpush1.msra.mxu0 0.0
        %3826 = vmatprep.subr.mxu0 0.0
        %3827 = vmatpush1.msra.mxu0 0.0
        %3828 = vmatprep.subr.mxu0 0.0
        %3829 = vmatpush1.msra.mxu0 0.0
        %3830 = vmatprep.subr.mxu0 0.0
        %3831 = vmatpush1.msra.mxu0 0.0
        %3832 = vmatprep.subr.mxu0 0.0
        %3833 = vmatpush1.msra.mxu0 0.0
        %3834 = vmatprep.subr.mxu0 0.0
        %3835 = vmatpush1.msra.mxu0 0.0
        %3836 = vmatprep.subr.mxu0 0.0
        %3837 = vmatpush1.msra.mxu0 0.0
        %3838 = vmatprep.subr.mxu0 0.0
        %3839 = vmatpush1.msra.mxu0 0.0
        %3840 = vmatprep.subr.mxu0 0.0
        %3841 = vmatpush1.msra.mxu0 0.0
        %3842 = vmatprep.subr.mxu0 0.0
        %3843 = vmatpush1.msra.mxu0 0.0
        %3844 = vmatprep.subr.mxu0 0.0
        %3845 = vmatpush1.msra.mxu0 0.0
        %3846 = vmatprep.subr.mxu0 0.0
        %3847 = vmatpush1.msra.mxu0 0.0
        %3848 = vmatprep.subr.mxu0 0.0
        %3849 = vmatpush1.msra.mxu0 0.0
        %3850 = vmatprep.subr.mxu0 0.0
        %3851 = vmatpush1.msra.mxu0 0.0
        %3852 = vmatprep.subr.mxu0 0.0
        %3853 = vmatpush1.msra.mxu0 0.0
        %3854 = vmatprep.subr.mxu0 0.0
        %3855 = vmatpush1.msra.mxu0 0.0
        %3856 = vmatprep.subr.mxu0 0.0
        %3857 = vmatpush1.msra.mxu0 0.0
        %3858 = vmatprep.subr.mxu0 0.0
        %3859 = vmatpush1.msra.mxu0 0.0
        %3860 = vmatprep.subr.mxu0 0.0
        %3861 = vmatpush1.msra.mxu0 0.0
        %3862 = vmatprep.subr.mxu0 0.0
        %3863 = vmatpush1.msra.mxu0 0.0
        %3864 = vmatprep.subr.mxu0 0.0
        %3865 = vmatpush1.msra.mxu0 0.0
        %3866 = vmatprep.subr.mxu0 0.0
        %3867 = vmatpush1.msra.mxu0 0.0
        %3868 = vmatprep.subr.mxu0 0.0
        %3869 = vmatpush1.msra.mxu0 0.0
        %3870 = vmatprep.subr.mxu0 0.0
        %3871 = vmatpush1.msra.mxu0 0.0
        %3872 = vmatprep.subr.mxu0 0.0
        %3873 = vmatpush1.msra.mxu0 0.0
        %3874 = vmatprep.mubr.f32.mxu0 0.0
        %3875 = vmatmul.mubr.f32.gmra.mrb[0].mxu0 %v3784
        %v3876 = vpop.f32.mrb[0].mxu0
        %v3877 = vadd.f32 0.0, %v3876
        %v3878 = vpop.f32.mrb[0].mxu0
        %3879 = vmatprep.mubr.f32.mxu0 0.0
        %3880 = vmatmul.mubr.f32.gmra.mrb[0].mxu0 %v3787
        %v3881 = vpop.f32.mrb[0].mxu0
        %v3882 = vadd.f32 0.0, %v3881
        %v3883 = vpop.f32.mrb[0].mxu0
        %3884 = vmatprep.mubr.f32.mxu0 0.0
        %3885 = vmatmul.mubr.f32.gmra.mrb[0].mxu0 %v3790
        %v3886 = vpop.f32.mrb[0].mxu0
        %v3887 = vadd.f32 0.0, %v3886
        %v3888 = vpop.f32.mrb[0].mxu0
        %3889 = vmatprep.mubr.f32.mxu0 0.0
        %3890 = vmatmul.mubr.f32.gmra.mrb[0].mxu0 %v3793
        %v3891 = vpop.f32.mrb[0].mxu0
        %v3892 = vadd.f32 0.0, %v3891
        %v3893 = vpop.f32.mrb[0].mxu0
        %3894 = vmatprep.mubr.f32.mxu0 0.0
        %3895 = vmatmul.mubr.f32.gmra.mrb[0].mxu0 %v3796
        %v3896 = vpop.f32.mrb[0].mxu0
        %v3897 = vadd.f32 0.0, %v3896
        %v3898 = vpop.f32.mrb[0].mxu0
        %3899 = vmatprep.mubr.f32.mxu0 0.0
        %3900 = vmatmul.mubr.f32.gmra.mrb[0].mxu0 %v3799
        %v3901 = vpop.f32.mrb[0].mxu0
        %v3902 = vadd.f32 0.0, %v3901
        %v3903 = vpop.f32.mrb[0].mxu0
        %3904 = vmatprep.mubr.f32.mxu0 0.0
        %3905 = vmatmul.mubr.f32.gmra.mrb[0].mxu0 %v3802
        %v3906 = vpop.f32.mrb[0].mxu0
        %v3907 = vadd.f32 0.0, %v3906
        %v3908 = vpop.f32.mrb[0].mxu0
        %3909 = vmatprep.mubr.f32.mxu0 0.0
        %3910 = vmatmul.mubr.f32.gmra.mrb[0].mxu0 %v3805
        %v3911 = vpop.f32.mrb[0].mxu0
        %v3912 = vadd.f32 0.0, %v3911
        %v3913 = vpop.f32.mrb[0].mxu0
        %3914 = vdwg.mxu0
        %v3915 = vadd.f32 %v3765, %v3877
        %v3916 = vadd.f32 %v3766, %v3882
        %v3917 = vadd.f32 %v3767, %v3887
        %v3918 = vadd.f32 %v3768, %v3892
        %v3919 = vadd.f32 %v3769, %v3897
        %v3920 = vadd.f32 %v3770, %v3902
        %v3921 = vadd.f32 %v3771, %v3907
        %v3922 = vadd.f32 %v3772, %v3912
        %s3923 = scalar_lea.vmem %s331, 32
        %v3924 = vld [vmem:[%s3923] sm:$0xff]
        %v3925 = vld [vmem:[%s3923 + $0x10] sm:$0xff]
        %v3926 = vld [vmem:[%s3923 + $0x20] sm:$0xff]
        %v3927 = vld [vmem:[%s3923 + $0x30] sm:$0xff]
        %v3928 = vld [vmem:[%s3923 + $0x40] sm:$0xff]
        %v3929 = vld [vmem:[%s3923 + $0x50] sm:$0xff]
        %v3930 = vld [vmem:[%s3923 + $0x60] sm:$0xff]
        %v3931 = vld [vmem:[%s3923 + $0x70] sm:$0xff]
        %s3932 = scalar_lea.vmem %s3, 96
        %v3933 = vld [vmem:[%s3932] sm:$0xf]
        %v3935 = vsel %vm352, %v3924, 0
        %v3938 = vsel %vm352, %v3925, 0
        %v3941 = vsel %vm352, %v3926, 0
        %v3944 = vsel %vm352, %v3927, 0
        %v3947 = vsel %vm352, %v3928, 0
        %v3950 = vsel %vm352, %v3929, 0
        %v3953 = vsel %vm352, %v3930, 0
        %v3956 = vsel %vm352, %v3931, 0
        %v3959 = vsel %vm377, %v3933, 0
        %3961 = vmatprep.subr.mxu0 0.0
        %3962 = vmatpush1.msra.mxu0 %v3959
        %3963 = vmatprep.subr.mxu0 0.0
        %3964 = vmatpush1.msra.mxu0 0.0
        %3965 = vmatprep.subr.mxu0 0.0
        %3966 = vmatpush1.msra.mxu0 0.0
        %3967 = vmatprep.subr.mxu0 0.0
        %3968 = vmatpush1.msra.mxu0 0.0
        %3969 = vmatprep.subr.mxu0 0.0
        %3970 = vmatpush1.msra.mxu0 0.0
        %3971 = vmatprep.subr.mxu0 0.0
        %3972 = vmatpush1.msra.mxu0 0.0
        %3973 = vmatprep.subr.mxu0 0.0
        %3974 = vmatpush1.msra.mxu0 0.0
        %3975 = vmatprep.subr.mxu0 0.0
        %3976 = vmatpush1.msra.mxu0 0.0
        %3977 = vmatprep.subr.mxu0 0.0
        %3978 = vmatpush1.msra.mxu0 0.0
        %3979 = vmatprep.subr.mxu0 0.0
        %3980 = vmatpush1.msra.mxu0 0.0
        %3981 = vmatprep.subr.mxu0 0.0
        %3982 = vmatpush1.msra.mxu0 0.0
        %3983 = vmatprep.subr.mxu0 0.0
        %3984 = vmatpush1.msra.mxu0 0.0
        %3985 = vmatprep.subr.mxu0 0.0
        %3986 = vmatpush1.msra.mxu0 0.0
        %3987 = vmatprep.subr.mxu0 0.0
        %3988 = vmatpush1.msra.mxu0 0.0
        %3989 = vmatprep.subr.mxu0 0.0
        %3990 = vmatpush1.msra.mxu0 0.0
        %3991 = vmatprep.subr.mxu0 0.0
        %3992 = vmatpush1.msra.mxu0 0.0
        %3993 = vmatprep.subr.mxu0 0.0
        %3994 = vmatpush1.msra.mxu0 0.0
        %3995 = vmatprep.subr.mxu0 0.0
        %3996 = vmatpush1.msra.mxu0 0.0
        %3997 = vmatprep.subr.mxu0 0.0
        %3998 = vmatpush1.msra.mxu0 0.0
        %3999 = vmatprep.subr.mxu0 0.0
        %4000 = vmatpush1.msra.mxu0 0.0
        %4001 = vmatprep.subr.mxu0 0.0
        %4002 = vmatpush1.msra.mxu0 0.0
        %4003 = vmatprep.subr.mxu0 0.0
        %4004 = vmatpush1.msra.mxu0 0.0
        %4005 = vmatprep.subr.mxu0 0.0
        %4006 = vmatpush1.msra.mxu0 0.0
        %4007 = vmatprep.subr.mxu0 0.0
        %4008 = vmatpush1.msra.mxu0 0.0
        %4009 = vmatprep.subr.mxu0 0.0
        %4010 = vmatpush1.msra.mxu0 0.0
        %4011 = vmatprep.subr.mxu0 0.0
        %4012 = vmatpush1.msra.mxu0 0.0
        %4013 = vmatprep.subr.mxu0 0.0
        %4014 = vmatpush1.msra.mxu0 0.0
        %4015 = vmatprep.subr.mxu0 0.0
        %4016 = vmatpush1.msra.mxu0 0.0
        %4017 = vmatprep.subr.mxu0 0.0
        %4018 = vmatpush1.msra.mxu0 0.0
        %4019 = vmatprep.subr.mxu0 0.0
        %4020 = vmatpush1.msra.mxu0 0.0
        %4021 = vmatprep.subr.mxu0 0.0
        %4022 = vmatpush1.msra.mxu0 0.0
        %4023 = vmatprep.subr.mxu0 0.0
        %4024 = vmatpush1.msra.mxu0 0.0
        %4025 = vmatprep.mubr.f32.mxu0 0.0
        %4026 = vmatmul.mubr.f32.gmra.mrb[0].mxu0 %v3935
        %v4027 = vpop.f32.mrb[0].mxu0
        %v4028 = vadd.f32 0.0, %v4027
        %v4029 = vpop.f32.mrb[0].mxu0
        %4030 = vmatprep.mubr.f32.mxu0 0.0
        %4031 = vmatmul.mubr.f32.gmra.mrb[0].mxu0 %v3938
        %v4032 = vpop.f32.mrb[0].mxu0
        %v4033 = vadd.f32 0.0, %v4032
        %v4034 = vpop.f32.mrb[0].mxu0
        %4035 = vmatprep.mubr.f32.mxu0 0.0
        %4036 = vmatmul.mubr.f32.gmra.mrb[0].mxu0 %v3941
        %v4037 = vpop.f32.mrb[0].mxu0
        %v4038 = vadd.f32 0.0, %v4037
        %v4039 = vpop.f32.mrb[0].mxu0
        %4040 = vmatprep.mubr.f32.mxu0 0.0
        %4041 = vmatmul.mubr.f32.gmra.mrb[0].mxu0 %v3944
        %v4042 = vpop.f32.mrb[0].mxu0
        %v4043 = vadd.f32 0.0, %v4042
        %v4044 = vpop.f32.mrb[0].mxu0
        %4045 = vmatprep.mubr.f32.mxu0 0.0
        %4046 = vmatmul.mubr.f32.gmra.mrb[0].mxu0 %v3947
        %v4047 = vpop.f32.mrb[0].mxu0
        %v4048 = vadd.f32 0.0, %v4047
        %v4049 = vpop.f32.mrb[0].mxu0
        %4050 = vmatprep.mubr.f32.mxu0 0.0
        %4051 = vmatmul.mubr.f32.gmra.mrb[0].mxu0 %v3950
        %v4052 = vpop.f32.mrb[0].mxu0
        %v4053 = vadd.f32 0.0, %v4052
        %v4054 = vpop.f32.mrb[0].mxu0
        %4055 = vmatprep.mubr.f32.mxu0 0.0
        %4056 = vmatmul.mubr.f32.gmra.mrb[0].mxu0 %v3953
        %v4057 = vpop.f32.mrb[0].mxu0
        %v4058 = vadd.f32 0.0, %v4057
        %v4059 = vpop.f32.mrb[0].mxu0
        %4060 = vmatprep.mubr.f32.mxu0 0.0
        %4061 = vmatmul.mubr.f32.gmra.mrb[0].mxu0 %v3956
        %v4062 = vpop.f32.mrb[0].mxu0
        %v4063 = vadd.f32 0.0, %v4062
        %v4064 = vpop.f32.mrb[0].mxu0
        %4065 = vdwg.mxu0
        %v4066 = vadd.f32 %v3915, %v4028
        %v4067 = vadd.f32 %v3916, %v4033
        %v4068 = vadd.f32 %v3917, %v4038
        %v4069 = vadd.f32 %v3918, %v4043
        %v4070 = vadd.f32 %v3919, %v4048
        %v4071 = vadd.f32 %v3920, %v4053
        %v4072 = vadd.f32 %v3921, %v4058
        %v4073 = vadd.f32 %v3922, %v4063
        %v4074 = vld [vmem:[%s3923 + $0x1] sm:$0xff]
        %v4075 = vld [vmem:[%s3923 + $0x11] sm:$0xff]
        %v4076 = vld [vmem:[%s3923 + $0x21] sm:$0xff]
        %v4077 = vld [vmem:[%s3923 + $0x31] sm:$0xff]
        %v4078 = vld [vmem:[%s3923 + $0x41] sm:$0xff]
        %v4079 = vld [vmem:[%s3923 + $0x51] sm:$0xff]
        %v4080 = vld [vmem:[%s3923 + $0x61] sm:$0xff]
        %v4081 = vld [vmem:[%s3923 + $0x71] sm:$0xff]
        %s4082 = scalar_lea.vmem %s3, 100
        %v4083 = vld [vmem:[%s4082] sm:$0xf]
        %v4085 = vsel %vm352, %v4074, 0
        %v4088 = vsel %vm352, %v4075, 0
        %v4091 = vsel %vm352, %v4076, 0
        %v4094 = vsel %vm352, %v4077, 0
        %v4097 = vsel %vm352, %v4078, 0
        %v4100 = vsel %vm352, %v4079, 0
        %v4103 = vsel %vm352, %v4080, 0
        %v4106 = vsel %vm352, %v4081, 0
        %v4109 = vsel %vm377, %v4083, 0
        %4111 = vmatprep.subr.mxu0 0.0
        %4112 = vmatpush1.msra.mxu0 %v4109
        %4113 = vmatprep.subr.mxu0 0.0
        %4114 = vmatpush1.msra.mxu0 0.0
        %4115 = vmatprep.subr.mxu0 0.0
        %4116 = vmatpush1.msra.mxu0 0.0
        %4117 = vmatprep.subr.mxu0 0.0
        %4118 = vmatpush1.msra.mxu0 0.0
        %4119 = vmatprep.subr.mxu0 0.0
        %4120 = vmatpush1.msra.mxu0 0.0
        %4121 = vmatprep.subr.mxu0 0.0
        %4122 = vmatpush1.msra.mxu0 0.0
        %4123 = vmatprep.subr.mxu0 0.0
        %4124 = vmatpush1.msra.mxu0 0.0
        %4125 = vmatprep.subr.mxu0 0.0
        %4126 = vmatpush1.msra.mxu0 0.0
        %4127 = vmatprep.subr.mxu0 0.0
        %4128 = vmatpush1.msra.mxu0 0.0
        %4129 = vmatprep.subr.mxu0 0.0
        %4130 = vmatpush1.msra.mxu0 0.0
        %4131 = vmatprep.subr.mxu0 0.0
        %4132 = vmatpush1.msra.mxu0 0.0
        %4133 = vmatprep.subr.mxu0 0.0
        %4134 = vmatpush1.msra.mxu0 0.0
        %4135 = vmatprep.subr.mxu0 0.0
        %4136 = vmatpush1.msra.mxu0 0.0
        %4137 = vmatprep.subr.mxu0 0.0
        %4138 = vmatpush1.msra.mxu0 0.0
        %4139 = vmatprep.subr.mxu0 0.0
        %4140 = vmatpush1.msra.mxu0 0.0
        %4141 = vmatprep.subr.mxu0 0.0
        %4142 = vmatpush1.msra.mxu0 0.0
        %4143 = vmatprep.subr.mxu0 0.0
        %4144 = vmatpush1.msra.mxu0 0.0
        %4145 = vmatprep.subr.mxu0 0.0
        %4146 = vmatpush1.msra.mxu0 0.0
        %4147 = vmatprep.subr.mxu0 0.0
        %4148 = vmatpush1.msra.mxu0 0.0
        %4149 = vmatprep.subr.mxu0 0.0
        %4150 = vmatpush1.msra.mxu0 0.0
        %4151 = vmatprep.subr.mxu0 0.0
        %4152 = vmatpush1.msra.mxu0 0.0
        %4153 = vmatprep.subr.mxu0 0.0
        %4154 = vmatpush1.msra.mxu0 0.0
        %4155 = vmatprep.subr.mxu0 0.0
        %4156 = vmatpush1.msra.mxu0 0.0
        %4157 = vmatprep.subr.mxu0 0.0
        %4158 = vmatpush1.msra.mxu0 0.0
        %4159 = vmatprep.subr.mxu0 0.0
        %4160 = vmatpush1.msra.mxu0 0.0
        %4161 = vmatprep.subr.mxu0 0.0
        %4162 = vmatpush1.msra.mxu0 0.0
        %4163 = vmatprep.subr.mxu0 0.0
        %4164 = vmatpush1.msra.mxu0 0.0
        %4165 = vmatprep.subr.mxu0 0.0
        %4166 = vmatpush1.msra.mxu0 0.0
        %4167 = vmatprep.subr.mxu0 0.0
        %4168 = vmatpush1.msra.mxu0 0.0
        %4169 = vmatprep.subr.mxu0 0.0
        %4170 = vmatpush1.msra.mxu0 0.0
        %4171 = vmatprep.subr.mxu0 0.0
        %4172 = vmatpush1.msra.mxu0 0.0
        %4173 = vmatprep.subr.mxu0 0.0
        %4174 = vmatpush1.msra.mxu0 0.0
        %4175 = vmatprep.mubr.f32.mxu0 0.0
        %4176 = vmatmul.mubr.f32.gmra.mrb[0].mxu0 %v4085
        %v4177 = vpop.f32.mrb[0].mxu0
        %v4178 = vadd.f32 0.0, %v4177
        %v4179 = vpop.f32.mrb[0].mxu0
        %4180 = vmatprep.mubr.f32.mxu0 0.0
        %4181 = vmatmul.mubr.f32.gmra.mrb[0].mxu0 %v4088
        %v4182 = vpop.f32.mrb[0].mxu0
        %v4183 = vadd.f32 0.0, %v4182
        %v4184 = vpop.f32.mrb[0].mxu0
        %4185 = vmatprep.mubr.f32.mxu0 0.0
        %4186 = vmatmul.mubr.f32.gmra.mrb[0].mxu0 %v4091
        %v4187 = vpop.f32.mrb[0].mxu0
        %v4188 = vadd.f32 0.0, %v4187
        %v4189 = vpop.f32.mrb[0].mxu0
        %4190 = vmatprep.mubr.f32.mxu0 0.0
        %4191 = vmatmul.mubr.f32.gmra.mrb[0].mxu0 %v4094
        %v4192 = vpop.f32.mrb[0].mxu0
        %v4193 = vadd.f32 0.0, %v4192
        %v4194 = vpop.f32.mrb[0].mxu0
        %4195 = vmatprep.mubr.f32.mxu0 0.0
        %4196 = vmatmul.mubr.f32.gmra.mrb[0].mxu0 %v4097
        %v4197 = vpop.f32.mrb[0].mxu0
        %v4198 = vadd.f32 0.0, %v4197
        %v4199 = vpop.f32.mrb[0].mxu0
        %4200 = vmatprep.mubr.f32.mxu0 0.0
        %4201 = vmatmul.mubr.f32.gmra.mrb[0].mxu0 %v4100
        %v4202 = vpop.f32.mrb[0].mxu0
        %v4203 = vadd.f32 0.0, %v4202
        %v4204 = vpop.f32.mrb[0].mxu0
        %4205 = vmatprep.mubr.f32.mxu0 0.0
        %4206 = vmatmul.mubr.f32.gmra.mrb[0].mxu0 %v4103
        %v4207 = vpop.f32.mrb[0].mxu0
        %v4208 = vadd.f32 0.0, %v4207
        %v4209 = vpop.f32.mrb[0].mxu0
        %4210 = vmatprep.mubr.f32.mxu0 0.0
        %4211 = vmatmul.mubr.f32.gmra.mrb[0].mxu0 %v4106
        %v4212 = vpop.f32.mrb[0].mxu0
        %v4213 = vadd.f32 0.0, %v4212
        %v4214 = vpop.f32.mrb[0].mxu0
        %4215 = vdwg.mxu0
        %v4216 = vadd.f32 %v4066, %v4178
        %v4217 = vadd.f32 %v4067, %v4183
        %v4218 = vadd.f32 %v4068, %v4188
        %v4219 = vadd.f32 %v4069, %v4193
        %v4220 = vadd.f32 %v4070, %v4198
        %v4221 = vadd.f32 %v4071, %v4203
        %v4222 = vadd.f32 %v4072, %v4208
        %v4223 = vadd.f32 %v4073, %v4213
        %v4224 = vld [vmem:[%s3923 + $0x2] sm:$0xff]
        %v4225 = vld [vmem:[%s3923 + $0x12] sm:$0xff]
        %v4226 = vld [vmem:[%s3923 + $0x22] sm:$0xff]
        %v4227 = vld [vmem:[%s3923 + $0x32] sm:$0xff]
        %v4228 = vld [vmem:[%s3923 + $0x42] sm:$0xff]
        %v4229 = vld [vmem:[%s3923 + $0x52] sm:$0xff]
        %v4230 = vld [vmem:[%s3923 + $0x62] sm:$0xff]
        %v4231 = vld [vmem:[%s3923 + $0x72] sm:$0xff]
        %s4232 = scalar_lea.vmem %s3, 104
        %v4233 = vld [vmem:[%s4232] sm:$0xf]
        %v4235 = vsel %vm352, %v4224, 0
        %v4238 = vsel %vm352, %v4225, 0
        %v4241 = vsel %vm352, %v4226, 0
        %v4244 = vsel %vm352, %v4227, 0
        %v4247 = vsel %vm352, %v4228, 0
        %v4250 = vsel %vm352, %v4229, 0
        %v4253 = vsel %vm352, %v4230, 0
        %v4256 = vsel %vm352, %v4231, 0
        %v4259 = vsel %vm377, %v4233, 0
        %4261 = vmatprep.subr.mxu0 0.0
        %4262 = vmatpush1.msra.mxu0 %v4259
        %4263 = vmatprep.subr.mxu0 0.0
        %4264 = vmatpush1.msra.mxu0 0.0
        %4265 = vmatprep.subr.mxu0 0.0
        %4266 = vmatpush1.msra.mxu0 0.0
        %4267 = vmatprep.subr.mxu0 0.0
        %4268 = vmatpush1.msra.mxu0 0.0
        %4269 = vmatprep.subr.mxu0 0.0
        %4270 = vmatpush1.msra.mxu0 0.0
        %4271 = vmatprep.subr.mxu0 0.0
        %4272 = vmatpush1.msra.mxu0 0.0
        %4273 = vmatprep.subr.mxu0 0.0
        %4274 = vmatpush1.msra.mxu0 0.0
        %4275 = vmatprep.subr.mxu0 0.0
        %4276 = vmatpush1.msra.mxu0 0.0
        %4277 = vmatprep.subr.mxu0 0.0
        %4278 = vmatpush1.msra.mxu0 0.0
        %4279 = vmatprep.subr.mxu0 0.0
        %4280 = vmatpush1.msra.mxu0 0.0
        %4281 = vmatprep.subr.mxu0 0.0
        %4282 = vmatpush1.msra.mxu0 0.0
        %4283 = vmatprep.subr.mxu0 0.0
        %4284 = vmatpush1.msra.mxu0 0.0
        %4285 = vmatprep.subr.mxu0 0.0
        %4286 = vmatpush1.msra.mxu0 0.0
        %4287 = vmatprep.subr.mxu0 0.0
        %4288 = vmatpush1.msra.mxu0 0.0
        %4289 = vmatprep.subr.mxu0 0.0
        %4290 = vmatpush1.msra.mxu0 0.0
        %4291 = vmatprep.subr.mxu0 0.0
        %4292 = vmatpush1.msra.mxu0 0.0
        %4293 = vmatprep.subr.mxu0 0.0
        %4294 = vmatpush1.msra.mxu0 0.0
        %4295 = vmatprep.subr.mxu0 0.0
        %4296 = vmatpush1.msra.mxu0 0.0
        %4297 = vmatprep.subr.mxu0 0.0
        %4298 = vmatpush1.msra.mxu0 0.0
        %4299 = vmatprep.subr.mxu0 0.0
        %4300 = vmatpush1.msra.mxu0 0.0
        %4301 = vmatprep.subr.mxu0 0.0
        %4302 = vmatpush1.msra.mxu0 0.0
        %4303 = vmatprep.subr.mxu0 0.0
        %4304 = vmatpush1.msra.mxu0 0.0
        %4305 = vmatprep.subr.mxu0 0.0
        %4306 = vmatpush1.msra.mxu0 0.0
        %4307 = vmatprep.subr.mxu0 0.0
        %4308 = vmatpush1.msra.mxu0 0.0
        %4309 = vmatprep.subr.mxu0 0.0
        %4310 = vmatpush1.msra.mxu0 0.0
        %4311 = vmatprep.subr.mxu0 0.0
        %4312 = vmatpush1.msra.mxu0 0.0
        %4313 = vmatprep.subr.mxu0 0.0
        %4314 = vmatpush1.msra.mxu0 0.0
        %4315 = vmatprep.subr.mxu0 0.0
        %4316 = vmatpush1.msra.mxu0 0.0
        %4317 = vmatprep.subr.mxu0 0.0
        %4318 = vmatpush1.msra.mxu0 0.0
        %4319 = vmatprep.subr.mxu0 0.0
        %4320 = vmatpush1.msra.mxu0 0.0
        %4321 = vmatprep.subr.mxu0 0.0
        %4322 = vmatpush1.msra.mxu0 0.0
        %4323 = vmatprep.subr.mxu0 0.0
        %4324 = vmatpush1.msra.mxu0 0.0
        %4325 = vmatprep.mubr.f32.mxu0 0.0
        %4326 = vmatmul.mubr.f32.gmra.mrb[0].mxu0 %v4235
        %v4327 = vpop.f32.mrb[0].mxu0
        %v4328 = vadd.f32 0.0, %v4327
        %v4329 = vpop.f32.mrb[0].mxu0
        %4330 = vmatprep.mubr.f32.mxu0 0.0
        %4331 = vmatmul.mubr.f32.gmra.mrb[0].mxu0 %v4238
        %v4332 = vpop.f32.mrb[0].mxu0
        %v4333 = vadd.f32 0.0, %v4332
        %v4334 = vpop.f32.mrb[0].mxu0
        %4335 = vmatprep.mubr.f32.mxu0 0.0
        %4336 = vmatmul.mubr.f32.gmra.mrb[0].mxu0 %v4241
        %v4337 = vpop.f32.mrb[0].mxu0
        %v4338 = vadd.f32 0.0, %v4337
        %v4339 = vpop.f32.mrb[0].mxu0
        %4340 = vmatprep.mubr.f32.mxu0 0.0
        %4341 = vmatmul.mubr.f32.gmra.mrb[0].mxu0 %v4244
        %v4342 = vpop.f32.mrb[0].mxu0
        %v4343 = vadd.f32 0.0, %v4342
        %v4344 = vpop.f32.mrb[0].mxu0
        %4345 = vmatprep.mubr.f32.mxu0 0.0
        %4346 = vmatmul.mubr.f32.gmra.mrb[0].mxu0 %v4247
        %v4347 = vpop.f32.mrb[0].mxu0
        %v4348 = vadd.f32 0.0, %v4347
        %v4349 = vpop.f32.mrb[0].mxu0
        %4350 = vmatprep.mubr.f32.mxu0 0.0
        %4351 = vmatmul.mubr.f32.gmra.mrb[0].mxu0 %v4250
        %v4352 = vpop.f32.mrb[0].mxu0
        %v4353 = vadd.f32 0.0, %v4352
        %v4354 = vpop.f32.mrb[0].mxu0
        %4355 = vmatprep.mubr.f32.mxu0 0.0
        %4356 = vmatmul.mubr.f32.gmra.mrb[0].mxu0 %v4253
        %v4357 = vpop.f32.mrb[0].mxu0
        %v4358 = vadd.f32 0.0, %v4357
        %v4359 = vpop.f32.mrb[0].mxu0
        %4360 = vmatprep.mubr.f32.mxu0 0.0
        %4361 = vmatmul.mubr.f32.gmra.mrb[0].mxu0 %v4256
        %v4362 = vpop.f32.mrb[0].mxu0
        %v4363 = vadd.f32 0.0, %v4362
        %v4364 = vpop.f32.mrb[0].mxu0
        %4365 = vdwg.mxu0
        %v4366 = vadd.f32 %v4216, %v4328
        %v4367 = vadd.f32 %v4217, %v4333
        %v4368 = vadd.f32 %v4218, %v4338
        %v4369 = vadd.f32 %v4219, %v4343
        %v4370 = vadd.f32 %v4220, %v4348
        %v4371 = vadd.f32 %v4221, %v4353
        %v4372 = vadd.f32 %v4222, %v4358
        %v4373 = vadd.f32 %v4223, %v4363
        %v4374 = vld [vmem:[%s4] sm:$0x1]
        %v4376 = vlaneseq
        %v4377 = vshrl.u32 %v4376, 7
        %v4378 = vsub.s32 0, %v4377
        %v4379 = vrot.slane %v4374, %v4378
        %v4381 = vadd.f32 %v4366, %v4379
        %v4382 = vadd.f32 %v4367, %v4379
        %v4383 = vadd.f32 %v4368, %v4379
        %v4384 = vadd.f32 %v4369, %v4379
        %v4385 = vadd.f32 %v4370, %v4379
        %v4386 = vadd.f32 %v4371, %v4379
        %v4387 = vadd.f32 %v4372, %v4379
        %v4388 = vadd.f32 %v4373, %v4379
        %4389 = vxpose.xlu0.b32.start [1/16] %v4381, 128
        %4390 = vxpose.xlu0.b32.cont [2/16] %v4382, 128
        %4391 = vxpose.xlu0.b32.cont [3/16] %v4383, 128
        %4392 = vxpose.xlu0.b32.cont [4/16] %v4384, 128
        %4393 = vxpose.xlu0.b32.cont [5/16] %v4385, 128
        %4394 = vxpose.xlu0.b32.cont [6/16] %v4386, 128
        %4395 = vxpose.xlu0.b32.cont [7/16] %v4387, 128
        %4396 = vxpose.xlu0.b32.cont [8/16] %v4388, 128
        %4397 = vxpose.xlu0.b32.cont [9/16] 0.0, 128
        %4398 = vxpose.xlu0.b32.cont [10/16] 0.0, 128
        %4399 = vxpose.xlu0.b32.cont [11/16] 0.0, 128
        %4400 = vxpose.xlu0.b32.cont [12/16] 0.0, 128
        %4401 = vxpose.xlu0.b32.cont [13/16] 0.0, 128
        %4402 = vxpose.xlu0.b32.cont [14/16] 0.0, 128
        %4403 = vxpose.xlu0.b32.cont [15/16] 0.0, 128
        %4404 = vxpose.xlu0.b32.end [16/16] 0.0, 128
        %v4405 = vpop.trf.xlu0
        %v4406 = vpop.trf.xlu0
        %v4407 = vpop.trf.xlu0
        %v4408 = vpop.trf.xlu0
        %v4409 = vpop.trf.xlu0
        %v4410 = vpop.trf.xlu0
        %v4411 = vpop.trf.xlu0
        %v4412 = vpop.trf.xlu0
        %v4413 = vpop.trf.xlu0
        %v4414 = vpop.trf.xlu0
        %v4415 = vpop.trf.xlu0
        %v4416 = vpop.trf.xlu0
        %v4417 = vpop.trf.xlu0
        %v4418 = vpop.trf.xlu0
        %v4419 = vpop.trf.xlu0
        %v4420 = vpop.trf.xlu0
        %vm4421 = vcmask 523264
        %4422 = vst.msk [vmem:[%s301] sm:$0xff] %vm4421, %v4405
        %s4423 = sand.u32 %s171, 1
        %s4424 = scalar_lea.sflag [#allocation3], %s4423
        %s4425 = sand.u32 %s171, 1
        %s4426 = smul.addr %s4425, 8
        %s4427 = scalar_lea.vmem [#allocation2], %s4426
        // Predicated region
        $region41: #{tpu_custom_call.1} parent=39 // pred_check
          %p4428 = pneg %p181
        $region42: #{tpu_custom_call.1} parent=39 // pred_check_branch
          %4430 = sbr.rel (%p4428) target = $region44
        $region43: #{tpu_custom_call.1} parent=39 // pred_region
          %s4432 = ssub.s32 128, 128
          %4433 = vsyncadd %s4424, %s4432
          %s4434 = smul.addr %s23, 8
          %s4435 = sadd.s32 %s24, %s4434
          %s4436 = smul.addr %s4435, 128
          %s4437 = scalar_lea.hbm %s5, %s4436
          %s4439 = sshll.u32 %s4427, 4
          %s4440 = int_to_ptr.vmem [resolvable:$true] %s4439
          %4442 = dma.vmem_to_hbm [thread:$0]  %s4440, 128, %s4437, %s4424
        $region44: #{tpu_custom_call.1} parent=39 // pred_fallthru
          _
      $region40: #{tpu_custom_call.1} parent=5 // pred_fallthru
        _
      %p4443 = scmp.le.s32.totalorder 2, %s14
      // Predicated region
      $region45: #{tpu_custom_call.1} parent=5 // pred_check
        %p4444 = pneg %p4443
      $region46: #{tpu_custom_call.1} parent=5 // pred_check_branch
        %4446 = sbr.rel (%p4444) target = $region48
      $region47: #{tpu_custom_call.1} parent=5 // pred_region
        %s4447 = ssub.s32 %s14, 2
        // Predicated region
        $region49: #{tpu_custom_call.1} parent=47 // pred_check
          %p4448 = pneg %p187
        $region50: #{tpu_custom_call.1} parent=47 // pred_check_branch
          %4450 = sbr.rel (%p4448) target = $region52
        $region51: #{tpu_custom_call.1} parent=47 // pred_region
          %s4451 = sand.u32 %s172, 1
          %s4452 = scalar_lea.sflag [#allocation3], %s4451
          %s4453 = sand.u32 %s172, 1
          %s4454 = smul.addr %s4453, 8
          %s4455 = scalar_lea.vmem [#allocation2], %s4454
          %4456 = dma.done %s4452, 128
        $region52: #{tpu_custom_call.1} parent=47 // pred_fallthru
          _
      $region48: #{tpu_custom_call.1} parent=5 // pred_fallthru
        _
    $region6: #{tpu_custom_call.1} parent=1 // loop_footer
      %s18 = sadd.s32 1, %s14
    $region7: #{tpu_custom_call.1} parent=1 // loop_footer_branch
      %13 = sbr.rel target = $region3
    $region8: #{tpu_custom_call.1} parent=1 // loop_exit
      _
    %4457 = vsyncpa [#allocation3], 1
    %s4458 = scalar_lea.sflag [#allocation3], 1
    %4459 = vsyncpa %s4458, 1

</llo_original>
